<compile_context>
chip_gen: v7x
topology: tpu7x:2x2x1
jax: 0.10.0
libtpu: 0.0.40
codegen_flags: <defaults>
</compile_context>

<pallas_src>
import jax
import jax.numpy as jnp
from jax.experimental import pallas as pl
from jax.experimental.pallas import tpu as pltpu


# ---------------- DDPM schedules (plain JAX glue, mirrors ddpm_schedules) -----
def ddpm_schedules(beta1: float, beta2: float, T: int):
    assert beta1 < beta2 < 1.0, "beta1 and beta2 must be in (0, 1)"
    beta_t = (beta2 - beta1) * jnp.arange(0, T + 1, dtype=jnp.float32) / T + beta1
    sqrt_beta_t = jnp.sqrt(beta_t)
    alpha_t = 1.0 - beta_t
    log_alpha_t = jnp.log(alpha_t)
    alphabar_t = jnp.exp(jnp.cumsum(log_alpha_t))
    sqrtab = jnp.sqrt(alphabar_t)
    oneover_sqrta = 1.0 / jnp.sqrt(alpha_t)
    sqrtmab = jnp.sqrt(1.0 - alphabar_t)
    mab_over_sqrtmab = (1.0 - alpha_t) / sqrtmab
    return {
        "alpha_t": alpha_t,
        "oneover_sqrta": oneover_sqrta,
        "sqrt_beta_t": sqrt_beta_t,
        "alphabar_t": alphabar_t,
        "sqrtab": sqrtab,
        "sqrtmab": sqrtmab,
        "mab_over_sqrtmab": mab_over_sqrtmab,
    }


# ---------------- eps_model parameters (synthetic small conv net) --------------
# TODO(synk): the PyTorch DDPM takes an arbitrary eps_model module; a small
# 3x3-conv -> time-embed -> LeakyReLU -> 3x3-conv net is synthesized here.
def init_params(key, C, HID):
    k1, k2, k3 = jax.random.split(key, 3)
    w1 = jax.random.normal(k1, (9 * C, HID), jnp.float32) / jnp.sqrt(9.0 * C)
    b1 = jnp.zeros((1, HID), jnp.float32)
    w2 = jax.random.normal(k2, (9 * HID, C), jnp.float32) / jnp.sqrt(9.0 * HID)
    b2 = jnp.zeros((1, C), jnp.float32)
    v_t = jax.random.normal(k3, (HID,), jnp.float32)
    return {"w1": w1, "b1": b1, "w2": w2, "b2": b2, "v_t": v_t}


# ---------------- fused Pallas kernel -------------------------------------------
def ddpm_fused_forward(sc, xp, ep, w1, b1, vt, w2, b2, *, B, H, W, C, HID):
    """grid=(B,): per-image diffuse -> conv1+temb+LeakyReLU -> conv2 -> SSD."""
    P = W + 2                      # padded row stride
    NP = (H + 2) * P               # padded pixels per image (= 324)
    OFF = P + 1                    # first interior padded index (= 19)
    MI = H * P - 2                 # row span covering all interior pixels (= 286)
    assert OFF + MI + OFF == NP + P - 4 or True   # documented below
    # Tap read range check: offsets OFF+s with s in [-(P+1), P+1] lie in [0, 2*(P+1)]
    # and OFF + s + MI <= NP for every tap.
    taps = [dy * P + dx for dy in (-1, 0, 1) for dx in (-1, 0, 1)]
    assert min(OFF + s for s in taps) == 0
    assert max(OFF + s for s in taps) + MI == NP

    def kernel(sc_ref, x_ref, e_ref, w1_ref, b1_ref, vt_ref, w2_ref, b2_ref,
               out_ref, xt_ref, hp_ref):
        b = pl.program_id(0)
        a_t = sc_ref[0, b]         # sqrtab[t_b]
        s_t = sc_ref[1, b]         # sqrtmab[t_b]
        t_t = sc_ref[2, b]         # t_b / n_T

        # ---- forward diffusion in the padded layout -------------------------
        # pads stay exactly zero because the wrapper zero-padded x and eps.
        xt_ref[...] = a_t * x_ref[...] + s_t * e_ref[...]           # (NP, C) f32

        # ---- interior-column mask for the MI padded rows --------------------
        q = OFF + jax.lax.broadcasted_iota(jnp.int32, (MI, 1), 0)
        col = q % P
        valid = (col >= 1) & (col <= W)                              # (MI, 1)

        # ---- conv1: ONE MXU dot over K = 9*C --------------------------------
        cat1 = jnp.concatenate(
            [xt_ref[pl.ds(OFF + s, MI), :] for s in taps], axis=-1
        ).astype(jnp.bfloat16)                                       # (MI, 9*C)
        h = jnp.dot(cat1, w1_ref[...], preferred_element_type=jnp.float32)
        h = h + b1_ref[...] + t_t * vt_ref[...]                      # bias + temb
        h = jnp.where(h > 0, h, 0.01 * h)                            # LeakyReLU(0.01)
        h = jnp.where(valid, h, 0.0)                                 # re-zero pad cols

        # store hidden activations back into padded layout; zero only pad stripes
        hp_ref[pl.ds(0, OFF), :] = jnp.zeros((OFF, HID), jnp.float32)
        hp_ref[pl.ds(OFF, MI), :] = h
        hp_ref[pl.ds(OFF + MI, NP - OFF - MI), :] = jnp.zeros(
            (NP - OFF - MI, HID), jnp.float32)

        # ---- conv2: ONE MXU dot over K = 9*HID -------------------------------
        cat2 = jnp.concatenate(
            [hp_ref[pl.ds(OFF + s, MI), :].astype(jnp.bfloat16) for s in taps],
            axis=-1)                                                 # (MI, 9*HID)
        eps_hat = jnp.dot(cat2, w2_ref[...],
                          preferred_element_type=jnp.float32) + b2_ref[...]

        # ---- per-image MSE partial sum (masked to the 256 real pixels) -------
        d = jnp.where(valid, eps_hat - e_ref[pl.ds(OFF, MI), :], 0.0)
        out_ref[...] = jnp.full((8, 128), jnp.sum(d * d), jnp.float32)

    grid_spec = pltpu.PrefetchScalarGridSpec(
        num_scalar_prefetch=1,                       # sc -> SMEM
        grid=(B,),
        in_specs=[
            pl.BlockSpec((None, NP, C), lambda b, sc: (b, 0, 0)),    # x padded
            pl.BlockSpec((None, NP, C), lambda b, sc: (b, 0, 0)),    # eps padded
            pl.BlockSpec((9 * C, HID), lambda b, sc: (0, 0)),        # w1 (bf16)
            pl.BlockSpec((1, HID), lambda b, sc: (0, 0)),            # b1
            pl.BlockSpec((1, HID), lambda b, sc: (0, 0)),            # v_t
            pl.BlockSpec((9 * HID, C), lambda b, sc: (0, 0)),        # w2 (bf16)
            pl.BlockSpec((1, C), lambda b, sc: (0, 0)),              # b2
        ],
        out_specs=pl.BlockSpec((None, 8, 128), lambda b, sc: (b, 0, 0)),
        scratch_shapes=[
            pltpu.VMEM((NP, C), jnp.float32),        # padded x_t
            pltpu.VMEM((NP, HID), jnp.float32),      # padded hidden activations
        ],
    )
    out = pl.pallas_call(
        kernel,
        out_shape=jax.ShapeDtypeStruct((B, 8, 128), jnp.float32),
        grid_spec=grid_spec,
        compiler_params=pltpu.CompilerParams(
            dimension_semantics=("parallel",)),
    )(sc, xp, ep, w1, b1, vt, w2, b2)
    return out[:, 0, 0]                              # (B,) per-image SSD


# ---------------- DDPM.forward ---------------------------------------------------
def ddpm_forward(params, sched, x_nchw, key, n_T):
    B, C, H, W = x_nchw.shape
    HID = params["w1"].shape[1]
    k_ts, k_eps = jax.random.split(key)

    # _ts = torch.randint(1, n_T, (B,)); eps = torch.randn_like(x)
    # TODO(synk): RNG stream differs from PyTorch's (same distribution/semantics).
    _ts = jax.random.randint(k_ts, (B,), 1, n_T)
    x_nhwc = jnp.transpose(x_nchw, (0, 2, 3, 1)).astype(jnp.float32)
    eps = jax.random.normal(k_eps, x_nhwc.shape, jnp.float32)

    # per-batch scalars for SMEM prefetch: [sqrtab[t], sqrtmab[t], t/n_T]
    sc = jnp.stack(
        [sched["sqrtab"][_ts], sched["sqrtmab"][_ts],
         _ts.astype(jnp.float32) / float(n_T)], axis=0)              # (3, B) f32

    # real 2-D zero padding once in the wrapper, then flatten pixels
    pad = ((0, 0), (1, 1), (1, 1), (0, 0))
    NP = (H + 2) * (W + 2)
    xp = jnp.pad(x_nhwc, pad).reshape(B, NP, C)
    ep = jnp.pad(eps, pad).reshape(B, NP, C)

    ssd = ddpm_fused_forward(
        sc, xp, ep,
        params["w1"].astype(jnp.bfloat16),
        params["b1"],
        params["v_t"].reshape(1, HID),
        params["w2"].astype(jnp.bfloat16),
        params["b2"],
        B=B, H=H, W=W, C=C, HID=HID,
    )
    return jnp.sum(ssd) / float(B * H * W * C)


# ---------------- pure-JAX reference (matches kernel numerics: bf16 operands) ----
def _im2col_3x3(x_nhwc):
    B, H, W, C = x_nhwc.shape
    xp = jnp.pad(x_nhwc, ((0, 0), (1, 1), (1, 1), (0, 0)))
    cols = [xp[:, dy:dy + H, dx:dx + W, :] for dy in range(3) for dx in range(3)]
    return jnp.concatenate(cols, axis=-1)


def ddpm_forward_ref(params, sched, x_nchw, key, n_T):
    B, C, H, W = x_nchw.shape
    HID = params["w1"].shape[1]
    k_ts, k_eps = jax.random.split(key)
    _ts = jax.random.randint(k_ts, (B,), 1, n_T)
    x_nhwc = jnp.transpose(x_nchw, (0, 2, 3, 1)).astype(jnp.float32)
    eps = jax.random.normal(k_eps, x_nhwc.shape, jnp.float32)

    a = sched["sqrtab"][_ts][:, None, None, None]
    s = sched["sqrtmab"][_ts][:, None, None, None]
    x_t = a * x_nhwc + s * eps

    # mirror kernel numerics: bf16-rounded weights AND bf16-rounded matmul inputs
    def q(v):
        return v.astype(jnp.bfloat16).astype(jnp.float32)

    w1 = q(params["w1"])
    w2 = q(params["w2"])
    t_cont = _ts.astype(jnp.float32) / float(n_T)

    p1 = q(_im2col_3x3(x_t)).reshape(B * H * W, 9 * C)
    temb = jnp.repeat(t_cont[:, None] * params["v_t"][None, :], H * W, axis=0)
    h = jnp.dot(p1, w1, precision=jax.lax.Precision.HIGHEST) + params["b1"] + temb
    h = jnp.where(h > 0, h, 0.01 * h)
    p2 = q(_im2col_3x3(h.reshape(B, H, W, HID))).reshape(B * H * W, 9 * HID)
    eps_hat = jnp.dot(p2, w2, precision=jax.lax.Precision.HIGHEST) + params["b2"]
    d = eps_hat - eps.reshape(B * H * W, C)
    return jnp.mean(d * d)


if __name__ == "__main__":
    B, C, H, W = 2, 4, 16, 16
    HID = 32
    n_T = 100
    betas = (1e-4, 0.02)

    key = jax.random.PRNGKey(0)
    kx, kp, kf = jax.random.split(key, 3)

    x = jax.random.normal(kx, (B, C, H, W), jnp.float32)   # NCHW like PyTorch
    params = init_params(kp, C, HID)
    sched = ddpm_schedules(betas[0], betas[1], n_T)

    loss = jax.block_until_ready(ddpm_forward(params, sched, x, kf, n_T))
    assert jnp.isfinite(loss), "loss is not finite"

    loss_ref = jax.block_until_ready(ddpm_forward_ref(params, sched, x, kf, n_T))
    assert jnp.allclose(loss, loss_ref, rtol=1e-2, atol=1e-4), (loss, loss_ref)

    print("KERNEL_OK")
</pallas_src>

<mosaic_0001>
module attributes {stable_mosaic.version = 11 : i64} {
  func.func @kernel(%arg0: i32, %arg1: memref<3x2xf32, #tpu.memory_space<smem>>, %arg2: memref<1x324x4xf32, #tpu.memory_space<vmem>>, %arg3: memref<1x324x4xf32, #tpu.memory_space<vmem>>, %arg4: memref<36x32xbf16, #tpu.memory_space<vmem>>, %arg5: memref<1x32xf32, #tpu.memory_space<vmem>>, %arg6: memref<1x32xf32, #tpu.memory_space<vmem>>, %arg7: memref<288x4xbf16, #tpu.memory_space<vmem>>, %arg8: memref<1x4xf32, #tpu.memory_space<vmem>>, %arg9: memref<1x8x128xf32, #tpu.memory_space<vmem>>, %arg10: memref<324x4xf32, #tpu.memory_space<vmem>>, %arg11: memref<324x32xf32, #tpu.memory_space<vmem>>) attributes {dimension_semantics = [#tpu.dimension_semantics<parallel>], iteration_bounds = array<i64: 2>, scalar_prefetch = 1 : i64, scratch_operands = 2 : i64, tpu.core_type = #tpu.core_type<tc>, window_params = [{transform_indices = @transform_0, window_bounds = array<i64: 1, 324, 4>}, {transform_indices = @transform_1, window_bounds = array<i64: 1, 324, 4>}, {pipeline_mode = #tpu.pipeline_mode<synchronous>, transform_indices = @transform_2, window_bounds = array<i64: 36, 32>}, {pipeline_mode = #tpu.pipeline_mode<synchronous>, transform_indices = @transform_3, window_bounds = array<i64: 1, 32>}, {pipeline_mode = #tpu.pipeline_mode<synchronous>, transform_indices = @transform_4, window_bounds = array<i64: 1, 32>}, {pipeline_mode = #tpu.pipeline_mode<synchronous>, transform_indices = @transform_5, window_bounds = array<i64: 288, 4>}, {pipeline_mode = #tpu.pipeline_mode<synchronous>, transform_indices = @transform_6, window_bounds = array<i64: 1, 4>}, {transform_indices = @transform_7, window_bounds = array<i64: 1, 8, 128>}]} {
    %c0 = arith.constant 0 : index
    %0 = arith.index_cast %arg0 : i32 to index
    %1 = memref.load %arg1[%c0, %0] : memref<3x2xf32, #tpu.memory_space<smem>>
    %c1 = arith.constant 1 : index
    %2 = arith.index_cast %arg0 : i32 to index
    %3 = memref.load %arg1[%c1, %2] : memref<3x2xf32, #tpu.memory_space<smem>>
    %c2 = arith.constant 2 : index
    %4 = arith.index_cast %arg0 : i32 to index
    %5 = memref.load %arg1[%c2, %4] : memref<3x2xf32, #tpu.memory_space<smem>>
    %c0_0 = arith.constant 0 : index
    %c0_1 = arith.constant 0 : index
    %c0_2 = arith.constant 0 : index
    %6 = vector.load %arg2[%c0_0, %c0_1, %c0_2] : memref<1x324x4xf32, #tpu.memory_space<vmem>>, vector<1x324x4xf32>
    %7 = vector.shape_cast %6 : vector<1x324x4xf32> to vector<324x4xf32>
    %8 = vector.broadcast %1 : f32 to vector<324x4xf32>
    %9 = arith.mulf %8, %7 : vector<324x4xf32>
    %c0_3 = arith.constant 0 : index
    %c0_4 = arith.constant 0 : index
    %c0_5 = arith.constant 0 : index
    %10 = vector.load %arg3[%c0_3, %c0_4, %c0_5] : memref<1x324x4xf32, #tpu.memory_space<vmem>>, vector<1x324x4xf32>
    %11 = vector.shape_cast %10 : vector<1x324x4xf32> to vector<324x4xf32>
    %12 = vector.broadcast %3 : f32 to vector<324x4xf32>
    %13 = arith.mulf %12, %11 : vector<324x4xf32>
    %14 = arith.addf %9, %13 : vector<324x4xf32>
    %c0_6 = arith.constant 0 : index
    %c0_7 = arith.constant 0 : index
    %15 = vector.load %arg10[%c0_6, %c0_7] : memref<324x4xf32, #tpu.memory_space<vmem>>, vector<324x4xf32>
    tpu.vector_store %arg10[%c0_6, %c0_7], %14 {strides = array<i32>} : memref<324x4xf32, #tpu.memory_space<vmem>>, vector<324x4xf32>,
    %16 = tpu.iota {dimensions = array<i32: 0>} : vector<286x1xi32>
    %c19_i32 = arith.constant 19 : i32
    %17 = vector.broadcast %c19_i32 : i32 to vector<286x1xi32>
    %18 = arith.addi %17, %16 : vector<286x1xi32>
    %c18_i32 = arith.constant 18 : i32
    %c0_i32 = arith.constant 0 : i32
    %19 = arith.cmpi eq, %c18_i32, %c0_i32 : i32
    %c1_i32 = arith.constant 1 : i32
    %20 = arith.select %19, %c1_i32, %c18_i32 : i32
    %21 = vector.broadcast %20 : i32 to vector<286x1xi32>
    %22 = arith.remsi %18, %21 : vector<286x1xi32>
    %c0_i32_8 = arith.constant 0 : i32
    %23 = vector.broadcast %c0_i32_8 : i32 to vector<286x1xi32>
    %24 = arith.cmpi ne, %22, %23 : vector<286x1xi32>
    %c0_i32_9 = arith.constant 0 : i32
    %25 = vector.broadcast %c0_i32_9 : i32 to vector<286x1xi32>
    %26 = arith.cmpi slt, %22, %25 : vector<286x1xi32>
    %c0_i32_10 = arith.constant 0 : i32
    %27 = arith.cmpi slt, %20, %c0_i32_10 : i32
    %28 = vector.broadcast %27 : i1 to vector<286x1xi1>
    %29 = vector.broadcast %28 : vector<286x1xi1> to vector<286x1xi1>
    %30 = arith.xori %26, %29 : vector<286x1xi1>
    %31 = arith.andi %30, %24 : vector<286x1xi1>
    %32 = vector.broadcast %20 : i32 to vector<286x1xi32>
    %33 = arith.addi %22, %32 : vector<286x1xi32>
    %34 = arith.select %31, %33, %22 : vector<286x1xi1>, vector<286x1xi32>
    %c1_i32_11 = arith.constant 1 : i32
    %35 = vector.broadcast %c1_i32_11 : i32 to vector<286x1xi32>
    %36 = arith.cmpi sge, %34, %35 : vector<286x1xi32>
    %c16_i32 = arith.constant 16 : i32
    %37 = vector.broadcast %c16_i32 : i32 to vector<286x1xi32>
    %38 = arith.cmpi sle, %34, %37 : vector<286x1xi32>
    %39 = arith.andi %36, %38 : vector<286x1xi1>
    %c0_12 = arith.constant 0 : index
    %c0_13 = arith.constant 0 : index
    %40 = vector.load %arg10[%c0_12, %c0_13] : memref<324x4xf32, #tpu.memory_space<vmem>>, vector<286x4xf32>
    %c1_14 = arith.constant 1 : index
    %c0_15 = arith.constant 0 : index
    %41 = vector.load %arg10[%c1_14, %c0_15] : memref<324x4xf32, #tpu.memory_space<vmem>>, vector<286x4xf32>
    %c2_16 = arith.constant 2 : index
    %c0_17 = arith.constant 0 : index
    %42 = vector.load %arg10[%c2_16, %c0_17] : memref<324x4xf32, #tpu.memory_space<vmem>>, vector<286x4xf32>
    %c18 = arith.constant 18 : index
    %c0_18 = arith.constant 0 : index
    %43 = vector.load %arg10[%c18, %c0_18] : memref<324x4xf32, #tpu.memory_space<vmem>>, vector<286x4xf32>
    %c19 = arith.constant 19 : index
    %c0_19 = arith.constant 0 : index
    %44 = vector.load %arg10[%c19, %c0_19] : memref<324x4xf32, #tpu.memory_space<vmem>>, vector<286x4xf32>
    %c20 = arith.constant 20 : index
    %c0_20 = arith.constant 0 : index
    %45 = vector.load %arg10[%c20, %c0_20] : memref<324x4xf32, #tpu.memory_space<vmem>>, vector<286x4xf32>
    %c36 = arith.constant 36 : index
    %c0_21 = arith.constant 0 : index
    %46 = vector.load %arg10[%c36, %c0_21] : memref<324x4xf32, #tpu.memory_space<vmem>>, vector<286x4xf32>
    %c37 = arith.constant 37 : index
    %c0_22 = arith.constant 0 : index
    %47 = vector.load %arg10[%c37, %c0_22] : memref<324x4xf32, #tpu.memory_space<vmem>>, vector<286x4xf32>
    %c38 = arith.constant 38 : index
    %c0_23 = arith.constant 0 : index
    %48 = vector.load %arg10[%c38, %c0_23] : memref<324x4xf32, #tpu.memory_space<vmem>>, vector<286x4xf32>
    %49 = tpu.concatenate %40, %41, %42, %43, %44, %45, %46, %47, %48 in 1 : vector<286x4xf32>, vector<286x4xf32>, vector<286x4xf32>, vector<286x4xf32>, vector<286x4xf32>, vector<286x4xf32>, vector<286x4xf32>, vector<286x4xf32>, vector<286x4xf32> -> vector<286x36xf32>
    %50 = arith.truncf %49 : vector<286x36xf32> to vector<286x36xbf16>
    %c0_24 = arith.constant 0 : index
    %c0_25 = arith.constant 0 : index
    %51 = vector.load %arg4[%c0_24, %c0_25] : memref<36x32xbf16, #tpu.memory_space<vmem>>, vector<36x32xbf16>
    %cst = arith.constant dense<0.000000e+00> : vector<286x32xf32>
    %52 = tpu.matmul %50, %51, %cst {dimension_numbers = #tpu.dot_dimension_numbers<[1], [0], [0], [1], [0, 0, 1, 1], [], []>} : vector<286x36xbf16>, vector<36x32xbf16>, vector<286x32xf32> -> vector<286x32xf32>
    %c0_26 = arith.constant 0 : index
    %c0_27 = arith.constant 0 : index
    %53 = vector.load %arg5[%c0_26, %c0_27] : memref<1x32xf32, #tpu.memory_space<vmem>>, vector<1x32xf32>
    %54 = vector.broadcast %53 : vector<1x32xf32> to vector<286x32xf32>
    %55 = arith.addf %52, %54 : vector<286x32xf32>
    %c0_28 = arith.constant 0 : index
    %c0_29 = arith.constant 0 : index
    %56 = vector.load %arg6[%c0_28, %c0_29] : memref<1x32xf32, #tpu.memory_space<vmem>>, vector<1x32xf32>
    %57 = vector.broadcast %5 : f32 to vector<1x32xf32>
    %58 = arith.mulf %57, %56 : vector<1x32xf32>
    %59 = vector.broadcast %58 : vector<1x32xf32> to vector<286x32xf32>
    %60 = arith.addf %55, %59 : vector<286x32xf32>
    %cst_30 = arith.constant 0.000000e+00 : f32
    %61 = vector.broadcast %cst_30 : f32 to vector<286x32xf32>
    %62 = arith.cmpf ogt, %60, %61 : vector<286x32xf32>
    %cst_31 = arith.constant 0.00999999977 : f32
    %63 = vector.broadcast %cst_31 : f32 to vector<286x32xf32>
    %64 = arith.mulf %63, %60 : vector<286x32xf32>
    %65 = arith.select %62, %60, %64 : vector<286x32xi1>, vector<286x32xf32>
    %cst_32 = arith.constant 0.000000e+00 : f32
    %66 = vector.shape_cast %39 : vector<286x1xi1> to vector<286x1xi1>
    %67 = vector.broadcast %66 : vector<286x1xi1> to vector<286x32xi1>
    %68 = vector.broadcast %cst_32 : f32 to vector<286x32xf32>
    %69 = arith.select %67, %65, %68 : vector<286x32xi1>, vector<286x32xf32>
    %cst_33 = arith.constant 0.000000e+00 : f32
    %70 = vector.broadcast %cst_33 : f32 to vector<19x32xf32>
    %c0_34 = arith.constant 0 : index
    %c0_35 = arith.constant 0 : index
    %71 = vector.load %arg11[%c0_34, %c0_35] : memref<324x32xf32, #tpu.memory_space<vmem>>, vector<19x32xf32>
    tpu.vector_store %arg11[%c0_34, %c0_35], %70 {strides = array<i32>} : memref<324x32xf32, #tpu.memory_space<vmem>>, vector<19x32xf32>,
    %c19_36 = arith.constant 19 : index
    %c0_37 = arith.constant 0 : index
    %72 = vector.load %arg11[%c19_36, %c0_37] : memref<324x32xf32, #tpu.memory_space<vmem>>, vector<286x32xf32>
    tpu.vector_store %arg11[%c19_36, %c0_37], %69 {strides = array<i32>} : memref<324x32xf32, #tpu.memory_space<vmem>>, vector<286x32xf32>,
    %cst_38 = arith.constant 0.000000e+00 : f32
    %73 = vector.broadcast %cst_38 : f32 to vector<19x32xf32>
    %c305 = arith.constant 305 : index
    %c0_39 = arith.constant 0 : index
    %74 = vector.load %arg11[%c305, %c0_39] : memref<324x32xf32, #tpu.memory_space<vmem>>, vector<19x32xf32>
    tpu.vector_store %arg11[%c305, %c0_39], %73 {strides = array<i32>} : memref<324x32xf32, #tpu.memory_space<vmem>>, vector<19x32xf32>,
    %c0_40 = arith.constant 0 : index
    %c0_41 = arith.constant 0 : index
    %75 = vector.load %arg11[%c0_40, %c0_41] : memref<324x32xf32, #tpu.memory_space<vmem>>, vector<286x32xf32>
    %76 = arith.truncf %75 : vector<286x32xf32> to vector<286x32xbf16>
    %c1_42 = arith.constant 1 : index
    %c0_43 = arith.constant 0 : index
    %77 = vector.load %arg11[%c1_42, %c0_43] : memref<324x32xf32, #tpu.memory_space<vmem>>, vector<286x32xf32>
    %78 = arith.truncf %77 : vector<286x32xf32> to vector<286x32xbf16>
    %c2_44 = arith.constant 2 : index
    %c0_45 = arith.constant 0 : index
    %79 = vector.load %arg11[%c2_44, %c0_45] : memref<324x32xf32, #tpu.memory_space<vmem>>, vector<286x32xf32>
    %80 = arith.truncf %79 : vector<286x32xf32> to vector<286x32xbf16>
    %c18_46 = arith.constant 18 : index
    %c0_47 = arith.constant 0 : index
    %81 = vector.load %arg11[%c18_46, %c0_47] : memref<324x32xf32, #tpu.memory_space<vmem>>, vector<286x32xf32>
    %82 = arith.truncf %81 : vector<286x32xf32> to vector<286x32xbf16>
    %c19_48 = arith.constant 19 : index
    %c0_49 = arith.constant 0 : index
    %83 = vector.load %arg11[%c19_48, %c0_49] : memref<324x32xf32, #tpu.memory_space<vmem>>, vector<286x32xf32>
    %84 = arith.truncf %83 : vector<286x32xf32> to vector<286x32xbf16>
    %c20_50 = arith.constant 20 : index
    %c0_51 = arith.constant 0 : index
    %85 = vector.load %arg11[%c20_50, %c0_51] : memref<324x32xf32, #tpu.memory_space<vmem>>, vector<286x32xf32>
    %86 = arith.truncf %85 : vector<286x32xf32> to vector<286x32xbf16>
    %c36_52 = arith.constant 36 : index
    %c0_53 = arith.constant 0 : index
    %87 = vector.load %arg11[%c36_52, %c0_53] : memref<324x32xf32, #tpu.memory_space<vmem>>, vector<286x32xf32>
    %88 = arith.truncf %87 : vector<286x32xf32> to vector<286x32xbf16>
    %c37_54 = arith.constant 37 : index
    %c0_55 = arith.constant 0 : index
    %89 = vector.load %arg11[%c37_54, %c0_55] : memref<324x32xf32, #tpu.memory_space<vmem>>, vector<286x32xf32>
    %90 = arith.truncf %89 : vector<286x32xf32> to vector<286x32xbf16>
    %c38_56 = arith.constant 38 : index
    %c0_57 = arith.constant 0 : index
    %91 = vector.load %arg11[%c38_56, %c0_57] : memref<324x32xf32, #tpu.memory_space<vmem>>, vector<286x32xf32>
    %92 = arith.truncf %91 : vector<286x32xf32> to vector<286x32xbf16>
    %93 = tpu.concatenate %76, %78, %80, %82, %84, %86, %88, %90, %92 in 1 : vector<286x32xbf16>, vector<286x32xbf16>, vector<286x32xbf16>, vector<286x32xbf16>, vector<286x32xbf16>, vector<286x32xbf16>, vector<286x32xbf16>, vector<286x32xbf16>, vector<286x32xbf16> -> vector<286x288xbf16>
    %c0_58 = arith.constant 0 : index
    %c0_59 = arith.constant 0 : index
    %94 = vector.load %arg7[%c0_58, %c0_59] : memref<288x4xbf16, #tpu.memory_space<vmem>>, vector<288x4xbf16>
    %cst_60 = arith.constant dense<0.000000e+00> : vector<286x4xf32>
    %95 = tpu.matmul %93, %94, %cst_60 {dimension_numbers = #tpu.dot_dimension_numbers<[1], [0], [0], [1], [0, 0, 1, 1], [], []>} : vector<286x288xbf16>, vector<288x4xbf16>, vector<286x4xf32> -> vector<286x4xf32>
    %c0_61 = arith.constant 0 : index
    %c0_62 = arith.constant 0 : index
    %96 = vector.load %arg8[%c0_61, %c0_62] : memref<1x4xf32, #tpu.memory_space<vmem>>, vector<1x4xf32>
    %97 = vector.broadcast %96 : vector<1x4xf32> to vector<286x4xf32>
    %98 = arith.addf %95, %97 : vector<286x4xf32>
    %c0_63 = arith.constant 0 : index
    %c19_64 = arith.constant 19 : index
    %c0_65 = arith.constant 0 : index
    %99 = vector.load %arg3[%c0_63, %c19_64, %c0_65] : memref<1x324x4xf32, #tpu.memory_space<vmem>>, vector<1x286x4xf32>
    %100 = vector.shape_cast %99 : vector<1x286x4xf32> to vector<286x4xf32>
    %101 = arith.subf %98, %100 : vector<286x4xf32>
    %cst_66 = arith.constant 0.000000e+00 : f32
    %102 = vector.shape_cast %39 : vector<286x1xi1> to vector<286x1xi1>
    %103 = vector.broadcast %102 : vector<286x1xi1> to vector<286x4xi1>
    %104 = vector.broadcast %cst_66 : f32 to vector<286x4xf32>
    %105 = arith.select %103, %101, %104 : vector<286x4xi1>, vector<286x4xf32>
    %106 = arith.mulf %105, %105 : vector<286x4xf32>
    %107 = vector.shape_cast %106 : vector<286x4xf32> to vector<1x286x4xf32>
    %cst_67 = arith.constant dense<0.000000e+00> : vector<1xf32>
    %108 = vector.multi_reduction <add>, %107, %cst_67 [1, 2] : vector<1x286x4xf32> to vector<1xf32>
    %109 = vector.shape_cast %108 : vector<1xf32> to vector<1x1x1xf32>
    %110 = vector.extract %109[0, 0, 0] : f32 from vector<1x1x1xf32>
    %111 = vector.broadcast %110 : f32 to vector<8x128xf32>
    %c0_68 = arith.constant 0 : index
    %c0_69 = arith.constant 0 : index
    %c0_70 = arith.constant 0 : index
    %112 = vector.load %arg9[%c0_68, %c0_69, %c0_70] : memref<1x8x128xf32, #tpu.memory_space<vmem>>, vector<1x8x128xf32>
    %113 = vector.shape_cast %112 : vector<1x8x128xf32> to vector<8x128xf32>
    %114 = vector.shape_cast %111 : vector<8x128xf32> to vector<1x8x128xf32>
    tpu.vector_store %arg9[%c0_68, %c0_69, %c0_70], %114 {strides = array<i32>} : memref<1x8x128xf32, #tpu.memory_space<vmem>>, vector<1x8x128xf32>,
    return
  }
  func.func @transform_0(%arg0: i32, %arg1: memref<3x2xf32, #tpu.memory_space<smem>>) -> (i32, i32, i32) {
    %c0_i32 = arith.constant 0 : i32
    %c0_i32_0 = arith.constant 0 : i32
    %c0_i32_1 = arith.constant 0 : i32
    return %arg0, %c0_i32, %c0_i32_0 : i32, i32, i32
  }
  func.func @transform_1(%arg0: i32, %arg1: memref<3x2xf32, #tpu.memory_space<smem>>) -> (i32, i32, i32) {
    %c0_i32 = arith.constant 0 : i32
    %c0_i32_0 = arith.constant 0 : i32
    %c0_i32_1 = arith.constant 0 : i32
    return %arg0, %c0_i32, %c0_i32_0 : i32, i32, i32
  }
  func.func @transform_2(%arg0: i32, %arg1: memref<3x2xf32, #tpu.memory_space<smem>>) -> (i32, i32) {
    %c0_i32 = arith.constant 0 : i32
    %c0_i32_0 = arith.constant 0 : i32
    %c0_i32_1 = arith.constant 0 : i32
    return %c0_i32, %c0_i32_0 : i32, i32
  }
  func.func @transform_3(%arg0: i32, %arg1: memref<3x2xf32, #tpu.memory_space<smem>>) -> (i32, i32) {
    %c0_i32 = arith.constant 0 : i32
    %c0_i32_0 = arith.constant 0 : i32
    %c0_i32_1 = arith.constant 0 : i32
    return %c0_i32, %c0_i32_0 : i32, i32
  }
  func.func @transform_4(%arg0: i32, %arg1: memref<3x2xf32, #tpu.memory_space<smem>>) -> (i32, i32) {
    %c0_i32 = arith.constant 0 : i32
    %c0_i32_0 = arith.constant 0 : i32
    %c0_i32_1 = arith.constant 0 : i32
    return %c0_i32, %c0_i32_0 : i32, i32
  }
  func.func @transform_5(%arg0: i32, %arg1: memref<3x2xf32, #tpu.memory_space<smem>>) -> (i32, i32) {
    %c0_i32 = arith.constant 0 : i32
    %c0_i32_0 = arith.constant 0 : i32
    %c0_i32_1 = arith.constant 0 : i32
    return %c0_i32, %c0_i32_0 : i32, i32
  }
  func.func @transform_6(%arg0: i32, %arg1: memref<3x2xf32, #tpu.memory_space<smem>>) -> (i32, i32) {
    %c0_i32 = arith.constant 0 : i32
    %c0_i32_0 = arith.constant 0 : i32
    %c0_i32_1 = arith.constant 0 : i32
    return %c0_i32, %c0_i32_0 : i32, i32
  }
  func.func @transform_7(%arg0: i32, %arg1: memref<3x2xf32, #tpu.memory_space<smem>>) -> (i32, i32, i32) {
    %c0_i32 = arith.constant 0 : i32
    %c0_i32_0 = arith.constant 0 : i32
    %c0_i32_1 = arith.constant 0 : i32
    return %arg0, %c0_i32, %c0_i32_0 : i32, i32, i32
  }
}

</mosaic_0001>

<llo_original>
// kernel: tpu_custom_call.1
$region0: #{tpu_custom_call.1}
  #allocation0 [shape = 'u32[]', space=smem, size = 0x4, offset = 0x4, fixed_abs, tag = 'smem constant byte address 0x4 - core index']
  #allocation1 [shape = 'u32[144,128]{1,0:T(1,128)}', space=vmem, size = 0x12000, scoped, tag = 'internal scratch']
  #allocation2 [shape = 'f32[324,4]{1,0:T(8,128)}', space=vmem, size = 0x29000, scoped, tag = 'scratch operand']
  #allocation3 [shape = 'f32[324,32]{1,0:T(8,128)}', space=vmem, size = 0x29000, scoped, tag = 'scratch operand']
  #allocation4 [shape = 's32[1]{0}', space=sflag, size = 0x4, scoped, tag = 'scoped memory for tpu_custom_call.1']
  #allocation5 [shape = 'u8[2048]{0}', space=smem, size = 0x800, scoped, tag = 'prefetched SMEM operand 0']
  %s0 = inlined_call_operand.vmem [shape: f32[3,2], index: 0, kind: input, shape index: {}]
  %s1 = inlined_call_operand.vmem [shape: f32[2,324,4], index: 1, kind: input, shape index: {}]
  %s2 = inlined_call_operand.vmem [shape: f32[2,324,4], index: 2, kind: input, shape index: {}]
  %s3 = inlined_call_operand.vmem [shape: bf16[36,32], index: 3, kind: input, shape index: {}]
  %s4 = inlined_call_operand.vmem [shape: f32[1,32], index: 4, kind: input, shape index: {}]
  %s5 = inlined_call_operand.vmem [shape: f32[1,32], index: 5, kind: input, shape index: {}]
  %s6 = inlined_call_operand.vmem [shape: bf16[288,4], index: 6, kind: input, shape index: {}]
  %s7 = inlined_call_operand.vmem [shape: f32[1,4], index: 7, kind: input, shape index: {}]
  %s8 = inlined_call_operand.hbm [shape: f32[2,8,128], index: 8, kind: output, shape index: {}]
  %s9 = sld [smem:[#allocation0]]
  $region61: #{tpu_custom_call.1} parent=0
    _
  %s11 = ssub.s32 1, %s9
  %s12 = scalar_select 0, %s11, %s9
  %s13 = sshll.u32 %s0, 4
  %s14 = int_to_ptr.vmem [resolvable:$true] %s13
  %16 = dma.vmem_to_smem %s14, 64, [#allocation5], [#allocation4]
  %17 = dma.done [#allocation4], 64
  %18 = sfence
  $region1: #{tpu_custom_call.1} parent=0
    #allocation6 [shape = 'u8[8192]{0}', space=vmem, size = 0x2000, scoped, tag = 'output window, operand 0']
    #allocation7 [shape = 's32[2]{0}', space=sflag, size = 0x8, scoped, tag = 'scoped memory for tpu_custom_call.1']
    %19 = vsyncpa [#allocation7], 0
    %s20 = scalar_lea.sflag [#allocation7], 1
    %21 = vsyncpa %s20, 0
    loop: start=0, step=1, limit=4
    $region2: #{tpu_custom_call.1} parent=1 // loop_pre_header
      _
    $region3: #{tpu_custom_call.1} parent=1 // loop_header
      %s23 = sphi 0, %s27
      %p24 = scmp.ge.s32.totalorder %s23, 4
      %s33 = sphi 0, %s35
      %s36 = sphi 0, %s33
      %s37 = sphi 0, %s36
      %s53 = sphi 0, %s37
      %s59 = sphi 0, %s61
      %s62 = sphi 0, %s59
      %s63 = sphi 0, %s62
      %s79 = sphi 0, %s63
      %s83 = sphi 0, %s83
      %s85 = sphi 0, %s83
      %s86 = sphi 0, %s85
      %s100 = sphi 0, %s86
      %s104 = sphi 0, %s104
      %s106 = sphi 0, %s104
      %s107 = sphi 0, %s106
      %s121 = sphi 0, %s107
      %s125 = sphi 0, %s125
      %s127 = sphi 0, %s125
      %s128 = sphi 0, %s127
      %s142 = sphi 0, %s128
      %s146 = sphi 0, %s146
      %s148 = sphi 0, %s146
      %s149 = sphi 0, %s148
      %s163 = sphi 0, %s149
      %s167 = sphi 0, %s167
      %s169 = sphi 0, %s167
      %s170 = sphi 0, %s169
      %s184 = sphi 0, %s170
      %s190 = sphi 0, %s192
      %s193 = sphi 0, %s190
      %s194 = sphi 0, %s193
      %s210 = sphi 0, %s194
    $region4: #{tpu_custom_call.1} parent=1 // loop_header_branch
      %26 = sbr.rel (%p24) target = $region8
    $region5: #{tpu_custom_call.1} parent=1 // loop_body
      %s28 = ssub.s32 %s23, 1
      %s29 = ssub.s32 %s23, 2
      %s30 = sadd.s32 %s23, 1
      %s31 = ssub.s32 %s23, %s30
      %p32 = scmp.eq.s32.totalorder %s31, 0
      %s34 = sadd.s32 %s33, 1
      %s35 = scalar_select %p32, %s33, %s34
      %p38 = pneg %p32
      %p39 = scmp.eq.s32.totalorder %s23, 1
      %p40 = por %p38, %p39
      %p41 = scmp.ne.s32.totalorder %s33, %s36
      %p42 = scmp.eq.s32.totalorder %s23, 0
      %p43 = por %p41, %p42
      %p44 = scmp.ne.s32.totalorder %s33, %s36
      %p45 = scmp.eq.s32.totalorder %s28, 1
      %p46 = por %p44, %p45
      %p47 = scmp.ne.s32.totalorder %s36, %s37
      %p48 = scmp.eq.s32.totalorder %s28, 0
      %p49 = por %p47, %p48
      %p50 = scmp.ne.s32.totalorder %s36, %s37
      %p51 = scmp.eq.s32.totalorder %s29, 1
      %p52 = por %p50, %p51
      %p54 = scmp.ne.s32.totalorder %s37, %s53
      %p55 = scmp.eq.s32.totalorder %s29, 0
      %p56 = por %p54, %p55
      %s57 = ssub.s32 %s23, %s30
      %p58 = scmp.eq.s32.totalorder %s57, 0
      %s60 = sadd.s32 %s59, 1
      %s61 = scalar_select %p58, %s59, %s60
      %p64 = pneg %p58
      %p65 = scmp.eq.s32.totalorder %s23, 1
      %p66 = por %p64, %p65
      %p67 = scmp.ne.s32.totalorder %s59, %s62
      %p68 = scmp.eq.s32.totalorder %s23, 0
      %p69 = por %p67, %p68
      %p70 = scmp.ne.s32.totalorder %s59, %s62
      %p71 = scmp.eq.s32.totalorder %s28, 1
      %p72 = por %p70, %p71
      %p73 = scmp.ne.s32.totalorder %s62, %s63
      %p74 = scmp.eq.s32.totalorder %s28, 0
      %p75 = por %p73, %p74
      %p76 = scmp.ne.s32.totalorder %s62, %s63
      %p77 = scmp.eq.s32.totalorder %s29, 1
      %p78 = por %p76, %p77
      %p80 = scmp.ne.s32.totalorder %s63, %s79
      %p81 = scmp.eq.s32.totalorder %s29, 0
      %p82 = por %p80, %p81
      %s84 = sadd.s32 %s83, 1
      %p87 = scmp.eq.s32.totalorder %s23, 1
      %p88 = scmp.ne.s32.totalorder %s83, %s85
      %p89 = scmp.eq.s32.totalorder %s23, 0
      %p90 = por %p88, %p89
      %p91 = scmp.ne.s32.totalorder %s83, %s85
      %p92 = scmp.eq.s32.totalorder %s28, 1
      %p93 = por %p91, %p92
      %p94 = scmp.ne.s32.totalorder %s85, %s86
      %p95 = scmp.eq.s32.totalorder %s28, 0
      %p96 = por %p94, %p95
      %p97 = scmp.ne.s32.totalorder %s85, %s86
      %p98 = scmp.eq.s32.totalorder %s29, 1
      %p99 = por %p97, %p98
      %p101 = scmp.ne.s32.totalorder %s86, %s100
      %p102 = scmp.eq.s32.totalorder %s29, 0
      %p103 = por %p101, %p102
      %s105 = sadd.s32 %s104, 1
      %p108 = scmp.eq.s32.totalorder %s23, 1
      %p109 = scmp.ne.s32.totalorder %s104, %s106
      %p110 = scmp.eq.s32.totalorder %s23, 0
      %p111 = por %p109, %p110
      %p112 = scmp.ne.s32.totalorder %s104, %s106
      %p113 = scmp.eq.s32.totalorder %s28, 1
      %p114 = por %p112, %p113
      %p115 = scmp.ne.s32.totalorder %s106, %s107
      %p116 = scmp.eq.s32.totalorder %s28, 0
      %p117 = por %p115, %p116
      %p118 = scmp.ne.s32.totalorder %s106, %s107
      %p119 = scmp.eq.s32.totalorder %s29, 1
      %p120 = por %p118, %p119
      %p122 = scmp.ne.s32.totalorder %s107, %s121
      %p123 = scmp.eq.s32.totalorder %s29, 0
      %p124 = por %p122, %p123
      %s126 = sadd.s32 %s125, 1
      %p129 = scmp.eq.s32.totalorder %s23, 1
      %p130 = scmp.ne.s32.totalorder %s125, %s127
      %p131 = scmp.eq.s32.totalorder %s23, 0
      %p132 = por %p130, %p131
      %p133 = scmp.ne.s32.totalorder %s125, %s127
      %p134 = scmp.eq.s32.totalorder %s28, 1
      %p135 = por %p133, %p134
      %p136 = scmp.ne.s32.totalorder %s127, %s128
      %p137 = scmp.eq.s32.totalorder %s28, 0
      %p138 = por %p136, %p137
      %p139 = scmp.ne.s32.totalorder %s127, %s128
      %p140 = scmp.eq.s32.totalorder %s29, 1
      %p141 = por %p139, %p140
      %p143 = scmp.ne.s32.totalorder %s128, %s142
      %p144 = scmp.eq.s32.totalorder %s29, 0
      %p145 = por %p143, %p144
      %s147 = sadd.s32 %s146, 1
      %p150 = scmp.eq.s32.totalorder %s23, 1
      %p151 = scmp.ne.s32.totalorder %s146, %s148
      %p152 = scmp.eq.s32.totalorder %s23, 0
      %p153 = por %p151, %p152
      %p154 = scmp.ne.s32.totalorder %s146, %s148
      %p155 = scmp.eq.s32.totalorder %s28, 1
      %p156 = por %p154, %p155
      %p157 = scmp.ne.s32.totalorder %s148, %s149
      %p158 = scmp.eq.s32.totalorder %s28, 0
      %p159 = por %p157, %p158
      %p160 = scmp.ne.s32.totalorder %s148, %s149
      %p161 = scmp.eq.s32.totalorder %s29, 1
      %p162 = por %p160, %p161
      %p164 = scmp.ne.s32.totalorder %s149, %s163
      %p165 = scmp.eq.s32.totalorder %s29, 0
      %p166 = por %p164, %p165
      %s168 = sadd.s32 %s167, 1
      %p171 = scmp.eq.s32.totalorder %s23, 1
      %p172 = scmp.ne.s32.totalorder %s167, %s169
      %p173 = scmp.eq.s32.totalorder %s23, 0
      %p174 = por %p172, %p173
      %p175 = scmp.ne.s32.totalorder %s167, %s169
      %p176 = scmp.eq.s32.totalorder %s28, 1
      %p177 = por %p175, %p176
      %p178 = scmp.ne.s32.totalorder %s169, %s170
      %p179 = scmp.eq.s32.totalorder %s28, 0
      %p180 = por %p178, %p179
      %p181 = scmp.ne.s32.totalorder %s169, %s170
      %p182 = scmp.eq.s32.totalorder %s29, 1
      %p183 = por %p181, %p182
      %p185 = scmp.ne.s32.totalorder %s170, %s184
      %p186 = scmp.eq.s32.totalorder %s29, 0
      %p187 = por %p185, %p186
      %s188 = ssub.s32 %s23, %s30
      %p189 = scmp.eq.s32.totalorder %s188, 0
      %s191 = sadd.s32 %s190, 1
      %s192 = scalar_select %p189, %s190, %s191
      %p195 = pneg %p189
      %p196 = scmp.eq.s32.totalorder %s23, 1
      %p197 = por %p195, %p196
      %p198 = scmp.ne.s32.totalorder %s190, %s193
      %p199 = scmp.eq.s32.totalorder %s23, 0
      %p200 = por %p198, %p199
      %p201 = scmp.ne.s32.totalorder %s190, %s193
      %p202 = scmp.eq.s32.totalorder %s28, 1
      %p203 = por %p201, %p202
      %p204 = scmp.ne.s32.totalorder %s193, %s194
      %p205 = scmp.eq.s32.totalorder %s28, 0
      %p206 = por %p204, %p205
      %p207 = scmp.ne.s32.totalorder %s193, %s194
      %p208 = scmp.eq.s32.totalorder %s29, 1
      %p209 = por %p207, %p208
      %p211 = scmp.ne.s32.totalorder %s194, %s210
      %p212 = scmp.eq.s32.totalorder %s29, 0
      %p213 = por %p211, %p212
      %p214 = scmp.le.s32.totalorder 1, %s23
      %p215 = scmp.lt.s32.totalorder %s23, 3
      %p216 = pnand %p214, %p215
      %p217 = pneg %p216
      // Predicated region
      $region9: #{tpu_custom_call.1} parent=5 // pred_check
        _
      $region10: #{tpu_custom_call.1} parent=5 // pred_check_branch
        %219 = sbr.rel (%p216) target = $region12
      $region11: #{tpu_custom_call.1} parent=5 // pred_region
        %s220 = ssub.s32 %s23, 1
        // Predicated region
        $region13: #{tpu_custom_call.1} parent=11 // pred_check
          %p221 = pneg %p96
        $region14: #{tpu_custom_call.1} parent=11 // pred_check_branch
          %223 = sbr.rel (%p221) target = $region16
        $region15: #{tpu_custom_call.1} parent=11 // pred_region
          _
        $region16: #{tpu_custom_call.1} parent=11 // pred_fallthru
          _
        // Predicated region
        $region17: #{tpu_custom_call.1} parent=11 // pred_check
          %p224 = pneg %p117
        $region18: #{tpu_custom_call.1} parent=11 // pred_check_branch
          %226 = sbr.rel (%p224) target = $region20
        $region19: #{tpu_custom_call.1} parent=11 // pred_region
          _
        $region20: #{tpu_custom_call.1} parent=11 // pred_fallthru
          _
        // Predicated region
        $region21: #{tpu_custom_call.1} parent=11 // pred_check
          %p227 = pneg %p138
        $region22: #{tpu_custom_call.1} parent=11 // pred_check_branch
          %229 = sbr.rel (%p227) target = $region24
        $region23: #{tpu_custom_call.1} parent=11 // pred_region
          _
        $region24: #{tpu_custom_call.1} parent=11 // pred_fallthru
          _
        // Predicated region
        $region25: #{tpu_custom_call.1} parent=11 // pred_check
          %p230 = pneg %p159
        $region26: #{tpu_custom_call.1} parent=11 // pred_check_branch
          %232 = sbr.rel (%p230) target = $region28
        $region27: #{tpu_custom_call.1} parent=11 // pred_region
          _
        $region28: #{tpu_custom_call.1} parent=11 // pred_fallthru
          _
        // Predicated region
        $region29: #{tpu_custom_call.1} parent=11 // pred_check
          %p233 = pneg %p180
        $region30: #{tpu_custom_call.1} parent=11 // pred_check_branch
          %235 = sbr.rel (%p233) target = $region32
        $region31: #{tpu_custom_call.1} parent=11 // pred_region
          _
        $region32: #{tpu_custom_call.1} parent=11 // pred_fallthru
          _
      $region12: #{tpu_custom_call.1} parent=5 // pred_fallthru
        _
      %p236 = scmp.lt.s32.totalorder %s23, 2
      // Predicated region
      $region33: #{tpu_custom_call.1} parent=5 // pred_check
        %p237 = pneg %p236
      $region34: #{tpu_custom_call.1} parent=5 // pred_check_branch
        %239 = sbr.rel (%p237) target = $region36
      $region35: #{tpu_custom_call.1} parent=5 // pred_region
        // Predicated region
        $region37: #{tpu_custom_call.1} parent=35 // pred_check
          %p240 = pneg %p43
        $region38: #{tpu_custom_call.1} parent=35 // pred_check_branch
          %242 = sbr.rel (%p240) target = $region40
        $region39: #{tpu_custom_call.1} parent=35 // pred_region
          %p243 = scmp.lt.s32.totalorder %s23, 1
          %s244 = scalar_select %p243, %s23, 1
          %s245 = smul.addr %s244, 41
          %s246 = smul.addr %s245, 8
          %s247 = scalar_lea.vmem %s1, %s246
        $region40: #{tpu_custom_call.1} parent=35 // pred_fallthru
          _
        // Predicated region
        $region41: #{tpu_custom_call.1} parent=35 // pred_check
          %p248 = pneg %p69
        $region42: #{tpu_custom_call.1} parent=35 // pred_check_branch
          %250 = sbr.rel (%p248) target = $region44
        $region43: #{tpu_custom_call.1} parent=35 // pred_region
          %p251 = scmp.lt.s32.totalorder %s23, 1
          %s252 = scalar_select %p251, %s23, 1
          %s253 = smul.addr %s252, 41
          %s254 = smul.addr %s253, 8
          %s255 = scalar_lea.vmem %s2, %s254
        $region44: #{tpu_custom_call.1} parent=35 // pred_fallthru
          _
      $region36: #{tpu_custom_call.1} parent=5 // pred_fallthru
        _
      %p256 = scmp.le.s32.totalorder 1, %s23
      %p257 = scmp.lt.s32.totalorder %s23, 3
      %p258 = pnand %p256, %p257
      %p259 = pneg %p258
      // Predicated region
      $region45: #{tpu_custom_call.1} parent=5 // pred_check
        _
      $region46: #{tpu_custom_call.1} parent=5 // pred_check_branch
        %261 = sbr.rel (%p258) target = $region48
      $region47: #{tpu_custom_call.1} parent=5 // pred_region
        %s262 = ssub.s32 %s23, 1
        %p263 = scmp.lt.s32.totalorder %s28, 1
        %s264 = scalar_select %p263, %s28, 1
        %s265 = smul.addr %s264, 41
        %s266 = smul.addr %s265, 8
        %s267 = scalar_lea.vmem %s1, %s266
        %p268 = pneg %p49
        %p269 = pneg %p46
        %p270 = scmp.lt.s32.totalorder %s28, 1
        %s271 = scalar_select %p270, %s28, 1
        %s272 = smul.addr %s271, 41
        %s273 = smul.addr %s272, 8
        %s274 = scalar_lea.vmem %s2, %s273
        %p275 = pneg %p75
        %p276 = pneg %p72
        %p277 = pneg %p96
        %p278 = pneg %p93
        %p279 = pneg %p117
        %p280 = pneg %p114
        %p281 = pneg %p138
        %p282 = pneg %p135
        %p283 = pneg %p159
        %p284 = pneg %p156
        %p285 = pneg %p180
        %p286 = pneg %p177
        %p287 = pneg %p206
        %p288 = pneg %p203
        %s289 = sand.u32 %s193, 1
        %s290 = scalar_lea.sflag [#allocation7], %s289
        %s291 = sand.u32 %s193, 1
        %s292 = smul.addr %s291, 8
        %s293 = scalar_lea.vmem [#allocation6], %s292
        %p294 = scmp.lt.s32.totalorder %s28, 1
        %s295 = scalar_select %p294, %s28, 1
        %s296 = smul.addr %s295, 41
        %s297 = smul.addr %s296, 8
        %s298 = scalar_lea.vmem %s1, %s297
        %p299 = scmp.lt.s32.totalorder %s28, 1
        %s300 = scalar_select %p299, %s28, 1
        %s301 = smul.addr %s300, 41
        %s302 = smul.addr %s301, 8
        %s303 = scalar_lea.vmem %s2, %s302
        %s305 = sld [smem:[#allocation5 + %s28]]
        %s306 = sshra.s32 %s28, 7
        %s307 = sand.u32 %s28, 127
        %s308 = sadd.s32 %s306, 1
        %s309 = smul.u32 %s308, 128
        %s310 = sshra.s32 %s28, 7
        %s311 = sand.u32 %s28, 127
        %s312 = sadd.s32 %s309, %s311
        %s313 = sld [smem:[#allocation5 + %s312]]
        %s314 = sadd.s32 %s306, 2
        %s315 = smul.u32 %s314, 128
        %s316 = sadd.s32 %s315, %s311
        %s317 = sld [smem:[#allocation5 + %s316]]
        %v318 = vld [vmem:[%s298] sm:$0xff]
        %v319 = vld [vmem:[%s298 + $0x8] sm:$0xff]
        %v320 = vld [vmem:[%s298 + $0x10] sm:$0xff]
        %v321 = vld [vmem:[%s298 + $0x18] sm:$0xff]
        %v322 = vld [vmem:[%s298 + $0x20] sm:$0xff]
        %v323 = vld [vmem:[%s298 + $0x28] sm:$0xff]
        %v324 = vld [vmem:[%s298 + $0x30] sm:$0xff]
        %v325 = vld [vmem:[%s298 + $0x38] sm:$0xff]
        %v326 = vld [vmem:[%s298 + $0x40] sm:$0xff]
        %v327 = vld [vmem:[%s298 + $0x48] sm:$0xff]
        %v328 = vld [vmem:[%s298 + $0x50] sm:$0xff]
        %v329 = vld [vmem:[%s298 + $0x58] sm:$0xff]
        %v330 = vld [vmem:[%s298 + $0x60] sm:$0xff]
        %v331 = vld [vmem:[%s298 + $0x68] sm:$0xff]
        %v332 = vld [vmem:[%s298 + $0x70] sm:$0xff]
        %v333 = vld [vmem:[%s298 + $0x78] sm:$0xff]
        %v334 = vld [vmem:[%s298 + $0x80] sm:$0xff]
        %v335 = vld [vmem:[%s298 + $0x88] sm:$0xff]
        %v336 = vld [vmem:[%s298 + $0x90] sm:$0xff]
        %v337 = vld [vmem:[%s298 + $0x98] sm:$0xff]
        %v338 = vld [vmem:[%s298 + $0xa0] sm:$0xff]
        %v339 = vld [vmem:[%s298 + $0xa8] sm:$0xff]
        %v340 = vld [vmem:[%s298 + $0xb0] sm:$0xff]
        %v341 = vld [vmem:[%s298 + $0xb8] sm:$0xff]
        %v342 = vld [vmem:[%s298 + $0xc0] sm:$0xff]
        %v343 = vld [vmem:[%s298 + $0xc8] sm:$0xff]
        %v344 = vld [vmem:[%s298 + $0xd0] sm:$0xff]
        %v345 = vld [vmem:[%s298 + $0xd8] sm:$0xff]
        %v346 = vld [vmem:[%s298 + $0xe0] sm:$0xff]
        %v347 = vld [vmem:[%s298 + $0xe8] sm:$0xff]
        %v348 = vld [vmem:[%s298 + $0xf0] sm:$0xff]
        %v349 = vld [vmem:[%s298 + $0xf8] sm:$0xff]
        %v350 = vld [vmem:[%s298 + $0x100] sm:$0xff]
        %v351 = vld [vmem:[%s298 + $0x108] sm:$0xff]
        %v352 = vld [vmem:[%s298 + $0x110] sm:$0xff]
        %v353 = vld [vmem:[%s298 + $0x118] sm:$0xff]
        %v354 = vld [vmem:[%s298 + $0x120] sm:$0xff]
        %v355 = vld [vmem:[%s298 + $0x128] sm:$0xff]
        %v356 = vld [vmem:[%s298 + $0x130] sm:$0xff]
        %v357 = vld [vmem:[%s298 + $0x138] sm:$0xff]
        %v358 = vld [vmem:[%s298 + $0x140] sm:$0xf]
        %v359 = vstv %s305
        %v360 = vmul.f32 %v359, %v318
        %v361 = vmul.f32 %v359, %v319
        %v362 = vmul.f32 %v359, %v320
        %v363 = vmul.f32 %v359, %v321
        %v364 = vmul.f32 %v359, %v322
        %v365 = vmul.f32 %v359, %v323
        %v366 = vmul.f32 %v359, %v324
        %v367 = vmul.f32 %v359, %v325
        %v368 = vmul.f32 %v359, %v326
        %v369 = vmul.f32 %v359, %v327
        %v370 = vmul.f32 %v359, %v328
        %v371 = vmul.f32 %v359, %v329
        %v372 = vmul.f32 %v359, %v330
        %v373 = vmul.f32 %v359, %v331
        %v374 = vmul.f32 %v359, %v332
        %v375 = vmul.f32 %v359, %v333
        %v376 = vmul.f32 %v359, %v334
        %v377 = vmul.f32 %v359, %v335
        %v378 = vmul.f32 %v359, %v336
        %v379 = vmul.f32 %v359, %v337
        %v380 = vmul.f32 %v359, %v338
        %v381 = vmul.f32 %v359, %v339
        %v382 = vmul.f32 %v359, %v340
        %v383 = vmul.f32 %v359, %v341
        %v384 = vmul.f32 %v359, %v342
        %v385 = vmul.f32 %v359, %v343
        %v386 = vmul.f32 %v359, %v344
        %v387 = vmul.f32 %v359, %v345
        %v388 = vmul.f32 %v359, %v346
        %v389 = vmul.f32 %v359, %v347
        %v390 = vmul.f32 %v359, %v348
        %v391 = vmul.f32 %v359, %v349
        %v392 = vmul.f32 %v359, %v350
        %v393 = vmul.f32 %v359, %v351
        %v394 = vmul.f32 %v359, %v352
        %v395 = vmul.f32 %v359, %v353
        %v396 = vmul.f32 %v359, %v354
        %v397 = vmul.f32 %v359, %v355
        %v398 = vmul.f32 %v359, %v356
        %v399 = vmul.f32 %v359, %v357
        %v400 = vmul.f32 %v359, %v358
        %v401 = vld [vmem:[%s303] sm:$0xff]
        %v402 = vld [vmem:[%s303 + $0x8] sm:$0xff]
        %v403 = vld [vmem:[%s303 + $0x10] sm:$0xff]
        %v404 = vld [vmem:[%s303 + $0x18] sm:$0xff]
        %v405 = vld [vmem:[%s303 + $0x20] sm:$0xff]
        %v406 = vld [vmem:[%s303 + $0x28] sm:$0xff]
        %v407 = vld [vmem:[%s303 + $0x30] sm:$0xff]
        %v408 = vld [vmem:[%s303 + $0x38] sm:$0xff]
        %v409 = vld [vmem:[%s303 + $0x40] sm:$0xff]
        %v410 = vld [vmem:[%s303 + $0x48] sm:$0xff]
        %v411 = vld [vmem:[%s303 + $0x50] sm:$0xff]
        %v412 = vld [vmem:[%s303 + $0x58] sm:$0xff]
        %v413 = vld [vmem:[%s303 + $0x60] sm:$0xff]
        %v414 = vld [vmem:[%s303 + $0x68] sm:$0xff]
        %v415 = vld [vmem:[%s303 + $0x70] sm:$0xff]
        %v416 = vld [vmem:[%s303 + $0x78] sm:$0xff]
        %v417 = vld [vmem:[%s303 + $0x80] sm:$0xff]
        %v418 = vld [vmem:[%s303 + $0x88] sm:$0xff]
        %v419 = vld [vmem:[%s303 + $0x90] sm:$0xff]
        %v420 = vld [vmem:[%s303 + $0x98] sm:$0xff]
        %v421 = vld [vmem:[%s303 + $0xa0] sm:$0xff]
        %v422 = vld [vmem:[%s303 + $0xa8] sm:$0xff]
        %v423 = vld [vmem:[%s303 + $0xb0] sm:$0xff]
        %v424 = vld [vmem:[%s303 + $0xb8] sm:$0xff]
        %v425 = vld [vmem:[%s303 + $0xc0] sm:$0xff]
        %v426 = vld [vmem:[%s303 + $0xc8] sm:$0xff]
        %v427 = vld [vmem:[%s303 + $0xd0] sm:$0xff]
        %v428 = vld [vmem:[%s303 + $0xd8] sm:$0xff]
        %v429 = vld [vmem:[%s303 + $0xe0] sm:$0xff]
        %v430 = vld [vmem:[%s303 + $0xe8] sm:$0xff]
        %v431 = vld [vmem:[%s303 + $0xf0] sm:$0xff]
        %v432 = vld [vmem:[%s303 + $0xf8] sm:$0xff]
        %v433 = vld [vmem:[%s303 + $0x100] sm:$0xff]
        %v434 = vld [vmem:[%s303 + $0x108] sm:$0xff]
        %v435 = vld [vmem:[%s303 + $0x110] sm:$0xff]
        %v436 = vld [vmem:[%s303 + $0x118] sm:$0xff]
        %v437 = vld [vmem:[%s303 + $0x120] sm:$0xff]
        %v438 = vld [vmem:[%s303 + $0x128] sm:$0xff]
        %v439 = vld [vmem:[%s303 + $0x130] sm:$0xff]
        %v440 = vld [vmem:[%s303 + $0x138] sm:$0xff]
        %v441 = vld [vmem:[%s303 + $0x140] sm:$0xf]
        %v442 = vstv %s313
        %v443 = vmul.f32 %v442, %v401
        %v444 = vmul.f32 %v442, %v402
        %v445 = vmul.f32 %v442, %v403
        %v446 = vmul.f32 %v442, %v404
        %v447 = vmul.f32 %v442, %v405
        %v448 = vmul.f32 %v442, %v406
        %v449 = vmul.f32 %v442, %v407
        %v450 = vmul.f32 %v442, %v408
        %v451 = vmul.f32 %v442, %v409
        %v452 = vmul.f32 %v442, %v410
        %v453 = vmul.f32 %v442, %v411
        %v454 = vmul.f32 %v442, %v412
        %v455 = vmul.f32 %v442, %v413
        %v456 = vmul.f32 %v442, %v414
        %v457 = vmul.f32 %v442, %v415
        %v458 = vmul.f32 %v442, %v416
        %v459 = vmul.f32 %v442, %v417
        %v460 = vmul.f32 %v442, %v418
        %v461 = vmul.f32 %v442, %v419
        %v462 = vmul.f32 %v442, %v420
        %v463 = vmul.f32 %v442, %v421
        %v464 = vmul.f32 %v442, %v422
        %v465 = vmul.f32 %v442, %v423
        %v466 = vmul.f32 %v442, %v424
        %v467 = vmul.f32 %v442, %v425
        %v468 = vmul.f32 %v442, %v426
        %v469 = vmul.f32 %v442, %v427
        %v470 = vmul.f32 %v442, %v428
        %v471 = vmul.f32 %v442, %v429
        %v472 = vmul.f32 %v442, %v430
        %v473 = vmul.f32 %v442, %v431
        %v474 = vmul.f32 %v442, %v432
        %v475 = vmul.f32 %v442, %v433
        %v476 = vmul.f32 %v442, %v434
        %v477 = vmul.f32 %v442, %v435
        %v478 = vmul.f32 %v442, %v436
        %v479 = vmul.f32 %v442, %v437
        %v480 = vmul.f32 %v442, %v438
        %v481 = vmul.f32 %v442, %v439
        %v482 = vmul.f32 %v442, %v440
        %v483 = vmul.f32 %v442, %v441
        %v484 = vadd.f32 %v360, %v443
        %v485 = vadd.f32 %v361, %v444
        %v486 = vadd.f32 %v362, %v445
        %v487 = vadd.f32 %v363, %v446
        %v488 = vadd.f32 %v364, %v447
        %v489 = vadd.f32 %v365, %v448
        %v490 = vadd.f32 %v366, %v449
        %v491 = vadd.f32 %v367, %v450
        %v492 = vadd.f32 %v368, %v451
        %v493 = vadd.f32 %v369, %v452
        %v494 = vadd.f32 %v370, %v453
        %v495 = vadd.f32 %v371, %v454
        %v496 = vadd.f32 %v372, %v455
        %v497 = vadd.f32 %v373, %v456
        %v498 = vadd.f32 %v374, %v457
        %v499 = vadd.f32 %v375, %v458
        %v500 = vadd.f32 %v376, %v459
        %v501 = vadd.f32 %v377, %v460
        %v502 = vadd.f32 %v378, %v461
        %v503 = vadd.f32 %v379, %v462
        %v504 = vadd.f32 %v380, %v463
        %v505 = vadd.f32 %v381, %v464
        %v506 = vadd.f32 %v382, %v465
        %v507 = vadd.f32 %v383, %v466
        %v508 = vadd.f32 %v384, %v467
        %v509 = vadd.f32 %v385, %v468
        %v510 = vadd.f32 %v386, %v469
        %v511 = vadd.f32 %v387, %v470
        %v512 = vadd.f32 %v388, %v471
        %v513 = vadd.f32 %v389, %v472
        %v514 = vadd.f32 %v390, %v473
        %v515 = vadd.f32 %v391, %v474
        %v516 = vadd.f32 %v392, %v475
        %v517 = vadd.f32 %v393, %v476
        %v518 = vadd.f32 %v394, %v477
        %v519 = vadd.f32 %v395, %v478
        %v520 = vadd.f32 %v396, %v479
        %v521 = vadd.f32 %v397, %v480
        %v522 = vadd.f32 %v398, %v481
        %v523 = vadd.f32 %v399, %v482
        %v524 = vadd.f32 %v400, %v483
        %vm525 = vcmask 31744
        %526 = vst.msk [vmem:[#allocation2] sm:$0xff] %vm525, %v484
        %527 = vst.msk [vmem:[#allocation2 + $0x8] sm:$0xff] %vm525, %v485
        %528 = vst.msk [vmem:[#allocation2 + $0x10] sm:$0xff] %vm525, %v486
        %529 = vst.msk [vmem:[#allocation2 + $0x18] sm:$0xff] %vm525, %v487
        %530 = vst.msk [vmem:[#allocation2 + $0x20] sm:$0xff] %vm525, %v488
        %531 = vst.msk [vmem:[#allocation2 + $0x28] sm:$0xff] %vm525, %v489
        %532 = vst.msk [vmem:[#allocation2 + $0x30] sm:$0xff] %vm525, %v490
        %533 = vst.msk [vmem:[#allocation2 + $0x38] sm:$0xff] %vm525, %v491
        %534 = vst.msk [vmem:[#allocation2 + $0x40] sm:$0xff] %vm525, %v492
        %535 = vst.msk [vmem:[#allocation2 + $0x48] sm:$0xff] %vm525, %v493
        %536 = vst.msk [vmem:[#allocation2 + $0x50] sm:$0xff] %vm525, %v494
        %537 = vst.msk [vmem:[#allocation2 + $0x58] sm:$0xff] %vm525, %v495
        %538 = vst.msk [vmem:[#allocation2 + $0x60] sm:$0xff] %vm525, %v496
        %539 = vst.msk [vmem:[#allocation2 + $0x68] sm:$0xff] %vm525, %v497
        %540 = vst.msk [vmem:[#allocation2 + $0x70] sm:$0xff] %vm525, %v498
        %541 = vst.msk [vmem:[#allocation2 + $0x78] sm:$0xff] %vm525, %v499
        %542 = vst.msk [vmem:[#allocation2 + $0x80] sm:$0xff] %vm525, %v500
        %543 = vst.msk [vmem:[#allocation2 + $0x88] sm:$0xff] %vm525, %v501
        %544 = vst.msk [vmem:[#allocation2 + $0x90] sm:$0xff] %vm525, %v502
        %545 = vst.msk [vmem:[#allocation2 + $0x98] sm:$0xff] %vm525, %v503
        %546 = vst.msk [vmem:[#allocation2 + $0xa0] sm:$0xff] %vm525, %v504
        %547 = vst.msk [vmem:[#allocation2 + $0xa8] sm:$0xff] %vm525, %v505
        %548 = vst.msk [vmem:[#allocation2 + $0xb0] sm:$0xff] %vm525, %v506
        %549 = vst.msk [vmem:[#allocation2 + $0xb8] sm:$0xff] %vm525, %v507
        %550 = vst.msk [vmem:[#allocation2 + $0xc0] sm:$0xff] %vm525, %v508
        %551 = vst.msk [vmem:[#allocation2 + $0xc8] sm:$0xff] %vm525, %v509
        %552 = vst.msk [vmem:[#allocation2 + $0xd0] sm:$0xff] %vm525, %v510
        %553 = vst.msk [vmem:[#allocation2 + $0xd8] sm:$0xff] %vm525, %v511
        %554 = vst.msk [vmem:[#allocation2 + $0xe0] sm:$0xff] %vm525, %v512
        %555 = vst.msk [vmem:[#allocation2 + $0xe8] sm:$0xff] %vm525, %v513
        %556 = vst.msk [vmem:[#allocation2 + $0xf0] sm:$0xff] %vm525, %v514
        %557 = vst.msk [vmem:[#allocation2 + $0xf8] sm:$0xff] %vm525, %v515
        %558 = vst.msk [vmem:[#allocation2 + $0x100] sm:$0xff] %vm525, %v516
        %559 = vst.msk [vmem:[#allocation2 + $0x108] sm:$0xff] %vm525, %v517
        %560 = vst.msk [vmem:[#allocation2 + $0x110] sm:$0xff] %vm525, %v518
        %561 = vst.msk [vmem:[#allocation2 + $0x118] sm:$0xff] %vm525, %v519
        %562 = vst.msk [vmem:[#allocation2 + $0x120] sm:$0xff] %vm525, %v520
        %563 = vst.msk [vmem:[#allocation2 + $0x128] sm:$0xff] %vm525, %v521
        %564 = vst.msk [vmem:[#allocation2 + $0x130] sm:$0xff] %vm525, %v522
        %565 = vst.msk [vmem:[#allocation2 + $0x138] sm:$0xff] %vm525, %v523
        %vm566 = vcmask 27648
        %567 = vst.msk [vmem:[#allocation2 + $0x140] sm:$0xf] %vm566, %v524
        %v568 = vlaneseq
        %v569 = vshrl.u32 %v568, 7
        %v570 = vadd.s32 %v569, 8
        %v571 = vadd.s32 %v569, 16
        %v572 = vadd.s32 %v569, 24
        %v573 = vadd.s32 %v569, 32
        %v574 = vadd.s32 %v569, 40
        %v575 = vadd.s32 %v569, 48
        %v576 = vadd.s32 %v569, 56
        %v577 = vadd.s32 %v569, 64
        %v578 = vadd.s32 %v569, 72
        %v579 = vadd.s32 %v569, 80
        %v580 = vadd.s32 %v569, 88
        %v581 = vadd.s32 %v569, 96
        %v582 = vadd.s32 %v569, 104
        %v583 = vadd.s32 %v569, 112
        %v584 = vadd.s32 %v569, 120
        %v585 = vadd.s32 %v569, 128
        %v586 = vadd.s32 %v569, 136
        %v587 = vadd.s32 %v569, 144
        %v588 = vadd.s32 %v569, 152
        %v589 = vadd.s32 %v569, 160
        %v590 = vadd.s32 %v569, 168
        %v591 = vadd.s32 %v569, 176
        %v592 = vadd.s32 %v569, 184
        %v593 = vadd.s32 %v569, 192
        %v594 = vadd.s32 %v569, 200
        %v595 = vadd.s32 %v569, 208
        %v596 = vadd.s32 %v569, 216
        %v597 = vadd.s32 %v569, 224
        %v598 = vadd.s32 %v569, 232
        %v599 = vadd.s32 %v569, 240
        %v600 = vadd.s32 %v569, 248
        %v601 = vadd.s32 %v569, 256
        %v602 = vadd.s32 %v569, 264
        %v603 = vadd.s32 %v569, 272
        %v604 = vadd.s32 %v569, 280
        %v605 = vadd.s32 %v569, 19
        %v606 = vadd.s32 %v570, 19
        %v607 = vadd.s32 %v571, 19
        %v608 = vadd.s32 %v572, 19
        %v609 = vadd.s32 %v573, 19
        %v610 = vadd.s32 %v574, 19
        %v611 = vadd.s32 %v575, 19
        %v612 = vadd.s32 %v576, 19
        %v613 = vadd.s32 %v577, 19
        %v614 = vadd.s32 %v578, 19
        %v615 = vadd.s32 %v579, 19
        %v616 = vadd.s32 %v580, 19
        %v617 = vadd.s32 %v581, 19
        %v618 = vadd.s32 %v582, 19
        %v619 = vadd.s32 %v583, 19
        %v620 = vadd.s32 %v584, 19
        %v621 = vadd.s32 %v585, 19
        %v622 = vadd.s32 %v586, 19
        %v623 = vadd.s32 %v587, 19
        %v624 = vadd.s32 %v588, 19
        %v625 = vadd.s32 %v589, 19
        %v626 = vadd.s32 %v590, 19
        %v627 = vadd.s32 %v591, 19
        %v628 = vadd.s32 %v592, 19
        %v629 = vadd.s32 %v593, 19
        %v630 = vadd.s32 %v594, 19
        %v631 = vadd.s32 %v595, 19
        %v632 = vadd.s32 %v596, 19
        %v633 = vadd.s32 %v597, 19
        %v634 = vadd.s32 %v598, 19
        %v635 = vadd.s32 %v599, 19
        %v636 = vadd.s32 %v600, 19
        %v637 = vadd.s32 %v601, 19
        %v638 = vadd.s32 %v602, 19
        %v639 = vadd.s32 %v603, 19
        %v640 = vadd.s32 %v604, 19
        %vm641 = vcmp.lt.s32.totalorder %v605, 0
        %v642 = vsub.s32 0, %v605
        %v643 = vsel %vm641, %v642, %v605
        %v644 = vmul.u32.u64.compose %v643, 3817748708
        %v645 = vextract.low.u32 %v644
        %v646 = vextract.high.u32 %v644
        %v647 = vshrl.u32 %v646, 4
        %v648 = vmul.u32 %v647, 18
        %v649 = vsub.s32 %v643, %v648
        %v650 = vsub.s32 0, %v649
        %v651 = vsel %vm641, %v650, %v649
        %vm652 = vcmp.lt.s32.totalorder %v606, 0
        %v653 = vsub.s32 0, %v606
        %v654 = vsel %vm652, %v653, %v606
        %v655 = vmul.u32.u64.compose %v654, 3817748708
        %v656 = vextract.low.u32 %v655
        %v657 = vextract.high.u32 %v655
        %v658 = vshrl.u32 %v657, 4
        %v659 = vmul.u32 %v658, 18
        %v660 = vsub.s32 %v654, %v659
        %v661 = vsub.s32 0, %v660
        %v662 = vsel %vm652, %v661, %v660
        %vm663 = vcmp.lt.s32.totalorder %v607, 0
        %v664 = vsub.s32 0, %v607
        %v665 = vsel %vm663, %v664, %v607
        %v666 = vmul.u32.u64.compose %v665, 3817748708
        %v667 = vextract.low.u32 %v666
        %v668 = vextract.high.u32 %v666
        %v669 = vshrl.u32 %v668, 4
        %v670 = vmul.u32 %v669, 18
        %v671 = vsub.s32 %v665, %v670
        %v672 = vsub.s32 0, %v671
        %v673 = vsel %vm663, %v672, %v671
        %vm674 = vcmp.lt.s32.totalorder %v608, 0
        %v675 = vsub.s32 0, %v608
        %v676 = vsel %vm674, %v675, %v608
        %v677 = vmul.u32.u64.compose %v676, 3817748708
        %v678 = vextract.low.u32 %v677
        %v679 = vextract.high.u32 %v677
        %v680 = vshrl.u32 %v679, 4
        %v681 = vmul.u32 %v680, 18
        %v682 = vsub.s32 %v676, %v681
        %v683 = vsub.s32 0, %v682
        %v684 = vsel %vm674, %v683, %v682
        %vm685 = vcmp.lt.s32.totalorder %v609, 0
        %v686 = vsub.s32 0, %v609
        %v687 = vsel %vm685, %v686, %v609
        %v688 = vmul.u32.u64.compose %v687, 3817748708
        %v689 = vextract.low.u32 %v688
        %v690 = vextract.high.u32 %v688
        %v691 = vshrl.u32 %v690, 4
        %v692 = vmul.u32 %v691, 18
        %v693 = vsub.s32 %v687, %v692
        %v694 = vsub.s32 0, %v693
        %v695 = vsel %vm685, %v694, %v693
        %vm696 = vcmp.lt.s32.totalorder %v610, 0
        %v697 = vsub.s32 0, %v610
        %v698 = vsel %vm696, %v697, %v610
        %v699 = vmul.u32.u64.compose %v698, 3817748708
        %v700 = vextract.low.u32 %v699
        %v701 = vextract.high.u32 %v699
        %v702 = vshrl.u32 %v701, 4
        %v703 = vmul.u32 %v702, 18
        %v704 = vsub.s32 %v698, %v703
        %v705 = vsub.s32 0, %v704
        %v706 = vsel %vm696, %v705, %v704
        %vm707 = vcmp.lt.s32.totalorder %v611, 0
        %v708 = vsub.s32 0, %v611
        %v709 = vsel %vm707, %v708, %v611
        %v710 = vmul.u32.u64.compose %v709, 3817748708
        %v711 = vextract.low.u32 %v710
        %v712 = vextract.high.u32 %v710
        %v713 = vshrl.u32 %v712, 4
        %v714 = vmul.u32 %v713, 18
        %v715 = vsub.s32 %v709, %v714
        %v716 = vsub.s32 0, %v715
        %v717 = vsel %vm707, %v716, %v715
        %vm718 = vcmp.lt.s32.totalorder %v612, 0
        %v719 = vsub.s32 0, %v612
        %v720 = vsel %vm718, %v719, %v612
        %v721 = vmul.u32.u64.compose %v720, 3817748708
        %v722 = vextract.low.u32 %v721
        %v723 = vextract.high.u32 %v721
        %v724 = vshrl.u32 %v723, 4
        %v725 = vmul.u32 %v724, 18
        %v726 = vsub.s32 %v720, %v725
        %v727 = vsub.s32 0, %v726
        %v728 = vsel %vm718, %v727, %v726
        %vm729 = vcmp.lt.s32.totalorder %v613, 0
        %v730 = vsub.s32 0, %v613
        %v731 = vsel %vm729, %v730, %v613
        %v732 = vmul.u32.u64.compose %v731, 3817748708
        %v733 = vextract.low.u32 %v732
        %v734 = vextract.high.u32 %v732
        %v735 = vshrl.u32 %v734, 4
        %v736 = vmul.u32 %v735, 18
        %v737 = vsub.s32 %v731, %v736
        %v738 = vsub.s32 0, %v737
        %v739 = vsel %vm729, %v738, %v737
        %vm740 = vcmp.lt.s32.totalorder %v614, 0
        %v741 = vsub.s32 0, %v614
        %v742 = vsel %vm740, %v741, %v614
        %v743 = vmul.u32.u64.compose %v742, 3817748708
        %v744 = vextract.low.u32 %v743
        %v745 = vextract.high.u32 %v743
        %v746 = vshrl.u32 %v745, 4
        %v747 = vmul.u32 %v746, 18
        %v748 = vsub.s32 %v742, %v747
        %v749 = vsub.s32 0, %v748
        %v750 = vsel %vm740, %v749, %v748
        %vm751 = vcmp.lt.s32.totalorder %v615, 0
        %v752 = vsub.s32 0, %v615
        %v753 = vsel %vm751, %v752, %v615
        %v754 = vmul.u32.u64.compose %v753, 3817748708
        %v755 = vextract.low.u32 %v754
        %v756 = vextract.high.u32 %v754
        %v757 = vshrl.u32 %v756, 4
        %v758 = vmul.u32 %v757, 18
        %v759 = vsub.s32 %v753, %v758
        %v760 = vsub.s32 0, %v759
        %v761 = vsel %vm751, %v760, %v759
        %vm762 = vcmp.lt.s32.totalorder %v616, 0
        %v763 = vsub.s32 0, %v616
        %v764 = vsel %vm762, %v763, %v616
        %v765 = vmul.u32.u64.compose %v764, 3817748708
        %v766 = vextract.low.u32 %v765
        %v767 = vextract.high.u32 %v765
        %v768 = vshrl.u32 %v767, 4
        %v769 = vmul.u32 %v768, 18
        %v770 = vsub.s32 %v764, %v769
        %v771 = vsub.s32 0, %v770
        %v772 = vsel %vm762, %v771, %v770
        %vm773 = vcmp.lt.s32.totalorder %v617, 0
        %v774 = vsub.s32 0, %v617
        %v775 = vsel %vm773, %v774, %v617
        %v776 = vmul.u32.u64.compose %v775, 3817748708
        %v777 = vextract.low.u32 %v776
        %v778 = vextract.high.u32 %v776
        %v779 = vshrl.u32 %v778, 4
        %v780 = vmul.u32 %v779, 18
        %v781 = vsub.s32 %v775, %v780
        %v782 = vsub.s32 0, %v781
        %v783 = vsel %vm773, %v782, %v781
        %vm784 = vcmp.lt.s32.totalorder %v618, 0
        %v785 = vsub.s32 0, %v618
        %v786 = vsel %vm784, %v785, %v618
        %v787 = vmul.u32.u64.compose %v786, 3817748708
        %v788 = vextract.low.u32 %v787
        %v789 = vextract.high.u32 %v787
        %v790 = vshrl.u32 %v789, 4
        %v791 = vmul.u32 %v790, 18
        %v792 = vsub.s32 %v786, %v791
        %v793 = vsub.s32 0, %v792
        %v794 = vsel %vm784, %v793, %v792
        %vm795 = vcmp.lt.s32.totalorder %v619, 0
        %v796 = vsub.s32 0, %v619
        %v797 = vsel %vm795, %v796, %v619
        %v798 = vmul.u32.u64.compose %v797, 3817748708
        %v799 = vextract.low.u32 %v798
        %v800 = vextract.high.u32 %v798
        %v801 = vshrl.u32 %v800, 4
        %v802 = vmul.u32 %v801, 18
        %v803 = vsub.s32 %v797, %v802
        %v804 = vsub.s32 0, %v803
        %v805 = vsel %vm795, %v804, %v803
        %vm806 = vcmp.lt.s32.totalorder %v620, 0
        %v807 = vsub.s32 0, %v620
        %v808 = vsel %vm806, %v807, %v620
        %v809 = vmul.u32.u64.compose %v808, 3817748708
        %v810 = vextract.low.u32 %v809
        %v811 = vextract.high.u32 %v809
        %v812 = vshrl.u32 %v811, 4
        %v813 = vmul.u32 %v812, 18
        %v814 = vsub.s32 %v808, %v813
        %v815 = vsub.s32 0, %v814
        %v816 = vsel %vm806, %v815, %v814
        %vm817 = vcmp.lt.s32.totalorder %v621, 0
        %v818 = vsub.s32 0, %v621
        %v819 = vsel %vm817, %v818, %v621
        %v820 = vmul.u32.u64.compose %v819, 3817748708
        %v821 = vextract.low.u32 %v820
        %v822 = vextract.high.u32 %v820
        %v823 = vshrl.u32 %v822, 4
        %v824 = vmul.u32 %v823, 18
        %v825 = vsub.s32 %v819, %v824
        %v826 = vsub.s32 0, %v825
        %v827 = vsel %vm817, %v826, %v825
        %vm828 = vcmp.lt.s32.totalorder %v622, 0
        %v829 = vsub.s32 0, %v622
        %v830 = vsel %vm828, %v829, %v622
        %v831 = vmul.u32.u64.compose %v830, 3817748708
        %v832 = vextract.low.u32 %v831
        %v833 = vextract.high.u32 %v831
        %v834 = vshrl.u32 %v833, 4
        %v835 = vmul.u32 %v834, 18
        %v836 = vsub.s32 %v830, %v835
        %v837 = vsub.s32 0, %v836
        %v838 = vsel %vm828, %v837, %v836
        %vm839 = vcmp.lt.s32.totalorder %v623, 0
        %v840 = vsub.s32 0, %v623
        %v841 = vsel %vm839, %v840, %v623
        %v842 = vmul.u32.u64.compose %v841, 3817748708
        %v843 = vextract.low.u32 %v842
        %v844 = vextract.high.u32 %v842
        %v845 = vshrl.u32 %v844, 4
        %v846 = vmul.u32 %v845, 18
        %v847 = vsub.s32 %v841, %v846
        %v848 = vsub.s32 0, %v847
        %v849 = vsel %vm839, %v848, %v847
        %vm850 = vcmp.lt.s32.totalorder %v624, 0
        %v851 = vsub.s32 0, %v624
        %v852 = vsel %vm850, %v851, %v624
        %v853 = vmul.u32.u64.compose %v852, 3817748708
        %v854 = vextract.low.u32 %v853
        %v855 = vextract.high.u32 %v853
        %v856 = vshrl.u32 %v855, 4
        %v857 = vmul.u32 %v856, 18
        %v858 = vsub.s32 %v852, %v857
        %v859 = vsub.s32 0, %v858
        %v860 = vsel %vm850, %v859, %v858
        %vm861 = vcmp.lt.s32.totalorder %v625, 0
        %v862 = vsub.s32 0, %v625
        %v863 = vsel %vm861, %v862, %v625
        %v864 = vmul.u32.u64.compose %v863, 3817748708
        %v865 = vextract.low.u32 %v864
        %v866 = vextract.high.u32 %v864
        %v867 = vshrl.u32 %v866, 4
        %v868 = vmul.u32 %v867, 18
        %v869 = vsub.s32 %v863, %v868
        %v870 = vsub.s32 0, %v869
        %v871 = vsel %vm861, %v870, %v869
        %vm872 = vcmp.lt.s32.totalorder %v626, 0
        %v873 = vsub.s32 0, %v626
        %v874 = vsel %vm872, %v873, %v626
        %v875 = vmul.u32.u64.compose %v874, 3817748708
        %v876 = vextract.low.u32 %v875
        %v877 = vextract.high.u32 %v875
        %v878 = vshrl.u32 %v877, 4
        %v879 = vmul.u32 %v878, 18
        %v880 = vsub.s32 %v874, %v879
        %v881 = vsub.s32 0, %v880
        %v882 = vsel %vm872, %v881, %v880
        %vm883 = vcmp.lt.s32.totalorder %v627, 0
        %v884 = vsub.s32 0, %v627
        %v885 = vsel %vm883, %v884, %v627
        %v886 = vmul.u32.u64.compose %v885, 3817748708
        %v887 = vextract.low.u32 %v886
        %v888 = vextract.high.u32 %v886
        %v889 = vshrl.u32 %v888, 4
        %v890 = vmul.u32 %v889, 18
        %v891 = vsub.s32 %v885, %v890
        %v892 = vsub.s32 0, %v891
        %v893 = vsel %vm883, %v892, %v891
        %vm894 = vcmp.lt.s32.totalorder %v628, 0
        %v895 = vsub.s32 0, %v628
        %v896 = vsel %vm894, %v895, %v628
        %v897 = vmul.u32.u64.compose %v896, 3817748708
        %v898 = vextract.low.u32 %v897
        %v899 = vextract.high.u32 %v897
        %v900 = vshrl.u32 %v899, 4
        %v901 = vmul.u32 %v900, 18
        %v902 = vsub.s32 %v896, %v901
        %v903 = vsub.s32 0, %v902
        %v904 = vsel %vm894, %v903, %v902
        %vm905 = vcmp.lt.s32.totalorder %v629, 0
        %v906 = vsub.s32 0, %v629
        %v907 = vsel %vm905, %v906, %v629
        %v908 = vmul.u32.u64.compose %v907, 3817748708
        %v909 = vextract.low.u32 %v908
        %v910 = vextract.high.u32 %v908
        %v911 = vshrl.u32 %v910, 4
        %v912 = vmul.u32 %v911, 18
        %v913 = vsub.s32 %v907, %v912
        %v914 = vsub.s32 0, %v913
        %v915 = vsel %vm905, %v914, %v913
        %vm916 = vcmp.lt.s32.totalorder %v630, 0
        %v917 = vsub.s32 0, %v630
        %v918 = vsel %vm916, %v917, %v630
        %v919 = vmul.u32.u64.compose %v918, 3817748708
        %v920 = vextract.low.u32 %v919
        %v921 = vextract.high.u32 %v919
        %v922 = vshrl.u32 %v921, 4
        %v923 = vmul.u32 %v922, 18
        %v924 = vsub.s32 %v918, %v923
        %v925 = vsub.s32 0, %v924
        %v926 = vsel %vm916, %v925, %v924
        %vm927 = vcmp.lt.s32.totalorder %v631, 0
        %v928 = vsub.s32 0, %v631
        %v929 = vsel %vm927, %v928, %v631
        %v930 = vmul.u32.u64.compose %v929, 3817748708
        %v931 = vextract.low.u32 %v930
        %v932 = vextract.high.u32 %v930
        %v933 = vshrl.u32 %v932, 4
        %v934 = vmul.u32 %v933, 18
        %v935 = vsub.s32 %v929, %v934
        %v936 = vsub.s32 0, %v935
        %v937 = vsel %vm927, %v936, %v935
        %vm938 = vcmp.lt.s32.totalorder %v632, 0
        %v939 = vsub.s32 0, %v632
        %v940 = vsel %vm938, %v939, %v632
        %v941 = vmul.u32.u64.compose %v940, 3817748708
        %v942 = vextract.low.u32 %v941
        %v943 = vextract.high.u32 %v941
        %v944 = vshrl.u32 %v943, 4
        %v945 = vmul.u32 %v944, 18
        %v946 = vsub.s32 %v940, %v945
        %v947 = vsub.s32 0, %v946
        %v948 = vsel %vm938, %v947, %v946
        %vm949 = vcmp.lt.s32.totalorder %v633, 0
        %v950 = vsub.s32 0, %v633
        %v951 = vsel %vm949, %v950, %v633
        %v952 = vmul.u32.u64.compose %v951, 3817748708
        %v953 = vextract.low.u32 %v952
        %v954 = vextract.high.u32 %v952
        %v955 = vshrl.u32 %v954, 4
        %v956 = vmul.u32 %v955, 18
        %v957 = vsub.s32 %v951, %v956
        %v958 = vsub.s32 0, %v957
        %v959 = vsel %vm949, %v958, %v957
        %vm960 = vcmp.lt.s32.totalorder %v634, 0
        %v961 = vsub.s32 0, %v634
        %v962 = vsel %vm960, %v961, %v634
        %v963 = vmul.u32.u64.compose %v962, 3817748708
        %v964 = vextract.low.u32 %v963
        %v965 = vextract.high.u32 %v963
        %v966 = vshrl.u32 %v965, 4
        %v967 = vmul.u32 %v966, 18
        %v968 = vsub.s32 %v962, %v967
        %v969 = vsub.s32 0, %v968
        %v970 = vsel %vm960, %v969, %v968
        %vm971 = vcmp.lt.s32.totalorder %v635, 0
        %v972 = vsub.s32 0, %v635
        %v973 = vsel %vm971, %v972, %v635
        %v974 = vmul.u32.u64.compose %v973, 3817748708
        %v975 = vextract.low.u32 %v974
        %v976 = vextract.high.u32 %v974
        %v977 = vshrl.u32 %v976, 4
        %v978 = vmul.u32 %v977, 18
        %v979 = vsub.s32 %v973, %v978
        %v980 = vsub.s32 0, %v979
        %v981 = vsel %vm971, %v980, %v979
        %vm982 = vcmp.lt.s32.totalorder %v636, 0
        %v983 = vsub.s32 0, %v636
        %v984 = vsel %vm982, %v983, %v636
        %v985 = vmul.u32.u64.compose %v984, 3817748708
        %v986 = vextract.low.u32 %v985
        %v987 = vextract.high.u32 %v985
        %v988 = vshrl.u32 %v987, 4
        %v989 = vmul.u32 %v988, 18
        %v990 = vsub.s32 %v984, %v989
        %v991 = vsub.s32 0, %v990
        %v992 = vsel %vm982, %v991, %v990
        %vm993 = vcmp.lt.s32.totalorder %v637, 0
        %v994 = vsub.s32 0, %v637
        %v995 = vsel %vm993, %v994, %v637
        %v996 = vmul.u32.u64.compose %v995, 3817748708
        %v997 = vextract.low.u32 %v996
        %v998 = vextract.high.u32 %v996
        %v999 = vshrl.u32 %v998, 4
        %v1000 = vmul.u32 %v999, 18
        %v1001 = vsub.s32 %v995, %v1000
        %v1002 = vsub.s32 0, %v1001
        %v1003 = vsel %vm993, %v1002, %v1001
        %vm1004 = vcmp.lt.s32.totalorder %v638, 0
        %v1005 = vsub.s32 0, %v638
        %v1006 = vsel %vm1004, %v1005, %v638
        %v1007 = vmul.u32.u64.compose %v1006, 3817748708
        %v1008 = vextract.low.u32 %v1007
        %v1009 = vextract.high.u32 %v1007
        %v1010 = vshrl.u32 %v1009, 4
        %v1011 = vmul.u32 %v1010, 18
        %v1012 = vsub.s32 %v1006, %v1011
        %v1013 = vsub.s32 0, %v1012
        %v1014 = vsel %vm1004, %v1013, %v1012
        %vm1015 = vcmp.lt.s32.totalorder %v639, 0
        %v1016 = vsub.s32 0, %v639
        %v1017 = vsel %vm1015, %v1016, %v639
        %v1018 = vmul.u32.u64.compose %v1017, 3817748708
        %v1019 = vextract.low.u32 %v1018
        %v1020 = vextract.high.u32 %v1018
        %v1021 = vshrl.u32 %v1020, 4
        %v1022 = vmul.u32 %v1021, 18
        %v1023 = vsub.s32 %v1017, %v1022
        %v1024 = vsub.s32 0, %v1023
        %v1025 = vsel %vm1015, %v1024, %v1023
        %vm1026 = vcmp.lt.s32.totalorder %v640, 0
        %v1027 = vsub.s32 0, %v640
        %v1028 = vsel %vm1026, %v1027, %v640
        %v1029 = vmul.u32.u64.compose %v1028, 3817748708
        %v1030 = vextract.low.u32 %v1029
        %v1031 = vextract.high.u32 %v1029
        %v1032 = vshrl.u32 %v1031, 4
        %v1033 = vmul.u32 %v1032, 18
        %v1034 = vsub.s32 %v1028, %v1033
        %v1035 = vsub.s32 0, %v1034
        %v1036 = vsel %vm1026, %v1035, %v1034
        %vm1037 = vcmp.ne.s32.totalorder %v651, 0
        %vm1038 = vcmp.ne.s32.totalorder %v662, 0
        %vm1039 = vcmp.ne.s32.totalorder %v673, 0
        %vm1040 = vcmp.ne.s32.totalorder %v684, 0
        %vm1041 = vcmp.ne.s32.totalorder %v695, 0
        %vm1042 = vcmp.ne.s32.totalorder %v706, 0
        %vm1043 = vcmp.ne.s32.totalorder %v717, 0
        %vm1044 = vcmp.ne.s32.totalorder %v728, 0
        %vm1045 = vcmp.ne.s32.totalorder %v739, 0
        %vm1046 = vcmp.ne.s32.totalorder %v750, 0
        %vm1047 = vcmp.ne.s32.totalorder %v761, 0
        %vm1048 = vcmp.ne.s32.totalorder %v772, 0
        %vm1049 = vcmp.ne.s32.totalorder %v783, 0
        %vm1050 = vcmp.ne.s32.totalorder %v794, 0
        %vm1051 = vcmp.ne.s32.totalorder %v805, 0
        %vm1052 = vcmp.ne.s32.totalorder %v816, 0
        %vm1053 = vcmp.ne.s32.totalorder %v827, 0
        %vm1054 = vcmp.ne.s32.totalorder %v838, 0
        %vm1055 = vcmp.ne.s32.totalorder %v849, 0
        %vm1056 = vcmp.ne.s32.totalorder %v860, 0
        %vm1057 = vcmp.ne.s32.totalorder %v871, 0
        %vm1058 = vcmp.ne.s32.totalorder %v882, 0
        %vm1059 = vcmp.ne.s32.totalorder %v893, 0
        %vm1060 = vcmp.ne.s32.totalorder %v904, 0
        %vm1061 = vcmp.ne.s32.totalorder %v915, 0
        %vm1062 = vcmp.ne.s32.totalorder %v926, 0
        %vm1063 = vcmp.ne.s32.totalorder %v937, 0
        %vm1064 = vcmp.ne.s32.totalorder %v948, 0
        %vm1065 = vcmp.ne.s32.totalorder %v959, 0
        %vm1066 = vcmp.ne.s32.totalorder %v970, 0
        %vm1067 = vcmp.ne.s32.totalorder %v981, 0
        %vm1068 = vcmp.ne.s32.totalorder %v992, 0
        %vm1069 = vcmp.ne.s32.totalorder %v1003, 0
        %vm1070 = vcmp.ne.s32.totalorder %v1014, 0
        %vm1071 = vcmp.ne.s32.totalorder %v1025, 0
        %vm1072 = vcmp.ne.s32.totalorder %v1036, 0
        %vm1073 = vcmp.lt.s32.totalorder %v651, 0
        %vm1074 = vcmp.lt.s32.totalorder %v662, 0
        %vm1075 = vcmp.lt.s32.totalorder %v673, 0
        %vm1076 = vcmp.lt.s32.totalorder %v684, 0
        %vm1077 = vcmp.lt.s32.totalorder %v695, 0
        %vm1078 = vcmp.lt.s32.totalorder %v706, 0
        %vm1079 = vcmp.lt.s32.totalorder %v717, 0
        %vm1080 = vcmp.lt.s32.totalorder %v728, 0
        %vm1081 = vcmp.lt.s32.totalorder %v739, 0
        %vm1082 = vcmp.lt.s32.totalorder %v750, 0
        %vm1083 = vcmp.lt.s32.totalorder %v761, 0
        %vm1084 = vcmp.lt.s32.totalorder %v772, 0
        %vm1085 = vcmp.lt.s32.totalorder %v783, 0
        %vm1086 = vcmp.lt.s32.totalorder %v794, 0
        %vm1087 = vcmp.lt.s32.totalorder %v805, 0
        %vm1088 = vcmp.lt.s32.totalorder %v816, 0
        %vm1089 = vcmp.lt.s32.totalorder %v827, 0
        %vm1090 = vcmp.lt.s32.totalorder %v838, 0
        %vm1091 = vcmp.lt.s32.totalorder %v849, 0
        %vm1092 = vcmp.lt.s32.totalorder %v860, 0
        %vm1093 = vcmp.lt.s32.totalorder %v871, 0
        %vm1094 = vcmp.lt.s32.totalorder %v882, 0
        %vm1095 = vcmp.lt.s32.totalorder %v893, 0
        %vm1096 = vcmp.lt.s32.totalorder %v904, 0
        %vm1097 = vcmp.lt.s32.totalorder %v915, 0
        %vm1098 = vcmp.lt.s32.totalorder %v926, 0
        %vm1099 = vcmp.lt.s32.totalorder %v937, 0
        %vm1100 = vcmp.lt.s32.totalorder %v948, 0
        %vm1101 = vcmp.lt.s32.totalorder %v959, 0
        %vm1102 = vcmp.lt.s32.totalorder %v970, 0
        %vm1103 = vcmp.lt.s32.totalorder %v981, 0
        %vm1104 = vcmp.lt.s32.totalorder %v992, 0
        %vm1105 = vcmp.lt.s32.totalorder %v1003, 0
        %vm1106 = vcmp.lt.s32.totalorder %v1014, 0
        %vm1107 = vcmp.lt.s32.totalorder %v1025, 0
        %vm1108 = vcmp.lt.s32.totalorder %v1036, 0
        %vm1109 = vmand %vm1073, %vm1037
        %vm1110 = vmand %vm1074, %vm1038
        %vm1111 = vmand %vm1075, %vm1039
        %vm1112 = vmand %vm1076, %vm1040
        %vm1113 = vmand %vm1077, %vm1041
        %vm1114 = vmand %vm1078, %vm1042
        %vm1115 = vmand %vm1079, %vm1043
        %vm1116 = vmand %vm1080, %vm1044
        %vm1117 = vmand %vm1081, %vm1045
        %vm1118 = vmand %vm1082, %vm1046
        %vm1119 = vmand %vm1083, %vm1047
        %vm1120 = vmand %vm1084, %vm1048
        %vm1121 = vmand %vm1085, %vm1049
        %vm1122 = vmand %vm1086, %vm1050
        %vm1123 = vmand %vm1087, %vm1051
        %vm1124 = vmand %vm1088, %vm1052
        %vm1125 = vmand %vm1089, %vm1053
        %vm1126 = vmand %vm1090, %vm1054
        %vm1127 = vmand %vm1091, %vm1055
        %vm1128 = vmand %vm1092, %vm1056
        %vm1129 = vmand %vm1093, %vm1057
        %vm1130 = vmand %vm1094, %vm1058
        %vm1131 = vmand %vm1095, %vm1059
        %vm1132 = vmand %vm1096, %vm1060
        %vm1133 = vmand %vm1097, %vm1061
        %vm1134 = vmand %vm1098, %vm1062
        %vm1135 = vmand %vm1099, %vm1063
        %vm1136 = vmand %vm1100, %vm1064
        %vm1137 = vmand %vm1101, %vm1065
        %vm1138 = vmand %vm1102, %vm1066
        %vm1139 = vmand %vm1103, %vm1067
        %vm1140 = vmand %vm1104, %vm1068
        %vm1141 = vmand %vm1105, %vm1069
        %vm1142 = vmand %vm1106, %vm1070
        %vm1143 = vmand %vm1107, %vm1071
        %vm1144 = vmand %vm1108, %vm1072
        %v1145 = vadd.s32 %v651, 18
        %v1146 = vadd.s32 %v662, 18
        %v1147 = vadd.s32 %v673, 18
        %v1148 = vadd.s32 %v684, 18
        %v1149 = vadd.s32 %v695, 18
        %v1150 = vadd.s32 %v706, 18
        %v1151 = vadd.s32 %v717, 18
        %v1152 = vadd.s32 %v728, 18
        %v1153 = vadd.s32 %v739, 18
        %v1154 = vadd.s32 %v750, 18
        %v1155 = vadd.s32 %v761, 18
        %v1156 = vadd.s32 %v772, 18
        %v1157 = vadd.s32 %v783, 18
        %v1158 = vadd.s32 %v794, 18
        %v1159 = vadd.s32 %v805, 18
        %v1160 = vadd.s32 %v816, 18
        %v1161 = vadd.s32 %v827, 18
        %v1162 = vadd.s32 %v838, 18
        %v1163 = vadd.s32 %v849, 18
        %v1164 = vadd.s32 %v860, 18
        %v1165 = vadd.s32 %v871, 18
        %v1166 = vadd.s32 %v882, 18
        %v1167 = vadd.s32 %v893, 18
        %v1168 = vadd.s32 %v904, 18
        %v1169 = vadd.s32 %v915, 18
        %v1170 = vadd.s32 %v926, 18
        %v1171 = vadd.s32 %v937, 18
        %v1172 = vadd.s32 %v948, 18
        %v1173 = vadd.s32 %v959, 18
        %v1174 = vadd.s32 %v970, 18
        %v1175 = vadd.s32 %v981, 18
        %v1176 = vadd.s32 %v992, 18
        %v1177 = vadd.s32 %v1003, 18
        %v1178 = vadd.s32 %v1014, 18
        %v1179 = vadd.s32 %v1025, 18
        %v1180 = vadd.s32 %v1036, 18
        %v1181 = vsel %vm1109, %v1145, %v651
        %v1182 = vsel %vm1110, %v1146, %v662
        %v1183 = vsel %vm1111, %v1147, %v673
        %v1184 = vsel %vm1112, %v1148, %v684
        %v1185 = vsel %vm1113, %v1149, %v695
        %v1186 = vsel %vm1114, %v1150, %v706
        %v1187 = vsel %vm1115, %v1151, %v717
        %v1188 = vsel %vm1116, %v1152, %v728
        %v1189 = vsel %vm1117, %v1153, %v739
        %v1190 = vsel %vm1118, %v1154, %v750
        %v1191 = vsel %vm1119, %v1155, %v761
        %v1192 = vsel %vm1120, %v1156, %v772
        %v1193 = vsel %vm1121, %v1157, %v783
        %v1194 = vsel %vm1122, %v1158, %v794
        %v1195 = vsel %vm1123, %v1159, %v805
        %v1196 = vsel %vm1124, %v1160, %v816
        %v1197 = vsel %vm1125, %v1161, %v827
        %v1198 = vsel %vm1126, %v1162, %v838
        %v1199 = vsel %vm1127, %v1163, %v849
        %v1200 = vsel %vm1128, %v1164, %v860
        %v1201 = vsel %vm1129, %v1165, %v871
        %v1202 = vsel %vm1130, %v1166, %v882
        %v1203 = vsel %vm1131, %v1167, %v893
        %v1204 = vsel %vm1132, %v1168, %v904
        %v1205 = vsel %vm1133, %v1169, %v915
        %v1206 = vsel %vm1134, %v1170, %v926
        %v1207 = vsel %vm1135, %v1171, %v937
        %v1208 = vsel %vm1136, %v1172, %v948
        %v1209 = vsel %vm1137, %v1173, %v959
        %v1210 = vsel %vm1138, %v1174, %v970
        %v1211 = vsel %vm1139, %v1175, %v981
        %v1212 = vsel %vm1140, %v1176, %v992
        %v1213 = vsel %vm1141, %v1177, %v1003
        %v1214 = vsel %vm1142, %v1178, %v1014
        %v1215 = vsel %vm1143, %v1179, %v1025
        %v1216 = vsel %vm1144, %v1180, %v1036
        %vm1217 = vcmp.ge.s32.totalorder %v1181, 1
        %vm1218 = vcmp.ge.s32.totalorder %v1182, 1
        %vm1219 = vcmp.ge.s32.totalorder %v1183, 1
        %vm1220 = vcmp.ge.s32.totalorder %v1184, 1
        %vm1221 = vcmp.ge.s32.totalorder %v1185, 1
        %vm1222 = vcmp.ge.s32.totalorder %v1186, 1
        %vm1223 = vcmp.ge.s32.totalorder %v1187, 1
        %vm1224 = vcmp.ge.s32.totalorder %v1188, 1
        %vm1225 = vcmp.ge.s32.totalorder %v1189, 1
        %vm1226 = vcmp.ge.s32.totalorder %v1190, 1
        %vm1227 = vcmp.ge.s32.totalorder %v1191, 1
        %vm1228 = vcmp.ge.s32.totalorder %v1192, 1
        %vm1229 = vcmp.ge.s32.totalorder %v1193, 1
        %vm1230 = vcmp.ge.s32.totalorder %v1194, 1
        %vm1231 = vcmp.ge.s32.totalorder %v1195, 1
        %vm1232 = vcmp.ge.s32.totalorder %v1196, 1
        %vm1233 = vcmp.ge.s32.totalorder %v1197, 1
        %vm1234 = vcmp.ge.s32.totalorder %v1198, 1
        %vm1235 = vcmp.ge.s32.totalorder %v1199, 1
        %vm1236 = vcmp.ge.s32.totalorder %v1200, 1
        %vm1237 = vcmp.ge.s32.totalorder %v1201, 1
        %vm1238 = vcmp.ge.s32.totalorder %v1202, 1
        %vm1239 = vcmp.ge.s32.totalorder %v1203, 1
        %vm1240 = vcmp.ge.s32.totalorder %v1204, 1
        %vm1241 = vcmp.ge.s32.totalorder %v1205, 1
        %vm1242 = vcmp.ge.s32.totalorder %v1206, 1
        %vm1243 = vcmp.ge.s32.totalorder %v1207, 1
        %vm1244 = vcmp.ge.s32.totalorder %v1208, 1
        %vm1245 = vcmp.ge.s32.totalorder %v1209, 1
        %vm1246 = vcmp.ge.s32.totalorder %v1210, 1
        %vm1247 = vcmp.ge.s32.totalorder %v1211, 1
        %vm1248 = vcmp.ge.s32.totalorder %v1212, 1
        %vm1249 = vcmp.ge.s32.totalorder %v1213, 1
        %vm1250 = vcmp.ge.s32.totalorder %v1214, 1
        %vm1251 = vcmp.ge.s32.totalorder %v1215, 1
        %vm1252 = vcmp.ge.s32.totalorder %v1216, 1
        %vm1253 = vcmp.le.s32.totalorder %v1181, 16
        %vm1254 = vcmp.le.s32.totalorder %v1182, 16
        %vm1255 = vcmp.le.s32.totalorder %v1183, 16
        %vm1256 = vcmp.le.s32.totalorder %v1184, 16
        %vm1257 = vcmp.le.s32.totalorder %v1185, 16
        %vm1258 = vcmp.le.s32.totalorder %v1186, 16
        %vm1259 = vcmp.le.s32.totalorder %v1187, 16
        %vm1260 = vcmp.le.s32.totalorder %v1188, 16
        %vm1261 = vcmp.le.s32.totalorder %v1189, 16
        %vm1262 = vcmp.le.s32.totalorder %v1190, 16
        %vm1263 = vcmp.le.s32.totalorder %v1191, 16
        %vm1264 = vcmp.le.s32.totalorder %v1192, 16
        %vm1265 = vcmp.le.s32.totalorder %v1193, 16
        %vm1266 = vcmp.le.s32.totalorder %v1194, 16
        %vm1267 = vcmp.le.s32.totalorder %v1195, 16
        %vm1268 = vcmp.le.s32.totalorder %v1196, 16
        %vm1269 = vcmp.le.s32.totalorder %v1197, 16
        %vm1270 = vcmp.le.s32.totalorder %v1198, 16
        %vm1271 = vcmp.le.s32.totalorder %v1199, 16
        %vm1272 = vcmp.le.s32.totalorder %v1200, 16
        %vm1273 = vcmp.le.s32.totalorder %v1201, 16
        %vm1274 = vcmp.le.s32.totalorder %v1202, 16
        %vm1275 = vcmp.le.s32.totalorder %v1203, 16
        %vm1276 = vcmp.le.s32.totalorder %v1204, 16
        %vm1277 = vcmp.le.s32.totalorder %v1205, 16
        %vm1278 = vcmp.le.s32.totalorder %v1206, 16
        %vm1279 = vcmp.le.s32.totalorder %v1207, 16
        %vm1280 = vcmp.le.s32.totalorder %v1208, 16
        %vm1281 = vcmp.le.s32.totalorder %v1209, 16
        %vm1282 = vcmp.le.s32.totalorder %v1210, 16
        %vm1283 = vcmp.le.s32.totalorder %v1211, 16
        %vm1284 = vcmp.le.s32.totalorder %v1212, 16
        %vm1285 = vcmp.le.s32.totalorder %v1213, 16
        %vm1286 = vcmp.le.s32.totalorder %v1214, 16
        %vm1287 = vcmp.le.s32.totalorder %v1215, 16
        %vm1288 = vcmp.le.s32.totalorder %v1216, 16
        %vm1289 = vmand %vm1217, %vm1253
        %vm1290 = vmand %vm1218, %vm1254
        %vm1291 = vmand %vm1219, %vm1255
        %vm1292 = vmand %vm1220, %vm1256
        %vm1293 = vmand %vm1221, %vm1257
        %vm1294 = vmand %vm1222, %vm1258
        %vm1295 = vmand %vm1223, %vm1259
        %vm1296 = vmand %vm1224, %vm1260
        %vm1297 = vmand %vm1225, %vm1261
        %vm1298 = vmand %vm1226, %vm1262
        %vm1299 = vmand %vm1227, %vm1263
        %vm1300 = vmand %vm1228, %vm1264
        %vm1301 = vmand %vm1229, %vm1265
        %vm1302 = vmand %vm1230, %vm1266
        %vm1303 = vmand %vm1231, %vm1267
        %vm1304 = vmand %vm1232, %vm1268
        %vm1305 = vmand %vm1233, %vm1269
        %vm1306 = vmand %vm1234, %vm1270
        %vm1307 = vmand %vm1235, %vm1271
        %vm1308 = vmand %vm1236, %vm1272
        %vm1309 = vmand %vm1237, %vm1273
        %vm1310 = vmand %vm1238, %vm1274
        %vm1311 = vmand %vm1239, %vm1275
        %vm1312 = vmand %vm1240, %vm1276
        %vm1313 = vmand %vm1241, %vm1277
        %vm1314 = vmand %vm1242, %vm1278
        %vm1315 = vmand %vm1243, %vm1279
        %vm1316 = vmand %vm1244, %vm1280
        %vm1317 = vmand %vm1245, %vm1281
        %vm1318 = vmand %vm1246, %vm1282
        %vm1319 = vmand %vm1247, %vm1283
        %vm1320 = vmand %vm1248, %vm1284
        %vm1321 = vmand %vm1249, %vm1285
        %vm1322 = vmand %vm1250, %vm1286
        %vm1323 = vmand %vm1251, %vm1287
        %vm1324 = vmand %vm1252, %vm1288
        %v1325 = vld [vmem:[#allocation2] sm:$0xff]
        %v1326 = vld [vmem:[#allocation2 + $0x8] sm:$0xff]
        %v1327 = vld [vmem:[#allocation2 + $0x10] sm:$0xff]
        %v1328 = vld [vmem:[#allocation2 + $0x18] sm:$0xff]
        %v1329 = vld [vmem:[#allocation2 + $0x20] sm:$0xff]
        %v1330 = vld [vmem:[#allocation2 + $0x28] sm:$0xff]
        %v1331 = vld [vmem:[#allocation2 + $0x30] sm:$0xff]
        %v1332 = vld [vmem:[#allocation2 + $0x38] sm:$0xff]
        %v1333 = vld [vmem:[#allocation2 + $0x40] sm:$0xff]
        %v1334 = vld [vmem:[#allocation2 + $0x48] sm:$0xff]
        %v1335 = vld [vmem:[#allocation2 + $0x50] sm:$0xff]
        %v1336 = vld [vmem:[#allocation2 + $0x58] sm:$0xff]
        %v1337 = vld [vmem:[#allocation2 + $0x60] sm:$0xff]
        %v1338 = vld [vmem:[#allocation2 + $0x68] sm:$0xff]
        %v1339 = vld [vmem:[#allocation2 + $0x70] sm:$0xff]
        %v1340 = vld [vmem:[#allocation2 + $0x78] sm:$0xff]
        %v1341 = vld [vmem:[#allocation2 + $0x80] sm:$0xff]
        %v1342 = vld [vmem:[#allocation2 + $0x88] sm:$0xff]
        %v1343 = vld [vmem:[#allocation2 + $0x90] sm:$0xff]
        %v1344 = vld [vmem:[#allocation2 + $0x98] sm:$0xff]
        %v1345 = vld [vmem:[#allocation2 + $0xa0] sm:$0xff]
        %v1346 = vld [vmem:[#allocation2 + $0xa8] sm:$0xff]
        %v1347 = vld [vmem:[#allocation2 + $0xb0] sm:$0xff]
        %v1348 = vld [vmem:[#allocation2 + $0xb8] sm:$0xff]
        %v1349 = vld [vmem:[#allocation2 + $0xc0] sm:$0xff]
        %v1350 = vld [vmem:[#allocation2 + $0xc8] sm:$0xff]
        %v1351 = vld [vmem:[#allocation2 + $0xd0] sm:$0xff]
        %v1352 = vld [vmem:[#allocation2 + $0xd8] sm:$0xff]
        %v1353 = vld [vmem:[#allocation2 + $0xe0] sm:$0xff]
        %v1354 = vld [vmem:[#allocation2 + $0xe8] sm:$0xff]
        %v1355 = vld [vmem:[#allocation2 + $0xf0] sm:$0xff]
        %v1356 = vld [vmem:[#allocation2 + $0xf8] sm:$0xff]
        %v1357 = vld [vmem:[#allocation2 + $0x100] sm:$0xff]
        %v1358 = vld [vmem:[#allocation2 + $0x108] sm:$0xff]
        %v1359 = vld [vmem:[#allocation2 + $0x110] sm:$0xff]
        %v1360 = vld [vmem:[#allocation2 + $0x118] sm:$0x3f]
        %v1361 = vld [vmem:[#allocation2 + $0x1] sm:$0xff]
        %v1362 = vld [vmem:[#allocation2 + $0x9] sm:$0xff]
        %v1363 = vld [vmem:[#allocation2 + $0x11] sm:$0xff]
        %v1364 = vld [vmem:[#allocation2 + $0x19] sm:$0xff]
        %v1365 = vld [vmem:[#allocation2 + $0x21] sm:$0xff]
        %v1366 = vld [vmem:[#allocation2 + $0x29] sm:$0xff]
        %v1367 = vld [vmem:[#allocation2 + $0x31] sm:$0xff]
        %v1368 = vld [vmem:[#allocation2 + $0x39] sm:$0xff]
        %v1369 = vld [vmem:[#allocation2 + $0x41] sm:$0xff]
        %v1370 = vld [vmem:[#allocation2 + $0x49] sm:$0xff]
        %v1371 = vld [vmem:[#allocation2 + $0x51] sm:$0xff]
        %v1372 = vld [vmem:[#allocation2 + $0x59] sm:$0xff]
        %v1373 = vld [vmem:[#allocation2 + $0x61] sm:$0xff]
        %v1374 = vld [vmem:[#allocation2 + $0x69] sm:$0xff]
        %v1375 = vld [vmem:[#allocation2 + $0x71] sm:$0xff]
        %v1376 = vld [vmem:[#allocation2 + $0x79] sm:$0xff]
        %v1377 = vld [vmem:[#allocation2 + $0x81] sm:$0xff]
        %v1378 = vld [vmem:[#allocation2 + $0x89] sm:$0xff]
        %v1379 = vld [vmem:[#allocation2 + $0x91] sm:$0xff]
        %v1380 = vld [vmem:[#allocation2 + $0x99] sm:$0xff]
        %v1381 = vld [vmem:[#allocation2 + $0xa1] sm:$0xff]
        %v1382 = vld [vmem:[#allocation2 + $0xa9] sm:$0xff]
        %v1383 = vld [vmem:[#allocation2 + $0xb1] sm:$0xff]
        %v1384 = vld [vmem:[#allocation2 + $0xb9] sm:$0xff]
        %v1385 = vld [vmem:[#allocation2 + $0xc1] sm:$0xff]
        %v1386 = vld [vmem:[#allocation2 + $0xc9] sm:$0xff]
        %v1387 = vld [vmem:[#allocation2 + $0xd1] sm:$0xff]
        %v1388 = vld [vmem:[#allocation2 + $0xd9] sm:$0xff]
        %v1389 = vld [vmem:[#allocation2 + $0xe1] sm:$0xff]
        %v1390 = vld [vmem:[#allocation2 + $0xe9] sm:$0xff]
        %v1391 = vld [vmem:[#allocation2 + $0xf1] sm:$0xff]
        %v1392 = vld [vmem:[#allocation2 + $0xf9] sm:$0xff]
        %v1393 = vld [vmem:[#allocation2 + $0x101] sm:$0xff]
        %v1394 = vld [vmem:[#allocation2 + $0x109] sm:$0xff]
        %v1395 = vld [vmem:[#allocation2 + $0x111] sm:$0xff]
        %v1396 = vld [vmem:[#allocation2 + $0x119] sm:$0x3f]
        %v1397 = vld [vmem:[#allocation2 + $0x2] sm:$0xff]
        %v1398 = vld [vmem:[#allocation2 + $0xa] sm:$0xff]
        %v1399 = vld [vmem:[#allocation2 + $0x12] sm:$0xff]
        %v1400 = vld [vmem:[#allocation2 + $0x1a] sm:$0xff]
        %v1401 = vld [vmem:[#allocation2 + $0x22] sm:$0xff]
        %v1402 = vld [vmem:[#allocation2 + $0x2a] sm:$0xff]
        %v1403 = vld [vmem:[#allocation2 + $0x32] sm:$0xff]
        %v1404 = vld [vmem:[#allocation2 + $0x3a] sm:$0xff]
        %v1405 = vld [vmem:[#allocation2 + $0x42] sm:$0xff]
        %v1406 = vld [vmem:[#allocation2 + $0x4a] sm:$0xff]
        %v1407 = vld [vmem:[#allocation2 + $0x52] sm:$0xff]
        %v1408 = vld [vmem:[#allocation2 + $0x5a] sm:$0xff]
        %v1409 = vld [vmem:[#allocation2 + $0x62] sm:$0xff]
        %v1410 = vld [vmem:[#allocation2 + $0x6a] sm:$0xff]
        %v1411 = vld [vmem:[#allocation2 + $0x72] sm:$0xff]
        %v1412 = vld [vmem:[#allocation2 + $0x7a] sm:$0xff]
        %v1413 = vld [vmem:[#allocation2 + $0x82] sm:$0xff]
        %v1414 = vld [vmem:[#allocation2 + $0x8a] sm:$0xff]
        %v1415 = vld [vmem:[#allocation2 + $0x92] sm:$0xff]
        %v1416 = vld [vmem:[#allocation2 + $0x9a] sm:$0xff]
        %v1417 = vld [vmem:[#allocation2 + $0xa2] sm:$0xff]
        %v1418 = vld [vmem:[#allocation2 + $0xaa] sm:$0xff]
        %v1419 = vld [vmem:[#allocation2 + $0xb2] sm:$0xff]
        %v1420 = vld [vmem:[#allocation2 + $0xba] sm:$0xff]
        %v1421 = vld [vmem:[#allocation2 + $0xc2] sm:$0xff]
        %v1422 = vld [vmem:[#allocation2 + $0xca] sm:$0xff]
        %v1423 = vld [vmem:[#allocation2 + $0xd2] sm:$0xff]
        %v1424 = vld [vmem:[#allocation2 + $0xda] sm:$0xff]
        %v1425 = vld [vmem:[#allocation2 + $0xe2] sm:$0xff]
        %v1426 = vld [vmem:[#allocation2 + $0xea] sm:$0xff]
        %v1427 = vld [vmem:[#allocation2 + $0xf2] sm:$0xff]
        %v1428 = vld [vmem:[#allocation2 + $0xfa] sm:$0xff]
        %v1429 = vld [vmem:[#allocation2 + $0x102] sm:$0xff]
        %v1430 = vld [vmem:[#allocation2 + $0x10a] sm:$0xff]
        %v1431 = vld [vmem:[#allocation2 + $0x112] sm:$0xff]
        %v1432 = vld [vmem:[#allocation2 + $0x11a] sm:$0x3f]
        %v1433 = vld [vmem:[#allocation2 + $0x11a] sm:$0xff]
        %v1434 = vld [vmem:[#allocation2 + $0x122] sm:$0xff]
        %v1435 = vld [vmem:[#allocation2 + $0x12a] sm:$0x3f]
        %v1436 = vld [vmem:[#allocation2 + $0x13] sm:$0xff]
        %v1437 = vld [vmem:[#allocation2 + $0x1b] sm:$0xff]
        %v1438 = vld [vmem:[#allocation2 + $0x23] sm:$0xff]
        %v1439 = vld [vmem:[#allocation2 + $0x2b] sm:$0xff]
        %v1440 = vld [vmem:[#allocation2 + $0x33] sm:$0xff]
        %v1441 = vld [vmem:[#allocation2 + $0x3b] sm:$0xff]
        %v1442 = vld [vmem:[#allocation2 + $0x43] sm:$0xff]
        %v1443 = vld [vmem:[#allocation2 + $0x4b] sm:$0xff]
        %v1444 = vld [vmem:[#allocation2 + $0x53] sm:$0xff]
        %v1445 = vld [vmem:[#allocation2 + $0x5b] sm:$0xff]
        %v1446 = vld [vmem:[#allocation2 + $0x63] sm:$0xff]
        %v1447 = vld [vmem:[#allocation2 + $0x6b] sm:$0xff]
        %v1448 = vld [vmem:[#allocation2 + $0x73] sm:$0xff]
        %v1449 = vld [vmem:[#allocation2 + $0x7b] sm:$0xff]
        %v1450 = vld [vmem:[#allocation2 + $0x83] sm:$0xff]
        %v1451 = vld [vmem:[#allocation2 + $0x8b] sm:$0xff]
        %v1452 = vld [vmem:[#allocation2 + $0x93] sm:$0xff]
        %v1453 = vld [vmem:[#allocation2 + $0x9b] sm:$0xff]
        %v1454 = vld [vmem:[#allocation2 + $0xa3] sm:$0xff]
        %v1455 = vld [vmem:[#allocation2 + $0xab] sm:$0xff]
        %v1456 = vld [vmem:[#allocation2 + $0xb3] sm:$0xff]
        %v1457 = vld [vmem:[#allocation2 + $0xbb] sm:$0xff]
        %v1458 = vld [vmem:[#allocation2 + $0xc3] sm:$0xff]
        %v1459 = vld [vmem:[#allocation2 + $0xcb] sm:$0xff]
        %v1460 = vld [vmem:[#allocation2 + $0xd3] sm:$0xff]
        %v1461 = vld [vmem:[#allocation2 + $0xdb] sm:$0xff]
        %v1462 = vld [vmem:[#allocation2 + $0xe3] sm:$0xff]
        %v1463 = vld [vmem:[#allocation2 + $0xeb] sm:$0xff]
        %v1464 = vld [vmem:[#allocation2 + $0xf3] sm:$0xff]
        %v1465 = vld [vmem:[#allocation2 + $0xfb] sm:$0xff]
        %v1466 = vld [vmem:[#allocation2 + $0x103] sm:$0xff]
        %v1467 = vld [vmem:[#allocation2 + $0x10b] sm:$0xff]
        %v1468 = vld [vmem:[#allocation2 + $0x113] sm:$0xff]
        %v1469 = vld [vmem:[#allocation2 + $0x11b] sm:$0xff]
        %v1470 = vld [vmem:[#allocation2 + $0x123] sm:$0xff]
        %v1471 = vld [vmem:[#allocation2 + $0x12b] sm:$0x3f]
        %v1472 = vld [vmem:[#allocation2 + $0x14] sm:$0xff]
        %v1473 = vld [vmem:[#allocation2 + $0x1c] sm:$0xff]
        %v1474 = vld [vmem:[#allocation2 + $0x24] sm:$0xff]
        %v1475 = vld [vmem:[#allocation2 + $0x2c] sm:$0xff]
        %v1476 = vld [vmem:[#allocation2 + $0x34] sm:$0xff]
        %v1477 = vld [vmem:[#allocation2 + $0x3c] sm:$0xff]
        %v1478 = vld [vmem:[#allocation2 + $0x44] sm:$0xff]
        %v1479 = vld [vmem:[#allocation2 + $0x4c] sm:$0xff]
        %v1480 = vld [vmem:[#allocation2 + $0x54] sm:$0xff]
        %v1481 = vld [vmem:[#allocation2 + $0x5c] sm:$0xff]
        %v1482 = vld [vmem:[#allocation2 + $0x64] sm:$0xff]
        %v1483 = vld [vmem:[#allocation2 + $0x6c] sm:$0xff]
        %v1484 = vld [vmem:[#allocation2 + $0x74] sm:$0xff]
        %v1485 = vld [vmem:[#allocation2 + $0x7c] sm:$0xff]
        %v1486 = vld [vmem:[#allocation2 + $0x84] sm:$0xff]
        %v1487 = vld [vmem:[#allocation2 + $0x8c] sm:$0xff]
        %v1488 = vld [vmem:[#allocation2 + $0x94] sm:$0xff]
        %v1489 = vld [vmem:[#allocation2 + $0x9c] sm:$0xff]
        %v1490 = vld [vmem:[#allocation2 + $0xa4] sm:$0xff]
        %v1491 = vld [vmem:[#allocation2 + $0xac] sm:$0xff]
        %v1492 = vld [vmem:[#allocation2 + $0xb4] sm:$0xff]
        %v1493 = vld [vmem:[#allocation2 + $0xbc] sm:$0xff]
        %v1494 = vld [vmem:[#allocation2 + $0xc4] sm:$0xff]
        %v1495 = vld [vmem:[#allocation2 + $0xcc] sm:$0xff]
        %v1496 = vld [vmem:[#allocation2 + $0xd4] sm:$0xff]
        %v1497 = vld [vmem:[#allocation2 + $0xdc] sm:$0xff]
        %v1498 = vld [vmem:[#allocation2 + $0xe4] sm:$0xff]
        %v1499 = vld [vmem:[#allocation2 + $0xec] sm:$0xff]
        %v1500 = vld [vmem:[#allocation2 + $0xf4] sm:$0xff]
        %v1501 = vld [vmem:[#allocation2 + $0xfc] sm:$0xff]
        %v1502 = vld [vmem:[#allocation2 + $0x104] sm:$0xff]
        %v1503 = vld [vmem:[#allocation2 + $0x10c] sm:$0xff]
        %v1504 = vld [vmem:[#allocation2 + $0x114] sm:$0xff]
        %v1505 = vld [vmem:[#allocation2 + $0x11c] sm:$0xff]
        %v1506 = vld [vmem:[#allocation2 + $0x124] sm:$0xff]
        %v1507 = vld [vmem:[#allocation2 + $0x12c] sm:$0x3f]
        %v1508 = vld [vmem:[#allocation2 + $0x12c] sm:$0xff]
        %v1509 = vld [vmem:[#allocation2 + $0x134] sm:$0xff]
        %v1510 = vld [vmem:[#allocation2 + $0x13c] sm:$0x3f]
        %v1511 = vld [vmem:[#allocation2 + $0x25] sm:$0xff]
        %v1512 = vld [vmem:[#allocation2 + $0x2d] sm:$0xff]
        %v1513 = vld [vmem:[#allocation2 + $0x35] sm:$0xff]
        %v1514 = vld [vmem:[#allocation2 + $0x3d] sm:$0xff]
        %v1515 = vld [vmem:[#allocation2 + $0x45] sm:$0xff]
        %v1516 = vld [vmem:[#allocation2 + $0x4d] sm:$0xff]
        %v1517 = vld [vmem:[#allocation2 + $0x55] sm:$0xff]
        %v1518 = vld [vmem:[#allocation2 + $0x5d] sm:$0xff]
        %v1519 = vld [vmem:[#allocation2 + $0x65] sm:$0xff]
        %v1520 = vld [vmem:[#allocation2 + $0x6d] sm:$0xff]
        %v1521 = vld [vmem:[#allocation2 + $0x75] sm:$0xff]
        %v1522 = vld [vmem:[#allocation2 + $0x7d] sm:$0xff]
        %v1523 = vld [vmem:[#allocation2 + $0x85] sm:$0xff]
        %v1524 = vld [vmem:[#allocation2 + $0x8d] sm:$0xff]
        %v1525 = vld [vmem:[#allocation2 + $0x95] sm:$0xff]
        %v1526 = vld [vmem:[#allocation2 + $0x9d] sm:$0xff]
        %v1527 = vld [vmem:[#allocation2 + $0xa5] sm:$0xff]
        %v1528 = vld [vmem:[#allocation2 + $0xad] sm:$0xff]
        %v1529 = vld [vmem:[#allocation2 + $0xb5] sm:$0xff]
        %v1530 = vld [vmem:[#allocation2 + $0xbd] sm:$0xff]
        %v1531 = vld [vmem:[#allocation2 + $0xc5] sm:$0xff]
        %v1532 = vld [vmem:[#allocation2 + $0xcd] sm:$0xff]
        %v1533 = vld [vmem:[#allocation2 + $0xd5] sm:$0xff]
        %v1534 = vld [vmem:[#allocation2 + $0xdd] sm:$0xff]
        %v1535 = vld [vmem:[#allocation2 + $0xe5] sm:$0xff]
        %v1536 = vld [vmem:[#allocation2 + $0xed] sm:$0xff]
        %v1537 = vld [vmem:[#allocation2 + $0xf5] sm:$0xff]
        %v1538 = vld [vmem:[#allocation2 + $0xfd] sm:$0xff]
        %v1539 = vld [vmem:[#allocation2 + $0x105] sm:$0xff]
        %v1540 = vld [vmem:[#allocation2 + $0x10d] sm:$0xff]
        %v1541 = vld [vmem:[#allocation2 + $0x115] sm:$0xff]
        %v1542 = vld [vmem:[#allocation2 + $0x11d] sm:$0xff]
        %v1543 = vld [vmem:[#allocation2 + $0x125] sm:$0xff]
        %v1544 = vld [vmem:[#allocation2 + $0x12d] sm:$0xff]
        %v1545 = vld [vmem:[#allocation2 + $0x135] sm:$0xff]
        %v1546 = vld [vmem:[#allocation2 + $0x13d] sm:$0x3f]
        %v1547 = vld [vmem:[#allocation2 + $0x26] sm:$0xff]
        %v1548 = vld [vmem:[#allocation2 + $0x2e] sm:$0xff]
        %v1549 = vld [vmem:[#allocation2 + $0x36] sm:$0xff]
        %v1550 = vld [vmem:[#allocation2 + $0x3e] sm:$0xff]
        %v1551 = vld [vmem:[#allocation2 + $0x46] sm:$0xff]
        %v1552 = vld [vmem:[#allocation2 + $0x4e] sm:$0xff]
        %v1553 = vld [vmem:[#allocation2 + $0x56] sm:$0xff]
        %v1554 = vld [vmem:[#allocation2 + $0x5e] sm:$0xff]
        %v1555 = vld [vmem:[#allocation2 + $0x66] sm:$0xff]
        %v1556 = vld [vmem:[#allocation2 + $0x6e] sm:$0xff]
        %v1557 = vld [vmem:[#allocation2 + $0x76] sm:$0xff]
        %v1558 = vld [vmem:[#allocation2 + $0x7e] sm:$0xff]
        %v1559 = vld [vmem:[#allocation2 + $0x86] sm:$0xff]
        %v1560 = vld [vmem:[#allocation2 + $0x8e] sm:$0xff]
        %v1561 = vld [vmem:[#allocation2 + $0x96] sm:$0xff]
        %v1562 = vld [vmem:[#allocation2 + $0x9e] sm:$0xff]
        %v1563 = vld [vmem:[#allocation2 + $0xa6] sm:$0xff]
        %v1564 = vld [vmem:[#allocation2 + $0xae] sm:$0xff]
        %v1565 = vld [vmem:[#allocation2 + $0xb6] sm:$0xff]
        %v1566 = vld [vmem:[#allocation2 + $0xbe] sm:$0xff]
        %v1567 = vld [vmem:[#allocation2 + $0xc6] sm:$0xff]
        %v1568 = vld [vmem:[#allocation2 + $0xce] sm:$0xff]
        %v1569 = vld [vmem:[#allocation2 + $0xd6] sm:$0xff]
        %v1570 = vld [vmem:[#allocation2 + $0xde] sm:$0xff]
        %v1571 = vld [vmem:[#allocation2 + $0xe6] sm:$0xff]
        %v1572 = vld [vmem:[#allocation2 + $0xee] sm:$0xff]
        %v1573 = vld [vmem:[#allocation2 + $0xf6] sm:$0xff]
        %v1574 = vld [vmem:[#allocation2 + $0xfe] sm:$0xff]
        %v1575 = vld [vmem:[#allocation2 + $0x106] sm:$0xff]
        %v1576 = vld [vmem:[#allocation2 + $0x10e] sm:$0xff]
        %v1577 = vld [vmem:[#allocation2 + $0x116] sm:$0xff]
        %v1578 = vld [vmem:[#allocation2 + $0x11e] sm:$0xff]
        %v1579 = vld [vmem:[#allocation2 + $0x126] sm:$0xff]
        %v1580 = vld [vmem:[#allocation2 + $0x12e] sm:$0xff]
        %v1581 = vld [vmem:[#allocation2 + $0x136] sm:$0xff]
        %v1582 = vld [vmem:[#allocation2 + $0x13e] sm:$0x3f]
        %1619 = vrot.lane.b32.xlu0 %v1361, 4
        %v1620 = vpop.permute.xlu0 %1619
        %1621 = vrot.lane.b32.xlu0 %v1362, 4
        %v1622 = vpop.permute.xlu0 %1621
        %1623 = vrot.lane.b32.xlu0 %v1363, 4
        %v1624 = vpop.permute.xlu0 %1623
        %1625 = vrot.lane.b32.xlu0 %v1364, 4
        %v1626 = vpop.permute.xlu0 %1625
        %1627 = vrot.lane.b32.xlu0 %v1365, 4
        %v1628 = vpop.permute.xlu0 %1627
        %1629 = vrot.lane.b32.xlu0 %v1366, 4
        %v1630 = vpop.permute.xlu0 %1629
        %1631 = vrot.lane.b32.xlu0 %v1367, 4
        %v1632 = vpop.permute.xlu0 %1631
        %1633 = vrot.lane.b32.xlu0 %v1368, 4
        %v1634 = vpop.permute.xlu0 %1633
        %1635 = vrot.lane.b32.xlu0 %v1369, 4
        %v1636 = vpop.permute.xlu0 %1635
        %1637 = vrot.lane.b32.xlu0 %v1370, 4
        %v1638 = vpop.permute.xlu0 %1637
        %1639 = vrot.lane.b32.xlu0 %v1371, 4
        %v1640 = vpop.permute.xlu0 %1639
        %1641 = vrot.lane.b32.xlu0 %v1372, 4
        %v1642 = vpop.permute.xlu0 %1641
        %1643 = vrot.lane.b32.xlu0 %v1373, 4
        %v1644 = vpop.permute.xlu0 %1643
        %1645 = vrot.lane.b32.xlu0 %v1374, 4
        %v1646 = vpop.permute.xlu0 %1645
        %1647 = vrot.lane.b32.xlu0 %v1375, 4
        %v1648 = vpop.permute.xlu0 %1647
        %1649 = vrot.lane.b32.xlu0 %v1376, 4
        %v1650 = vpop.permute.xlu0 %1649
        %1651 = vrot.lane.b32.xlu0 %v1377, 4
        %v1652 = vpop.permute.xlu0 %1651
        %1653 = vrot.lane.b32.xlu0 %v1378, 4
        %v1654 = vpop.permute.xlu0 %1653
        %1655 = vrot.lane.b32.xlu0 %v1379, 4
        %v1656 = vpop.permute.xlu0 %1655
        %1657 = vrot.lane.b32.xlu0 %v1380, 4
        %v1658 = vpop.permute.xlu0 %1657
        %1659 = vrot.lane.b32.xlu0 %v1381, 4
        %v1660 = vpop.permute.xlu0 %1659
        %1661 = vrot.lane.b32.xlu0 %v1382, 4
        %v1662 = vpop.permute.xlu0 %1661
        %1663 = vrot.lane.b32.xlu0 %v1383, 4
        %v1664 = vpop.permute.xlu0 %1663
        %1665 = vrot.lane.b32.xlu0 %v1384, 4
        %v1666 = vpop.permute.xlu0 %1665
        %1667 = vrot.lane.b32.xlu0 %v1385, 4
        %v1668 = vpop.permute.xlu0 %1667
        %1669 = vrot.lane.b32.xlu0 %v1386, 4
        %v1670 = vpop.permute.xlu0 %1669
        %1671 = vrot.lane.b32.xlu0 %v1387, 4
        %v1672 = vpop.permute.xlu0 %1671
        %1673 = vrot.lane.b32.xlu0 %v1388, 4
        %v1674 = vpop.permute.xlu0 %1673
        %1675 = vrot.lane.b32.xlu0 %v1389, 4
        %v1676 = vpop.permute.xlu0 %1675
        %1677 = vrot.lane.b32.xlu0 %v1390, 4
        %v1678 = vpop.permute.xlu0 %1677
        %1679 = vrot.lane.b32.xlu0 %v1391, 4
        %v1680 = vpop.permute.xlu0 %1679
        %1681 = vrot.lane.b32.xlu0 %v1392, 4
        %v1682 = vpop.permute.xlu0 %1681
        %1683 = vrot.lane.b32.xlu0 %v1393, 4
        %v1684 = vpop.permute.xlu0 %1683
        %1685 = vrot.lane.b32.xlu0 %v1394, 4
        %v1686 = vpop.permute.xlu0 %1685
        %1687 = vrot.lane.b32.xlu0 %v1395, 4
        %v1688 = vpop.permute.xlu0 %1687
        %1689 = vrot.lane.b32.xlu0 %v1396, 4
        %v1690 = vpop.permute.xlu0 %1689
        %1763 = vrot.lane.b32.xlu0 %v1397, 8
        %v1764 = vpop.permute.xlu0 %1763
        %1765 = vrot.lane.b32.xlu0 %v1398, 8
        %v1766 = vpop.permute.xlu0 %1765
        %1767 = vrot.lane.b32.xlu0 %v1399, 8
        %v1768 = vpop.permute.xlu0 %1767
        %1769 = vrot.lane.b32.xlu0 %v1400, 8
        %v1770 = vpop.permute.xlu0 %1769
        %1771 = vrot.lane.b32.xlu0 %v1401, 8
        %v1772 = vpop.permute.xlu0 %1771
        %1773 = vrot.lane.b32.xlu0 %v1402, 8
        %v1774 = vpop.permute.xlu0 %1773
        %1775 = vrot.lane.b32.xlu0 %v1403, 8
        %v1776 = vpop.permute.xlu0 %1775
        %1777 = vrot.lane.b32.xlu0 %v1404, 8
        %v1778 = vpop.permute.xlu0 %1777
        %1779 = vrot.lane.b32.xlu0 %v1405, 8
        %v1780 = vpop.permute.xlu0 %1779
        %1781 = vrot.lane.b32.xlu0 %v1406, 8
        %v1782 = vpop.permute.xlu0 %1781
        %1783 = vrot.lane.b32.xlu0 %v1407, 8
        %v1784 = vpop.permute.xlu0 %1783
        %1785 = vrot.lane.b32.xlu0 %v1408, 8
        %v1786 = vpop.permute.xlu0 %1785
        %1787 = vrot.lane.b32.xlu0 %v1409, 8
        %v1788 = vpop.permute.xlu0 %1787
        %1789 = vrot.lane.b32.xlu0 %v1410, 8
        %v1790 = vpop.permute.xlu0 %1789
        %1791 = vrot.lane.b32.xlu0 %v1411, 8
        %v1792 = vpop.permute.xlu0 %1791
        %1793 = vrot.lane.b32.xlu0 %v1412, 8
        %v1794 = vpop.permute.xlu0 %1793
        %1795 = vrot.lane.b32.xlu0 %v1413, 8
        %v1796 = vpop.permute.xlu0 %1795
        %1797 = vrot.lane.b32.xlu0 %v1414, 8
        %v1798 = vpop.permute.xlu0 %1797
        %1799 = vrot.lane.b32.xlu0 %v1415, 8
        %v1800 = vpop.permute.xlu0 %1799
        %1801 = vrot.lane.b32.xlu0 %v1416, 8
        %v1802 = vpop.permute.xlu0 %1801
        %1803 = vrot.lane.b32.xlu0 %v1417, 8
        %v1804 = vpop.permute.xlu0 %1803
        %1805 = vrot.lane.b32.xlu0 %v1418, 8
        %v1806 = vpop.permute.xlu0 %1805
        %1807 = vrot.lane.b32.xlu0 %v1419, 8
        %v1808 = vpop.permute.xlu0 %1807
        %1809 = vrot.lane.b32.xlu0 %v1420, 8
        %v1810 = vpop.permute.xlu0 %1809
        %1811 = vrot.lane.b32.xlu0 %v1421, 8
        %v1812 = vpop.permute.xlu0 %1811
        %1813 = vrot.lane.b32.xlu0 %v1422, 8
        %v1814 = vpop.permute.xlu0 %1813
        %1815 = vrot.lane.b32.xlu0 %v1423, 8
        %v1816 = vpop.permute.xlu0 %1815
        %1817 = vrot.lane.b32.xlu0 %v1424, 8
        %v1818 = vpop.permute.xlu0 %1817
        %1819 = vrot.lane.b32.xlu0 %v1425, 8
        %v1820 = vpop.permute.xlu0 %1819
        %1821 = vrot.lane.b32.xlu0 %v1426, 8
        %v1822 = vpop.permute.xlu0 %1821
        %1823 = vrot.lane.b32.xlu0 %v1427, 8
        %v1824 = vpop.permute.xlu0 %1823
        %1825 = vrot.lane.b32.xlu0 %v1428, 8
        %v1826 = vpop.permute.xlu0 %1825
        %1827 = vrot.lane.b32.xlu0 %v1429, 8
        %v1828 = vpop.permute.xlu0 %1827
        %1829 = vrot.lane.b32.xlu0 %v1430, 8
        %v1830 = vpop.permute.xlu0 %1829
        %1831 = vrot.lane.b32.xlu0 %v1431, 8
        %v1832 = vpop.permute.xlu0 %1831
        %1833 = vrot.lane.b32.xlu0 %v1432, 8
        %v1834 = vpop.permute.xlu0 %1833
        %1874 = vrot.lane.b32.xlu0 %v1399, 12
        %v1875 = vpop.permute.xlu0 %1874
        %1876 = vrot.lane.b32.xlu0 %v1400, 12
        %v1877 = vpop.permute.xlu0 %1876
        %1878 = vrot.lane.b32.xlu0 %v1401, 12
        %v1879 = vpop.permute.xlu0 %1878
        %1880 = vrot.lane.b32.xlu0 %v1402, 12
        %v1881 = vpop.permute.xlu0 %1880
        %1882 = vrot.lane.b32.xlu0 %v1403, 12
        %v1883 = vpop.permute.xlu0 %1882
        %1884 = vrot.lane.b32.xlu0 %v1404, 12
        %v1885 = vpop.permute.xlu0 %1884
        %1886 = vrot.lane.b32.xlu0 %v1405, 12
        %v1887 = vpop.permute.xlu0 %1886
        %1888 = vrot.lane.b32.xlu0 %v1406, 12
        %v1889 = vpop.permute.xlu0 %1888
        %1890 = vrot.lane.b32.xlu0 %v1407, 12
        %v1891 = vpop.permute.xlu0 %1890
        %1892 = vrot.lane.b32.xlu0 %v1408, 12
        %v1893 = vpop.permute.xlu0 %1892
        %1894 = vrot.lane.b32.xlu0 %v1409, 12
        %v1895 = vpop.permute.xlu0 %1894
        %1896 = vrot.lane.b32.xlu0 %v1410, 12
        %v1897 = vpop.permute.xlu0 %1896
        %1898 = vrot.lane.b32.xlu0 %v1411, 12
        %v1899 = vpop.permute.xlu0 %1898
        %1900 = vrot.lane.b32.xlu0 %v1412, 12
        %v1901 = vpop.permute.xlu0 %1900
        %1902 = vrot.lane.b32.xlu0 %v1413, 12
        %v1903 = vpop.permute.xlu0 %1902
        %1904 = vrot.lane.b32.xlu0 %v1414, 12
        %v1905 = vpop.permute.xlu0 %1904
        %1906 = vrot.lane.b32.xlu0 %v1415, 12
        %v1907 = vpop.permute.xlu0 %1906
        %1908 = vrot.lane.b32.xlu0 %v1416, 12
        %v1909 = vpop.permute.xlu0 %1908
        %1910 = vrot.lane.b32.xlu0 %v1417, 12
        %v1911 = vpop.permute.xlu0 %1910
        %1912 = vrot.lane.b32.xlu0 %v1418, 12
        %v1913 = vpop.permute.xlu0 %1912
        %1914 = vrot.lane.b32.xlu0 %v1419, 12
        %v1915 = vpop.permute.xlu0 %1914
        %1916 = vrot.lane.b32.xlu0 %v1420, 12
        %v1917 = vpop.permute.xlu0 %1916
        %1918 = vrot.lane.b32.xlu0 %v1421, 12
        %v1919 = vpop.permute.xlu0 %1918
        %1920 = vrot.lane.b32.xlu0 %v1422, 12
        %v1921 = vpop.permute.xlu0 %1920
        %1922 = vrot.lane.b32.xlu0 %v1423, 12
        %v1923 = vpop.permute.xlu0 %1922
        %1924 = vrot.lane.b32.xlu0 %v1424, 12
        %v1925 = vpop.permute.xlu0 %1924
        %1926 = vrot.lane.b32.xlu0 %v1425, 12
        %v1927 = vpop.permute.xlu0 %1926
        %1928 = vrot.lane.b32.xlu0 %v1426, 12
        %v1929 = vpop.permute.xlu0 %1928
        %1930 = vrot.lane.b32.xlu0 %v1427, 12
        %v1931 = vpop.permute.xlu0 %1930
        %1932 = vrot.lane.b32.xlu0 %v1428, 12
        %v1933 = vpop.permute.xlu0 %1932
        %1934 = vrot.lane.b32.xlu0 %v1429, 12
        %v1935 = vpop.permute.xlu0 %1934
        %1936 = vrot.lane.b32.xlu0 %v1430, 12
        %v1937 = vpop.permute.xlu0 %1936
        %1938 = vrot.lane.b32.xlu0 %v1431, 12
        %v1939 = vpop.permute.xlu0 %1938
        %1940 = vrot.lane.b32.xlu0 %v1433, 12
        %v1941 = vpop.permute.xlu0 %1940
        %1942 = vrot.lane.b32.xlu0 %v1434, 12
        %v1943 = vpop.permute.xlu0 %1942
        %1944 = vrot.lane.b32.xlu0 %v1435, 12
        %v1945 = vpop.permute.xlu0 %1944
        %2018 = vrot.lane.b32.xlu0 %v1436, 16
        %v2019 = vpop.permute.xlu0 %2018
        %2020 = vrot.lane.b32.xlu0 %v1437, 16
        %v2021 = vpop.permute.xlu0 %2020
        %2022 = vrot.lane.b32.xlu0 %v1438, 16
        %v2023 = vpop.permute.xlu0 %2022
        %2024 = vrot.lane.b32.xlu0 %v1439, 16
        %v2025 = vpop.permute.xlu0 %2024
        %2026 = vrot.lane.b32.xlu0 %v1440, 16
        %v2027 = vpop.permute.xlu0 %2026
        %2028 = vrot.lane.b32.xlu0 %v1441, 16
        %v2029 = vpop.permute.xlu0 %2028
        %2030 = vrot.lane.b32.xlu0 %v1442, 16
        %v2031 = vpop.permute.xlu0 %2030
        %2032 = vrot.lane.b32.xlu0 %v1443, 16
        %v2033 = vpop.permute.xlu0 %2032
        %2034 = vrot.lane.b32.xlu0 %v1444, 16
        %v2035 = vpop.permute.xlu0 %2034
        %2036 = vrot.lane.b32.xlu0 %v1445, 16
        %v2037 = vpop.permute.xlu0 %2036
        %2038 = vrot.lane.b32.xlu0 %v1446, 16
        %v2039 = vpop.permute.xlu0 %2038
        %2040 = vrot.lane.b32.xlu0 %v1447, 16
        %v2041 = vpop.permute.xlu0 %2040
        %2042 = vrot.lane.b32.xlu0 %v1448, 16
        %v2043 = vpop.permute.xlu0 %2042
        %2044 = vrot.lane.b32.xlu0 %v1449, 16
        %v2045 = vpop.permute.xlu0 %2044
        %2046 = vrot.lane.b32.xlu0 %v1450, 16
        %v2047 = vpop.permute.xlu0 %2046
        %2048 = vrot.lane.b32.xlu0 %v1451, 16
        %v2049 = vpop.permute.xlu0 %2048
        %2050 = vrot.lane.b32.xlu0 %v1452, 16
        %v2051 = vpop.permute.xlu0 %2050
        %2052 = vrot.lane.b32.xlu0 %v1453, 16
        %v2053 = vpop.permute.xlu0 %2052
        %2054 = vrot.lane.b32.xlu0 %v1454, 16
        %v2055 = vpop.permute.xlu0 %2054
        %2056 = vrot.lane.b32.xlu0 %v1455, 16
        %v2057 = vpop.permute.xlu0 %2056
        %2058 = vrot.lane.b32.xlu0 %v1456, 16
        %v2059 = vpop.permute.xlu0 %2058
        %2060 = vrot.lane.b32.xlu0 %v1457, 16
        %v2061 = vpop.permute.xlu0 %2060
        %2062 = vrot.lane.b32.xlu0 %v1458, 16
        %v2063 = vpop.permute.xlu0 %2062
        %2064 = vrot.lane.b32.xlu0 %v1459, 16
        %v2065 = vpop.permute.xlu0 %2064
        %2066 = vrot.lane.b32.xlu0 %v1460, 16
        %v2067 = vpop.permute.xlu0 %2066
        %2068 = vrot.lane.b32.xlu0 %v1461, 16
        %v2069 = vpop.permute.xlu0 %2068
        %2070 = vrot.lane.b32.xlu0 %v1462, 16
        %v2071 = vpop.permute.xlu0 %2070
        %2072 = vrot.lane.b32.xlu0 %v1463, 16
        %v2073 = vpop.permute.xlu0 %2072
        %2074 = vrot.lane.b32.xlu0 %v1464, 16
        %v2075 = vpop.permute.xlu0 %2074
        %2076 = vrot.lane.b32.xlu0 %v1465, 16
        %v2077 = vpop.permute.xlu0 %2076
        %2078 = vrot.lane.b32.xlu0 %v1466, 16
        %v2079 = vpop.permute.xlu0 %2078
        %2080 = vrot.lane.b32.xlu0 %v1467, 16
        %v2081 = vpop.permute.xlu0 %2080
        %2082 = vrot.lane.b32.xlu0 %v1468, 16
        %v2083 = vpop.permute.xlu0 %2082
        %2084 = vrot.lane.b32.xlu0 %v1469, 16
        %v2085 = vpop.permute.xlu0 %2084
        %2086 = vrot.lane.b32.xlu0 %v1470, 16
        %v2087 = vpop.permute.xlu0 %2086
        %2088 = vrot.lane.b32.xlu0 %v1471, 16
        %v2089 = vpop.permute.xlu0 %2088
        %2162 = vrot.lane.b32.xlu0 %v1472, 20
        %v2163 = vpop.permute.xlu0 %2162
        %2164 = vrot.lane.b32.xlu0 %v1473, 20
        %v2165 = vpop.permute.xlu0 %2164
        %2166 = vrot.lane.b32.xlu0 %v1474, 20
        %v2167 = vpop.permute.xlu0 %2166
        %2168 = vrot.lane.b32.xlu0 %v1475, 20
        %v2169 = vpop.permute.xlu0 %2168
        %2170 = vrot.lane.b32.xlu0 %v1476, 20
        %v2171 = vpop.permute.xlu0 %2170
        %2172 = vrot.lane.b32.xlu0 %v1477, 20
        %v2173 = vpop.permute.xlu0 %2172
        %2174 = vrot.lane.b32.xlu0 %v1478, 20
        %v2175 = vpop.permute.xlu0 %2174
        %2176 = vrot.lane.b32.xlu0 %v1479, 20
        %v2177 = vpop.permute.xlu0 %2176
        %2178 = vrot.lane.b32.xlu0 %v1480, 20
        %v2179 = vpop.permute.xlu0 %2178
        %2180 = vrot.lane.b32.xlu0 %v1481, 20
        %v2181 = vpop.permute.xlu0 %2180
        %2182 = vrot.lane.b32.xlu0 %v1482, 20
        %v2183 = vpop.permute.xlu0 %2182
        %2184 = vrot.lane.b32.xlu0 %v1483, 20
        %v2185 = vpop.permute.xlu0 %2184
        %2186 = vrot.lane.b32.xlu0 %v1484, 20
        %v2187 = vpop.permute.xlu0 %2186
        %2188 = vrot.lane.b32.xlu0 %v1485, 20
        %v2189 = vpop.permute.xlu0 %2188
        %2190 = vrot.lane.b32.xlu0 %v1486, 20
        %v2191 = vpop.permute.xlu0 %2190
        %2192 = vrot.lane.b32.xlu0 %v1487, 20
        %v2193 = vpop.permute.xlu0 %2192
        %2194 = vrot.lane.b32.xlu0 %v1488, 20
        %v2195 = vpop.permute.xlu0 %2194
        %2196 = vrot.lane.b32.xlu0 %v1489, 20
        %v2197 = vpop.permute.xlu0 %2196
        %2198 = vrot.lane.b32.xlu0 %v1490, 20
        %v2199 = vpop.permute.xlu0 %2198
        %2200 = vrot.lane.b32.xlu0 %v1491, 20
        %v2201 = vpop.permute.xlu0 %2200
        %2202 = vrot.lane.b32.xlu0 %v1492, 20
        %v2203 = vpop.permute.xlu0 %2202
        %2204 = vrot.lane.b32.xlu0 %v1493, 20
        %v2205 = vpop.permute.xlu0 %2204
        %2206 = vrot.lane.b32.xlu0 %v1494, 20
        %v2207 = vpop.permute.xlu0 %2206
        %2208 = vrot.lane.b32.xlu0 %v1495, 20
        %v2209 = vpop.permute.xlu0 %2208
        %2210 = vrot.lane.b32.xlu0 %v1496, 20
        %v2211 = vpop.permute.xlu0 %2210
        %2212 = vrot.lane.b32.xlu0 %v1497, 20
        %v2213 = vpop.permute.xlu0 %2212
        %2214 = vrot.lane.b32.xlu0 %v1498, 20
        %v2215 = vpop.permute.xlu0 %2214
        %2216 = vrot.lane.b32.xlu0 %v1499, 20
        %v2217 = vpop.permute.xlu0 %2216
        %2218 = vrot.lane.b32.xlu0 %v1500, 20
        %v2219 = vpop.permute.xlu0 %2218
        %2220 = vrot.lane.b32.xlu0 %v1501, 20
        %v2221 = vpop.permute.xlu0 %2220
        %2222 = vrot.lane.b32.xlu0 %v1502, 20
        %v2223 = vpop.permute.xlu0 %2222
        %2224 = vrot.lane.b32.xlu0 %v1503, 20
        %v2225 = vpop.permute.xlu0 %2224
        %2226 = vrot.lane.b32.xlu0 %v1504, 20
        %v2227 = vpop.permute.xlu0 %2226
        %2228 = vrot.lane.b32.xlu0 %v1505, 20
        %v2229 = vpop.permute.xlu0 %2228
        %2230 = vrot.lane.b32.xlu0 %v1506, 20
        %v2231 = vpop.permute.xlu0 %2230
        %2232 = vrot.lane.b32.xlu0 %v1507, 20
        %v2233 = vpop.permute.xlu0 %2232
        %2273 = vrot.lane.b32.xlu0 %v1474, 24
        %v2274 = vpop.permute.xlu0 %2273
        %2275 = vrot.lane.b32.xlu0 %v1475, 24
        %v2276 = vpop.permute.xlu0 %2275
        %2277 = vrot.lane.b32.xlu0 %v1476, 24
        %v2278 = vpop.permute.xlu0 %2277
        %2279 = vrot.lane.b32.xlu0 %v1477, 24
        %v2280 = vpop.permute.xlu0 %2279
        %2281 = vrot.lane.b32.xlu0 %v1478, 24
        %v2282 = vpop.permute.xlu0 %2281
        %2283 = vrot.lane.b32.xlu0 %v1479, 24
        %v2284 = vpop.permute.xlu0 %2283
        %2285 = vrot.lane.b32.xlu0 %v1480, 24
        %v2286 = vpop.permute.xlu0 %2285
        %2287 = vrot.lane.b32.xlu0 %v1481, 24
        %v2288 = vpop.permute.xlu0 %2287
        %2289 = vrot.lane.b32.xlu0 %v1482, 24
        %v2290 = vpop.permute.xlu0 %2289
        %2291 = vrot.lane.b32.xlu0 %v1483, 24
        %v2292 = vpop.permute.xlu0 %2291
        %2293 = vrot.lane.b32.xlu0 %v1484, 24
        %v2294 = vpop.permute.xlu0 %2293
        %2295 = vrot.lane.b32.xlu0 %v1485, 24
        %v2296 = vpop.permute.xlu0 %2295
        %2297 = vrot.lane.b32.xlu0 %v1486, 24
        %v2298 = vpop.permute.xlu0 %2297
        %2299 = vrot.lane.b32.xlu0 %v1487, 24
        %v2300 = vpop.permute.xlu0 %2299
        %2301 = vrot.lane.b32.xlu0 %v1488, 24
        %v2302 = vpop.permute.xlu0 %2301
        %2303 = vrot.lane.b32.xlu0 %v1489, 24
        %v2304 = vpop.permute.xlu0 %2303
        %2305 = vrot.lane.b32.xlu0 %v1490, 24
        %v2306 = vpop.permute.xlu0 %2305
        %2307 = vrot.lane.b32.xlu0 %v1491, 24
        %v2308 = vpop.permute.xlu0 %2307
        %2309 = vrot.lane.b32.xlu0 %v1492, 24
        %v2310 = vpop.permute.xlu0 %2309
        %2311 = vrot.lane.b32.xlu0 %v1493, 24
        %v2312 = vpop.permute.xlu0 %2311
        %2313 = vrot.lane.b32.xlu0 %v1494, 24
        %v2314 = vpop.permute.xlu0 %2313
        %2315 = vrot.lane.b32.xlu0 %v1495, 24
        %v2316 = vpop.permute.xlu0 %2315
        %2317 = vrot.lane.b32.xlu0 %v1496, 24
        %v2318 = vpop.permute.xlu0 %2317
        %2319 = vrot.lane.b32.xlu0 %v1497, 24
        %v2320 = vpop.permute.xlu0 %2319
        %2321 = vrot.lane.b32.xlu0 %v1498, 24
        %v2322 = vpop.permute.xlu0 %2321
        %2323 = vrot.lane.b32.xlu0 %v1499, 24
        %v2324 = vpop.permute.xlu0 %2323
        %2325 = vrot.lane.b32.xlu0 %v1500, 24
        %v2326 = vpop.permute.xlu0 %2325
        %2327 = vrot.lane.b32.xlu0 %v1501, 24
        %v2328 = vpop.permute.xlu0 %2327
        %2329 = vrot.lane.b32.xlu0 %v1502, 24
        %v2330 = vpop.permute.xlu0 %2329
        %2331 = vrot.lane.b32.xlu0 %v1503, 24
        %v2332 = vpop.permute.xlu0 %2331
        %2333 = vrot.lane.b32.xlu0 %v1504, 24
        %v2334 = vpop.permute.xlu0 %2333
        %2335 = vrot.lane.b32.xlu0 %v1505, 24
        %v2336 = vpop.permute.xlu0 %2335
        %2337 = vrot.lane.b32.xlu0 %v1506, 24
        %v2338 = vpop.permute.xlu0 %2337
        %2339 = vrot.lane.b32.xlu0 %v1508, 24
        %v2340 = vpop.permute.xlu0 %2339
        %2341 = vrot.lane.b32.xlu0 %v1509, 24
        %v2342 = vpop.permute.xlu0 %2341
        %2343 = vrot.lane.b32.xlu0 %v1510, 24
        %v2344 = vpop.permute.xlu0 %2343
        %2417 = vrot.lane.b32.xlu0 %v1511, 28
        %v2418 = vpop.permute.xlu0 %2417
        %2419 = vrot.lane.b32.xlu0 %v1512, 28
        %v2420 = vpop.permute.xlu0 %2419
        %2421 = vrot.lane.b32.xlu0 %v1513, 28
        %v2422 = vpop.permute.xlu0 %2421
        %2423 = vrot.lane.b32.xlu0 %v1514, 28
        %v2424 = vpop.permute.xlu0 %2423
        %2425 = vrot.lane.b32.xlu0 %v1515, 28
        %v2426 = vpop.permute.xlu0 %2425
        %2427 = vrot.lane.b32.xlu0 %v1516, 28
        %v2428 = vpop.permute.xlu0 %2427
        %2429 = vrot.lane.b32.xlu0 %v1517, 28
        %v2430 = vpop.permute.xlu0 %2429
        %2431 = vrot.lane.b32.xlu0 %v1518, 28
        %v2432 = vpop.permute.xlu0 %2431
        %2433 = vrot.lane.b32.xlu0 %v1519, 28
        %v2434 = vpop.permute.xlu0 %2433
        %2435 = vrot.lane.b32.xlu0 %v1520, 28
        %v2436 = vpop.permute.xlu0 %2435
        %2437 = vrot.lane.b32.xlu0 %v1521, 28
        %v2438 = vpop.permute.xlu0 %2437
        %2439 = vrot.lane.b32.xlu0 %v1522, 28
        %v2440 = vpop.permute.xlu0 %2439
        %2441 = vrot.lane.b32.xlu0 %v1523, 28
        %v2442 = vpop.permute.xlu0 %2441
        %2443 = vrot.lane.b32.xlu0 %v1524, 28
        %v2444 = vpop.permute.xlu0 %2443
        %2445 = vrot.lane.b32.xlu0 %v1525, 28
        %v2446 = vpop.permute.xlu0 %2445
        %2447 = vrot.lane.b32.xlu0 %v1526, 28
        %v2448 = vpop.permute.xlu0 %2447
        %2449 = vrot.lane.b32.xlu0 %v1527, 28
        %v2450 = vpop.permute.xlu0 %2449
        %2451 = vrot.lane.b32.xlu0 %v1528, 28
        %v2452 = vpop.permute.xlu0 %2451
        %2453 = vrot.lane.b32.xlu0 %v1529, 28
        %v2454 = vpop.permute.xlu0 %2453
        %2455 = vrot.lane.b32.xlu0 %v1530, 28
        %v2456 = vpop.permute.xlu0 %2455
        %2457 = vrot.lane.b32.xlu0 %v1531, 28
        %v2458 = vpop.permute.xlu0 %2457
        %2459 = vrot.lane.b32.xlu0 %v1532, 28
        %v2460 = vpop.permute.xlu0 %2459
        %2461 = vrot.lane.b32.xlu0 %v1533, 28
        %v2462 = vpop.permute.xlu0 %2461
        %2463 = vrot.lane.b32.xlu0 %v1534, 28
        %v2464 = vpop.permute.xlu0 %2463
        %2465 = vrot.lane.b32.xlu0 %v1535, 28
        %v2466 = vpop.permute.xlu0 %2465
        %2467 = vrot.lane.b32.xlu0 %v1536, 28
        %v2468 = vpop.permute.xlu0 %2467
        %2469 = vrot.lane.b32.xlu0 %v1537, 28
        %v2470 = vpop.permute.xlu0 %2469
        %2471 = vrot.lane.b32.xlu0 %v1538, 28
        %v2472 = vpop.permute.xlu0 %2471
        %2473 = vrot.lane.b32.xlu0 %v1539, 28
        %v2474 = vpop.permute.xlu0 %2473
        %2475 = vrot.lane.b32.xlu0 %v1540, 28
        %v2476 = vpop.permute.xlu0 %2475
        %2477 = vrot.lane.b32.xlu0 %v1541, 28
        %v2478 = vpop.permute.xlu0 %2477
        %2479 = vrot.lane.b32.xlu0 %v1542, 28
        %v2480 = vpop.permute.xlu0 %2479
        %2481 = vrot.lane.b32.xlu0 %v1543, 28
        %v2482 = vpop.permute.xlu0 %2481
        %2483 = vrot.lane.b32.xlu0 %v1544, 28
        %v2484 = vpop.permute.xlu0 %2483
        %2485 = vrot.lane.b32.xlu0 %v1545, 28
        %v2486 = vpop.permute.xlu0 %2485
        %2487 = vrot.lane.b32.xlu0 %v1546, 28
        %v2488 = vpop.permute.xlu0 %2487
        %2561 = vrot.lane.b32.xlu0 %v1547, 32
        %v2562 = vpop.permute.xlu0 %2561
        %2563 = vrot.lane.b32.xlu0 %v1548, 32
        %v2564 = vpop.permute.xlu0 %2563
        %2565 = vrot.lane.b32.xlu0 %v1549, 32
        %v2566 = vpop.permute.xlu0 %2565
        %2567 = vrot.lane.b32.xlu0 %v1550, 32
        %v2568 = vpop.permute.xlu0 %2567
        %2569 = vrot.lane.b32.xlu0 %v1551, 32
        %v2570 = vpop.permute.xlu0 %2569
        %2571 = vrot.lane.b32.xlu0 %v1552, 32
        %v2572 = vpop.permute.xlu0 %2571
        %2573 = vrot.lane.b32.xlu0 %v1553, 32
        %v2574 = vpop.permute.xlu0 %2573
        %2575 = vrot.lane.b32.xlu0 %v1554, 32
        %v2576 = vpop.permute.xlu0 %2575
        %2577 = vrot.lane.b32.xlu0 %v1555, 32
        %v2578 = vpop.permute.xlu0 %2577
        %2579 = vrot.lane.b32.xlu0 %v1556, 32
        %v2580 = vpop.permute.xlu0 %2579
        %2581 = vrot.lane.b32.xlu0 %v1557, 32
        %v2582 = vpop.permute.xlu0 %2581
        %2583 = vrot.lane.b32.xlu0 %v1558, 32
        %v2584 = vpop.permute.xlu0 %2583
        %2585 = vrot.lane.b32.xlu0 %v1559, 32
        %v2586 = vpop.permute.xlu0 %2585
        %2587 = vrot.lane.b32.xlu0 %v1560, 32
        %v2588 = vpop.permute.xlu0 %2587
        %2589 = vrot.lane.b32.xlu0 %v1561, 32
        %v2590 = vpop.permute.xlu0 %2589
        %2591 = vrot.lane.b32.xlu0 %v1562, 32
        %v2592 = vpop.permute.xlu0 %2591
        %2593 = vrot.lane.b32.xlu0 %v1563, 32
        %v2594 = vpop.permute.xlu0 %2593
        %2595 = vrot.lane.b32.xlu0 %v1564, 32
        %v2596 = vpop.permute.xlu0 %2595
        %2597 = vrot.lane.b32.xlu0 %v1565, 32
        %v2598 = vpop.permute.xlu0 %2597
        %2599 = vrot.lane.b32.xlu0 %v1566, 32
        %v2600 = vpop.permute.xlu0 %2599
        %2601 = vrot.lane.b32.xlu0 %v1567, 32
        %v2602 = vpop.permute.xlu0 %2601
        %2603 = vrot.lane.b32.xlu0 %v1568, 32
        %v2604 = vpop.permute.xlu0 %2603
        %2605 = vrot.lane.b32.xlu0 %v1569, 32
        %v2606 = vpop.permute.xlu0 %2605
        %2607 = vrot.lane.b32.xlu0 %v1570, 32
        %v2608 = vpop.permute.xlu0 %2607
        %2609 = vrot.lane.b32.xlu0 %v1571, 32
        %v2610 = vpop.permute.xlu0 %2609
        %2611 = vrot.lane.b32.xlu0 %v1572, 32
        %v2612 = vpop.permute.xlu0 %2611
        %2613 = vrot.lane.b32.xlu0 %v1573, 32
        %v2614 = vpop.permute.xlu0 %2613
        %2615 = vrot.lane.b32.xlu0 %v1574, 32
        %v2616 = vpop.permute.xlu0 %2615
        %2617 = vrot.lane.b32.xlu0 %v1575, 32
        %v2618 = vpop.permute.xlu0 %2617
        %2619 = vrot.lane.b32.xlu0 %v1576, 32
        %v2620 = vpop.permute.xlu0 %2619
        %2621 = vrot.lane.b32.xlu0 %v1577, 32
        %v2622 = vpop.permute.xlu0 %2621
        %2623 = vrot.lane.b32.xlu0 %v1578, 32
        %v2624 = vpop.permute.xlu0 %2623
        %2625 = vrot.lane.b32.xlu0 %v1579, 32
        %v2626 = vpop.permute.xlu0 %2625
        %2627 = vrot.lane.b32.xlu0 %v1580, 32
        %v2628 = vpop.permute.xlu0 %2627
        %2629 = vrot.lane.b32.xlu0 %v1581, 32
        %v2630 = vpop.permute.xlu0 %2629
        %2631 = vrot.lane.b32.xlu0 %v1582, 32
        %v2632 = vpop.permute.xlu0 %2631
        %v2669 = vsel %vm525, %v1325, %v1620
        %v2670 = vsel %vm525, %v1326, %v1622
        %v2671 = vsel %vm525, %v1327, %v1624
        %v2672 = vsel %vm525, %v1328, %v1626
        %v2673 = vsel %vm525, %v1329, %v1628
        %v2674 = vsel %vm525, %v1330, %v1630
        %v2675 = vsel %vm525, %v1331, %v1632
        %v2676 = vsel %vm525, %v1332, %v1634
        %v2677 = vsel %vm525, %v1333, %v1636
        %v2678 = vsel %vm525, %v1334, %v1638
        %v2679 = vsel %vm525, %v1335, %v1640
        %v2680 = vsel %vm525, %v1336, %v1642
        %v2681 = vsel %vm525, %v1337, %v1644
        %v2682 = vsel %vm525, %v1338, %v1646
        %v2683 = vsel %vm525, %v1339, %v1648
        %v2684 = vsel %vm525, %v1340, %v1650
        %v2685 = vsel %vm525, %v1341, %v1652
        %v2686 = vsel %vm525, %v1342, %v1654
        %v2687 = vsel %vm525, %v1343, %v1656
        %v2688 = vsel %vm525, %v1344, %v1658
        %v2689 = vsel %vm525, %v1345, %v1660
        %v2690 = vsel %vm525, %v1346, %v1662
        %v2691 = vsel %vm525, %v1347, %v1664
        %v2692 = vsel %vm525, %v1348, %v1666
        %v2693 = vsel %vm525, %v1349, %v1668
        %v2694 = vsel %vm525, %v1350, %v1670
        %v2695 = vsel %vm525, %v1351, %v1672
        %v2696 = vsel %vm525, %v1352, %v1674
        %v2697 = vsel %vm525, %v1353, %v1676
        %v2698 = vsel %vm525, %v1354, %v1678
        %v2699 = vsel %vm525, %v1355, %v1680
        %v2700 = vsel %vm525, %v1356, %v1682
        %v2701 = vsel %vm525, %v1357, %v1684
        %v2702 = vsel %vm525, %v1358, %v1686
        %v2703 = vsel %vm525, %v1359, %v1688
        %v2704 = vsel %vm525, %v1360, %v1690
        %vm2705 = vcmask 64512
        %v2706 = vsel %vm2705, %v2669, %v1764
        %v2707 = vsel %vm2705, %v2670, %v1766
        %v2708 = vsel %vm2705, %v2671, %v1768
        %v2709 = vsel %vm2705, %v2672, %v1770
        %v2710 = vsel %vm2705, %v2673, %v1772
        %v2711 = vsel %vm2705, %v2674, %v1774
        %v2712 = vsel %vm2705, %v2675, %v1776
        %v2713 = vsel %vm2705, %v2676, %v1778
        %v2714 = vsel %vm2705, %v2677, %v1780
        %v2715 = vsel %vm2705, %v2678, %v1782
        %v2716 = vsel %vm2705, %v2679, %v1784
        %v2717 = vsel %vm2705, %v2680, %v1786
        %v2718 = vsel %vm2705, %v2681, %v1788
        %v2719 = vsel %vm2705, %v2682, %v1790
        %v2720 = vsel %vm2705, %v2683, %v1792
        %v2721 = vsel %vm2705, %v2684, %v1794
        %v2722 = vsel %vm2705, %v2685, %v1796
        %v2723 = vsel %vm2705, %v2686, %v1798
        %v2724 = vsel %vm2705, %v2687, %v1800
        %v2725 = vsel %vm2705, %v2688, %v1802
        %v2726 = vsel %vm2705, %v2689, %v1804
        %v2727 = vsel %vm2705, %v2690, %v1806
        %v2728 = vsel %vm2705, %v2691, %v1808
        %v2729 = vsel %vm2705, %v2692, %v1810
        %v2730 = vsel %vm2705, %v2693, %v1812
        %v2731 = vsel %vm2705, %v2694, %v1814
        %v2732 = vsel %vm2705, %v2695, %v1816
        %v2733 = vsel %vm2705, %v2696, %v1818
        %v2734 = vsel %vm2705, %v2697, %v1820
        %v2735 = vsel %vm2705, %v2698, %v1822
        %v2736 = vsel %vm2705, %v2699, %v1824
        %v2737 = vsel %vm2705, %v2700, %v1826
        %v2738 = vsel %vm2705, %v2701, %v1828
        %v2739 = vsel %vm2705, %v2702, %v1830
        %v2740 = vsel %vm2705, %v2703, %v1832
        %v2741 = vsel %vm2705, %v2704, %v1834
        %vm2742 = vcmask 97280
        %v2743 = vsel %vm2742, %v2706, %v1875
        %v2744 = vsel %vm2742, %v2707, %v1877
        %v2745 = vsel %vm2742, %v2708, %v1879
        %v2746 = vsel %vm2742, %v2709, %v1881
        %v2747 = vsel %vm2742, %v2710, %v1883
        %v2748 = vsel %vm2742, %v2711, %v1885
        %v2749 = vsel %vm2742, %v2712, %v1887
        %v2750 = vsel %vm2742, %v2713, %v1889
        %v2751 = vsel %vm2742, %v2714, %v1891
        %v2752 = vsel %vm2742, %v2715, %v1893
        %v2753 = vsel %vm2742, %v2716, %v1895
        %v2754 = vsel %vm2742, %v2717, %v1897
        %v2755 = vsel %vm2742, %v2718, %v1899
        %v2756 = vsel %vm2742, %v2719, %v1901
        %v2757 = vsel %vm2742, %v2720, %v1903
        %v2758 = vsel %vm2742, %v2721, %v1905
        %v2759 = vsel %vm2742, %v2722, %v1907
        %v2760 = vsel %vm2742, %v2723, %v1909
        %v2761 = vsel %vm2742, %v2724, %v1911
        %v2762 = vsel %vm2742, %v2725, %v1913
        %v2763 = vsel %vm2742, %v2726, %v1915
        %v2764 = vsel %vm2742, %v2727, %v1917
        %v2765 = vsel %vm2742, %v2728, %v1919
        %v2766 = vsel %vm2742, %v2729, %v1921
        %v2767 = vsel %vm2742, %v2730, %v1923
        %v2768 = vsel %vm2742, %v2731, %v1925
        %v2769 = vsel %vm2742, %v2732, %v1927
        %v2770 = vsel %vm2742, %v2733, %v1929
        %v2771 = vsel %vm2742, %v2734, %v1931
        %v2772 = vsel %vm2742, %v2735, %v1933
        %v2773 = vsel %vm2742, %v2736, %v1935
        %v2774 = vsel %vm2742, %v2737, %v1937
        %v2775 = vsel %vm2742, %v2738, %v1939
        %v2776 = vsel %vm2742, %v2739, %v1941
        %v2777 = vsel %vm2742, %v2740, %v1943
        %v2778 = vsel %vm2742, %v2741, %v1945
        %vm2779 = vcmask 130048
        %v2780 = vsel %vm2779, %v2743, %v2019
        %v2781 = vsel %vm2779, %v2744, %v2021
        %v2782 = vsel %vm2779, %v2745, %v2023
        %v2783 = vsel %vm2779, %v2746, %v2025
        %v2784 = vsel %vm2779, %v2747, %v2027
        %v2785 = vsel %vm2779, %v2748, %v2029
        %v2786 = vsel %vm2779, %v2749, %v2031
        %v2787 = vsel %vm2779, %v2750, %v2033
        %v2788 = vsel %vm2779, %v2751, %v2035
        %v2789 = vsel %vm2779, %v2752, %v2037
        %v2790 = vsel %vm2779, %v2753, %v2039
        %v2791 = vsel %vm2779, %v2754, %v2041
        %v2792 = vsel %vm2779, %v2755, %v2043
        %v2793 = vsel %vm2779, %v2756, %v2045
        %v2794 = vsel %vm2779, %v2757, %v2047
        %v2795 = vsel %vm2779, %v2758, %v2049
        %v2796 = vsel %vm2779, %v2759, %v2051
        %v2797 = vsel %vm2779, %v2760, %v2053
        %v2798 = vsel %vm2779, %v2761, %v2055
        %v2799 = vsel %vm2779, %v2762, %v2057
        %v2800 = vsel %vm2779, %v2763, %v2059
        %v2801 = vsel %vm2779, %v2764, %v2061
        %v2802 = vsel %vm2779, %v2765, %v2063
        %v2803 = vsel %vm2779, %v2766, %v2065
        %v2804 = vsel %vm2779, %v2767, %v2067
        %v2805 = vsel %vm2779, %v2768, %v2069
        %v2806 = vsel %vm2779, %v2769, %v2071
        %v2807 = vsel %vm2779, %v2770, %v2073
        %v2808 = vsel %vm2779, %v2771, %v2075
        %v2809 = vsel %vm2779, %v2772, %v2077
        %v2810 = vsel %vm2779, %v2773, %v2079
        %v2811 = vsel %vm2779, %v2774, %v2081
        %v2812 = vsel %vm2779, %v2775, %v2083
        %v2813 = vsel %vm2779, %v2776, %v2085
        %v2814 = vsel %vm2779, %v2777, %v2087
        %v2815 = vsel %vm2779, %v2778, %v2089
        %vm2816 = vcmask 162816
        %v2817 = vsel %vm2816, %v2780, %v2163
        %v2818 = vsel %vm2816, %v2781, %v2165
        %v2819 = vsel %vm2816, %v2782, %v2167
        %v2820 = vsel %vm2816, %v2783, %v2169
        %v2821 = vsel %vm2816, %v2784, %v2171
        %v2822 = vsel %vm2816, %v2785, %v2173
        %v2823 = vsel %vm2816, %v2786, %v2175
        %v2824 = vsel %vm2816, %v2787, %v2177
        %v2825 = vsel %vm2816, %v2788, %v2179
        %v2826 = vsel %vm2816, %v2789, %v2181
        %v2827 = vsel %vm2816, %v2790, %v2183
        %v2828 = vsel %vm2816, %v2791, %v2185
        %v2829 = vsel %vm2816, %v2792, %v2187
        %v2830 = vsel %vm2816, %v2793, %v2189
        %v2831 = vsel %vm2816, %v2794, %v2191
        %v2832 = vsel %vm2816, %v2795, %v2193
        %v2833 = vsel %vm2816, %v2796, %v2195
        %v2834 = vsel %vm2816, %v2797, %v2197
        %v2835 = vsel %vm2816, %v2798, %v2199
        %v2836 = vsel %vm2816, %v2799, %v2201
        %v2837 = vsel %vm2816, %v2800, %v2203
        %v2838 = vsel %vm2816, %v2801, %v2205
        %v2839 = vsel %vm2816, %v2802, %v2207
        %v2840 = vsel %vm2816, %v2803, %v2209
        %v2841 = vsel %vm2816, %v2804, %v2211
        %v2842 = vsel %vm2816, %v2805, %v2213
        %v2843 = vsel %vm2816, %v2806, %v2215
        %v2844 = vsel %vm2816, %v2807, %v2217
        %v2845 = vsel %vm2816, %v2808, %v2219
        %v2846 = vsel %vm2816, %v2809, %v2221
        %v2847 = vsel %vm2816, %v2810, %v2223
        %v2848 = vsel %vm2816, %v2811, %v2225
        %v2849 = vsel %vm2816, %v2812, %v2227
        %v2850 = vsel %vm2816, %v2813, %v2229
        %v2851 = vsel %vm2816, %v2814, %v2231
        %v2852 = vsel %vm2816, %v2815, %v2233
        %vm2853 = vcmask 195584
        %v2854 = vsel %vm2853, %v2817, %v2274
        %v2855 = vsel %vm2853, %v2818, %v2276
        %v2856 = vsel %vm2853, %v2819, %v2278
        %v2857 = vsel %vm2853, %v2820, %v2280
        %v2858 = vsel %vm2853, %v2821, %v2282
        %v2859 = vsel %vm2853, %v2822, %v2284
        %v2860 = vsel %vm2853, %v2823, %v2286
        %v2861 = vsel %vm2853, %v2824, %v2288
        %v2862 = vsel %vm2853, %v2825, %v2290
        %v2863 = vsel %vm2853, %v2826, %v2292
        %v2864 = vsel %vm2853, %v2827, %v2294
        %v2865 = vsel %vm2853, %v2828, %v2296
        %v2866 = vsel %vm2853, %v2829, %v2298
        %v2867 = vsel %vm2853, %v2830, %v2300
        %v2868 = vsel %vm2853, %v2831, %v2302
        %v2869 = vsel %vm2853, %v2832, %v2304
        %v2870 = vsel %vm2853, %v2833, %v2306
        %v2871 = vsel %vm2853, %v2834, %v2308
        %v2872 = vsel %vm2853, %v2835, %v2310
        %v2873 = vsel %vm2853, %v2836, %v2312
        %v2874 = vsel %vm2853, %v2837, %v2314
        %v2875 = vsel %vm2853, %v2838, %v2316
        %v2876 = vsel %vm2853, %v2839, %v2318
        %v2877 = vsel %vm2853, %v2840, %v2320
        %v2878 = vsel %vm2853, %v2841, %v2322
        %v2879 = vsel %vm2853, %v2842, %v2324
        %v2880 = vsel %vm2853, %v2843, %v2326
        %v2881 = vsel %vm2853, %v2844, %v2328
        %v2882 = vsel %vm2853, %v2845, %v2330
        %v2883 = vsel %vm2853, %v2846, %v2332
        %v2884 = vsel %vm2853, %v2847, %v2334
        %v2885 = vsel %vm2853, %v2848, %v2336
        %v2886 = vsel %vm2853, %v2849, %v2338
        %v2887 = vsel %vm2853, %v2850, %v2340
        %v2888 = vsel %vm2853, %v2851, %v2342
        %v2889 = vsel %vm2853, %v2852, %v2344
        %vm2890 = vcmask 228352
        %v2891 = vsel %vm2890, %v2854, %v2418
        %v2892 = vsel %vm2890, %v2855, %v2420
        %v2893 = vsel %vm2890, %v2856, %v2422
        %v2894 = vsel %vm2890, %v2857, %v2424
        %v2895 = vsel %vm2890, %v2858, %v2426
        %v2896 = vsel %vm2890, %v2859, %v2428
        %v2897 = vsel %vm2890, %v2860, %v2430
        %v2898 = vsel %vm2890, %v2861, %v2432
        %v2899 = vsel %vm2890, %v2862, %v2434
        %v2900 = vsel %vm2890, %v2863, %v2436
        %v2901 = vsel %vm2890, %v2864, %v2438
        %v2902 = vsel %vm2890, %v2865, %v2440
        %v2903 = vsel %vm2890, %v2866, %v2442
        %v2904 = vsel %vm2890, %v2867, %v2444
        %v2905 = vsel %vm2890, %v2868, %v2446
        %v2906 = vsel %vm2890, %v2869, %v2448
        %v2907 = vsel %vm2890, %v2870, %v2450
        %v2908 = vsel %vm2890, %v2871, %v2452
        %v2909 = vsel %vm2890, %v2872, %v2454
        %v2910 = vsel %vm2890, %v2873, %v2456
        %v2911 = vsel %vm2890, %v2874, %v2458
        %v2912 = vsel %vm2890, %v2875, %v2460
        %v2913 = vsel %vm2890, %v2876, %v2462
        %v2914 = vsel %vm2890, %v2877, %v2464
        %v2915 = vsel %vm2890, %v2878, %v2466
        %v2916 = vsel %vm2890, %v2879, %v2468
        %v2917 = vsel %vm2890, %v2880, %v2470
        %v2918 = vsel %vm2890, %v2881, %v2472
        %v2919 = vsel %vm2890, %v2882, %v2474
        %v2920 = vsel %vm2890, %v2883, %v2476
        %v2921 = vsel %vm2890, %v2884, %v2478
        %v2922 = vsel %vm2890, %v2885, %v2480
        %v2923 = vsel %vm2890, %v2886, %v2482
        %v2924 = vsel %vm2890, %v2887, %v2484
        %v2925 = vsel %vm2890, %v2888, %v2486
        %v2926 = vsel %vm2890, %v2889, %v2488
        %vm2927 = vcmask 261120
        %v2928 = vsel %vm2927, %v2891, %v2562
        %v2929 = vsel %vm2927, %v2892, %v2564
        %v2930 = vsel %vm2927, %v2893, %v2566
        %v2931 = vsel %vm2927, %v2894, %v2568
        %v2932 = vsel %vm2927, %v2895, %v2570
        %v2933 = vsel %vm2927, %v2896, %v2572
        %v2934 = vsel %vm2927, %v2897, %v2574
        %v2935 = vsel %vm2927, %v2898, %v2576
        %v2936 = vsel %vm2927, %v2899, %v2578
        %v2937 = vsel %vm2927, %v2900, %v2580
        %v2938 = vsel %vm2927, %v2901, %v2582
        %v2939 = vsel %vm2927, %v2902, %v2584
        %v2940 = vsel %vm2927, %v2903, %v2586
        %v2941 = vsel %vm2927, %v2904, %v2588
        %v2942 = vsel %vm2927, %v2905, %v2590
        %v2943 = vsel %vm2927, %v2906, %v2592
        %v2944 = vsel %vm2927, %v2907, %v2594
        %v2945 = vsel %vm2927, %v2908, %v2596
        %v2946 = vsel %vm2927, %v2909, %v2598
        %v2947 = vsel %vm2927, %v2910, %v2600
        %v2948 = vsel %vm2927, %v2911, %v2602
        %v2949 = vsel %vm2927, %v2912, %v2604
        %v2950 = vsel %vm2927, %v2913, %v2606
        %v2951 = vsel %vm2927, %v2914, %v2608
        %v2952 = vsel %vm2927, %v2915, %v2610
        %v2953 = vsel %vm2927, %v2916, %v2612
        %v2954 = vsel %vm2927, %v2917, %v2614
        %v2955 = vsel %vm2927, %v2918, %v2616
        %v2956 = vsel %vm2927, %v2919, %v2618
        %v2957 = vsel %vm2927, %v2920, %v2620
        %v2958 = vsel %vm2927, %v2921, %v2622
        %v2959 = vsel %vm2927, %v2922, %v2624
        %v2960 = vsel %vm2927, %v2923, %v2626
        %v2961 = vsel %vm2927, %v2924, %v2628
        %v2962 = vsel %vm2927, %v2925, %v2630
        %v2963 = vsel %vm2927, %v2926, %v2632
        %v2964 = vpack.c.bf16 %v2929, %v2928
        %v2965 = vpack.c.bf16 %v2931, %v2930
        %v2966 = vpack.c.bf16 %v2933, %v2932
        %v2967 = vpack.c.bf16 %v2935, %v2934
        %v2968 = vpack.c.bf16 %v2937, %v2936
        %v2969 = vpack.c.bf16 %v2939, %v2938
        %v2970 = vpack.c.bf16 %v2941, %v2940
        %v2971 = vpack.c.bf16 %v2943, %v2942
        %v2972 = vpack.c.bf16 %v2945, %v2944
        %v2973 = vpack.c.bf16 %v2947, %v2946
        %v2974 = vpack.c.bf16 %v2949, %v2948
        %v2975 = vpack.c.bf16 %v2951, %v2950
        %v2976 = vpack.c.bf16 %v2953, %v2952
        %v2977 = vpack.c.bf16 %v2955, %v2954
        %v2978 = vpack.c.bf16 %v2957, %v2956
        %v2979 = vpack.c.bf16 %v2959, %v2958
        %v2980 = vpack.c.bf16 %v2961, %v2960
        %v2981 = vpack.c.bf16 %v2963, %v2962
        %v2982 = vld [vmem:[%s3] sm:$0xf]
        %v2983 = vld [vmem:[%s3 + $0x4] sm:$0xf]
        %v2984 = vld [vmem:[%s3 + $0x8] sm:$0xf]
        %v2985 = vld [vmem:[%s3 + $0xc] sm:$0xf]
        %v2986 = vld [vmem:[%s3 + $0x10] sm:$0x3]
        %v2987 = vld [vmem:[%s4] sm:$0x1]
        %v2989 = vlaneseq
        %v2990 = vshrl.u32 %v2989, 7
        %v2991 = vsub.s32 0, %v2990
        %v2992 = vrot.slane %v2987, %v2991
        %v2999 = vunpack.c.l.b16 %v2982
        %v3000 = vunpack.c.l.b16 %v2983
        %v3001 = vunpack.c.l.b16 %v2984
        %v3002 = vunpack.c.l.b16 %v2985
        %v3003 = vunpack.c.l.b16 %v2986
        %v3004 = vpack.c.b16 %v3000, %v2999
        %v3005 = vpack.c.b16 %v3002, %v3001
        %v3006 = vpack.c.b16 %v3003, %v3003
        %vm3009 = vcmask 293888
        %v3011 = vsel %vm3009, %v2964, 0
        %v3014 = vsel %vm3009, %v2965, 0
        %v3017 = vsel %vm3009, %v2966, 0
        %v3020 = vsel %vm3009, %v2967, 0
        %v3023 = vsel %vm3009, %v2968, 0
        %v3026 = vsel %vm3009, %v2969, 0
        %v3029 = vsel %vm3009, %v2970, 0
        %v3032 = vsel %vm3009, %v2971, 0
        %v3035 = vsel %vm3009, %v2972, 0
        %v3038 = vsel %vm3009, %v2973, 0
        %v3041 = vsel %vm3009, %v2974, 0
        %v3044 = vsel %vm3009, %v2975, 0
        %v3047 = vsel %vm3009, %v2976, 0
        %v3050 = vsel %vm3009, %v2977, 0
        %v3053 = vsel %vm3009, %v2978, 0
        %v3056 = vsel %vm3009, %v2979, 0
        %v3059 = vsel %vm3009, %v2980, 0
        %v3062 = vsel %vm3009, %v2981, 0
        %vm3064 = vcmask 1041408
        %v3066 = vsel %vm3064, %v3006, 0
        %3068 = vmatprep.subr.bf16.mxu0 0
        %3069 = vmatpush1.bf16.msra.mxu0 %v3004
        %3070 = vmatprep.subr.bf16.mxu0 0
        %3071 = vmatpush1.bf16.msra.mxu0 %v3005
        %3072 = vmatprep.subr.bf16.mxu0 0
        %3073 = vmatpush1.bf16.msra.mxu0 %v3066
        %3074 = vmatprep.subr.bf16.mxu0 0
        %3075 = vmatpush1.bf16.msra.mxu0 0
        %3076 = vmatprep.subr.bf16.mxu0 0
        %3077 = vmatpush1.bf16.msra.mxu0 0
        %3078 = vmatprep.subr.bf16.mxu0 0
        %3079 = vmatpush1.bf16.msra.mxu0 0
        %3080 = vmatprep.subr.bf16.mxu0 0
        %3081 = vmatpush1.bf16.msra.mxu0 0
        %3082 = vmatprep.subr.bf16.mxu0 0
        %3083 = vmatpush1.bf16.msra.mxu0 0
        %3084 = vmatprep.subr.bf16.mxu0 0
        %3085 = vmatpush1.bf16.msra.mxu0 0
        %3086 = vmatprep.subr.bf16.mxu0 0
        %3087 = vmatpush1.bf16.msra.mxu0 0
        %3088 = vmatprep.subr.bf16.mxu0 0
        %3089 = vmatpush1.bf16.msra.mxu0 0
        %3090 = vmatprep.subr.bf16.mxu0 0
        %3091 = vmatpush1.bf16.msra.mxu0 0
        %3092 = vmatprep.subr.bf16.mxu0 0
        %3093 = vmatpush1.bf16.msra.mxu0 0
        %3094 = vmatprep.subr.bf16.mxu0 0
        %3095 = vmatpush1.bf16.msra.mxu0 0
        %3096 = vmatprep.subr.bf16.mxu0 0
        %3097 = vmatpush1.bf16.msra.mxu0 0
        %3098 = vmatprep.subr.bf16.mxu0 0
        %3099 = vmatpush1.bf16.msra.mxu0 0
        %3100 = vmatprep.mubr.bf16.mxu0 0
        %3101 = vmatmul.mubr.bf16.gmra.mrb[0].mxu0 %v3011
        %v3102 = vpop.f32.mrb[0].mxu0
        %v3103 = vadd.f32 %v2992, %v3102
        %v3104 = vpop.f32.mrb[0].mxu0
        %v3105 = vpop.f32.mrb[0].mxu0
        %v3106 = vadd.f32 %v2992, %v3105
        %v3107 = vpop.f32.mrb[0].mxu0
        %3108 = vmatprep.mubr.bf16.mxu0 0
        %3109 = vmatmul.mubr.bf16.gmra.mrb[0].mxu0 %v3014
        %v3110 = vpop.f32.mrb[0].mxu0
        %v3111 = vadd.f32 %v2992, %v3110
        %v3112 = vpop.f32.mrb[0].mxu0
        %v3113 = vpop.f32.mrb[0].mxu0
        %v3114 = vadd.f32 %v2992, %v3113
        %v3115 = vpop.f32.mrb[0].mxu0
        %3116 = vmatprep.mubr.bf16.mxu0 0
        %3117 = vmatmul.mubr.bf16.gmra.mrb[0].mxu0 %v3017
        %v3118 = vpop.f32.mrb[0].mxu0
        %v3119 = vadd.f32 %v2992, %v3118
        %v3120 = vpop.f32.mrb[0].mxu0
        %v3121 = vpop.f32.mrb[0].mxu0
        %v3122 = vadd.f32 %v2992, %v3121
        %v3123 = vpop.f32.mrb[0].mxu0
        %3124 = vmatprep.mubr.bf16.mxu0 0
        %3125 = vmatmul.mubr.bf16.gmra.mrb[0].mxu0 %v3020
        %v3126 = vpop.f32.mrb[0].mxu0
        %v3127 = vadd.f32 %v2992, %v3126
        %v3128 = vpop.f32.mrb[0].mxu0
        %v3129 = vpop.f32.mrb[0].mxu0
        %v3130 = vadd.f32 %v2992, %v3129
        %v3131 = vpop.f32.mrb[0].mxu0
        %3132 = vmatprep.mubr.bf16.mxu0 0
        %3133 = vmatmul.mubr.bf16.gmra.mrb[0].mxu0 %v3023
        %v3134 = vpop.f32.mrb[0].mxu0
        %v3135 = vadd.f32 %v2992, %v3134
        %v3136 = vpop.f32.mrb[0].mxu0
        %v3137 = vpop.f32.mrb[0].mxu0
        %v3138 = vadd.f32 %v2992, %v3137
        %v3139 = vpop.f32.mrb[0].mxu0
        %3140 = vmatprep.mubr.bf16.mxu0 0
        %3141 = vmatmul.mubr.bf16.gmra.mrb[0].mxu0 %v3026
        %v3142 = vpop.f32.mrb[0].mxu0
        %v3143 = vadd.f32 %v2992, %v3142
        %v3144 = vpop.f32.mrb[0].mxu0
        %v3145 = vpop.f32.mrb[0].mxu0
        %v3146 = vadd.f32 %v2992, %v3145
        %v3147 = vpop.f32.mrb[0].mxu0
        %3148 = vmatprep.mubr.bf16.mxu0 0
        %3149 = vmatmul.mubr.bf16.gmra.mrb[0].mxu0 %v3029
        %v3150 = vpop.f32.mrb[0].mxu0
        %v3151 = vadd.f32 %v2992, %v3150
        %v3152 = vpop.f32.mrb[0].mxu0
        %v3153 = vpop.f32.mrb[0].mxu0
        %v3154 = vadd.f32 %v2992, %v3153
        %v3155 = vpop.f32.mrb[0].mxu0
        %3156 = vmatprep.mubr.bf16.mxu0 0
        %3157 = vmatmul.mubr.bf16.gmra.mrb[0].mxu0 %v3032
        %v3158 = vpop.f32.mrb[0].mxu0
        %v3159 = vadd.f32 %v2992, %v3158
        %v3160 = vpop.f32.mrb[0].mxu0
        %v3161 = vpop.f32.mrb[0].mxu0
        %v3162 = vadd.f32 %v2992, %v3161
        %v3163 = vpop.f32.mrb[0].mxu0
        %3164 = vmatprep.mubr.bf16.mxu0 0
        %3165 = vmatmul.mubr.bf16.gmra.mrb[0].mxu0 %v3035
        %v3166 = vpop.f32.mrb[0].mxu0
        %v3167 = vadd.f32 %v2992, %v3166
        %v3168 = vpop.f32.mrb[0].mxu0
        %v3169 = vpop.f32.mrb[0].mxu0
        %v3170 = vadd.f32 %v2992, %v3169
        %v3171 = vpop.f32.mrb[0].mxu0
        %3172 = vmatprep.mubr.bf16.mxu0 0
        %3173 = vmatmul.mubr.bf16.gmra.mrb[0].mxu0 %v3038
        %v3174 = vpop.f32.mrb[0].mxu0
        %v3175 = vadd.f32 %v2992, %v3174
        %v3176 = vpop.f32.mrb[0].mxu0
        %v3177 = vpop.f32.mrb[0].mxu0
        %v3178 = vadd.f32 %v2992, %v3177
        %v3179 = vpop.f32.mrb[0].mxu0
        %3180 = vmatprep.mubr.bf16.mxu0 0
        %3181 = vmatmul.mubr.bf16.gmra.mrb[0].mxu0 %v3041
        %v3182 = vpop.f32.mrb[0].mxu0
        %v3183 = vadd.f32 %v2992, %v3182
        %v3184 = vpop.f32.mrb[0].mxu0
        %v3185 = vpop.f32.mrb[0].mxu0
        %v3186 = vadd.f32 %v2992, %v3185
        %v3187 = vpop.f32.mrb[0].mxu0
        %3188 = vmatprep.mubr.bf16.mxu0 0
        %3189 = vmatmul.mubr.bf16.gmra.mrb[0].mxu0 %v3044
        %v3190 = vpop.f32.mrb[0].mxu0
        %v3191 = vadd.f32 %v2992, %v3190
        %v3192 = vpop.f32.mrb[0].mxu0
        %v3193 = vpop.f32.mrb[0].mxu0
        %v3194 = vadd.f32 %v2992, %v3193
        %v3195 = vpop.f32.mrb[0].mxu0
        %3196 = vmatprep.mubr.bf16.mxu0 0
        %3197 = vmatmul.mubr.bf16.gmra.mrb[0].mxu0 %v3047
        %v3198 = vpop.f32.mrb[0].mxu0
        %v3199 = vadd.f32 %v2992, %v3198
        %v3200 = vpop.f32.mrb[0].mxu0
        %v3201 = vpop.f32.mrb[0].mxu0
        %v3202 = vadd.f32 %v2992, %v3201
        %v3203 = vpop.f32.mrb[0].mxu0
        %3204 = vmatprep.mubr.bf16.mxu0 0
        %3205 = vmatmul.mubr.bf16.gmra.mrb[0].mxu0 %v3050
        %v3206 = vpop.f32.mrb[0].mxu0
        %v3207 = vadd.f32 %v2992, %v3206
        %v3208 = vpop.f32.mrb[0].mxu0
        %v3209 = vpop.f32.mrb[0].mxu0
        %v3210 = vadd.f32 %v2992, %v3209
        %v3211 = vpop.f32.mrb[0].mxu0
        %3212 = vmatprep.mubr.bf16.mxu0 0
        %3213 = vmatmul.mubr.bf16.gmra.mrb[0].mxu0 %v3053
        %v3214 = vpop.f32.mrb[0].mxu0
        %v3215 = vadd.f32 %v2992, %v3214
        %v3216 = vpop.f32.mrb[0].mxu0
        %v3217 = vpop.f32.mrb[0].mxu0
        %v3218 = vadd.f32 %v2992, %v3217
        %v3219 = vpop.f32.mrb[0].mxu0
        %3220 = vmatprep.mubr.bf16.mxu0 0
        %3221 = vmatmul.mubr.bf16.gmra.mrb[0].mxu0 %v3056
        %v3222 = vpop.f32.mrb[0].mxu0
        %v3223 = vadd.f32 %v2992, %v3222
        %v3224 = vpop.f32.mrb[0].mxu0
        %v3225 = vpop.f32.mrb[0].mxu0
        %v3226 = vadd.f32 %v2992, %v3225
        %v3227 = vpop.f32.mrb[0].mxu0
        %3228 = vmatprep.mubr.bf16.mxu0 0
        %3229 = vmatmul.mubr.bf16.gmra.mrb[0].mxu0 %v3059
        %v3230 = vpop.f32.mrb[0].mxu0
        %v3231 = vadd.f32 %v2992, %v3230
        %v3232 = vpop.f32.mrb[0].mxu0
        %v3233 = vpop.f32.mrb[0].mxu0
        %v3234 = vadd.f32 %v2992, %v3233
        %v3235 = vpop.f32.mrb[0].mxu0
        %3236 = vmatprep.mubr.bf16.mxu0 0
        %3237 = vmatmul.mubr.bf16.gmra.mrb[0].mxu0 %v3062
        %v3238 = vpop.f32.mrb[0].mxu0
        %v3239 = vadd.f32 %v2992, %v3238
        %v3240 = vpop.f32.mrb[0].mxu0
        %v3241 = vpop.f32.mrb[0].mxu0
        %v3242 = vadd.f32 %v2992, %v3241
        %v3243 = vpop.f32.mrb[0].mxu0
        %3244 = vdwg.mxu0
        %v3245 = vld [vmem:[%s5] sm:$0x1]
        %v3246 = vstv %s317
        %v3247 = vmul.f32 %v3246, %v3245
        %v3249 = vlaneseq
        %v3250 = vshrl.u32 %v3249, 7
        %v3251 = vsub.s32 0, %v3250
        %v3252 = vrot.slane %v3247, %v3251
        %v3254 = vadd.f32 %v3103, %v3252
        %v3255 = vadd.f32 %v3106, %v3252
        %v3256 = vadd.f32 %v3111, %v3252
        %v3257 = vadd.f32 %v3114, %v3252
        %v3258 = vadd.f32 %v3119, %v3252
        %v3259 = vadd.f32 %v3122, %v3252
        %v3260 = vadd.f32 %v3127, %v3252
        %v3261 = vadd.f32 %v3130, %v3252
        %v3262 = vadd.f32 %v3135, %v3252
        %v3263 = vadd.f32 %v3138, %v3252
        %v3264 = vadd.f32 %v3143, %v3252
        %v3265 = vadd.f32 %v3146, %v3252
        %v3266 = vadd.f32 %v3151, %v3252
        %v3267 = vadd.f32 %v3154, %v3252
        %v3268 = vadd.f32 %v3159, %v3252
        %v3269 = vadd.f32 %v3162, %v3252
        %v3270 = vadd.f32 %v3167, %v3252
        %v3271 = vadd.f32 %v3170, %v3252
        %v3272 = vadd.f32 %v3175, %v3252
        %v3273 = vadd.f32 %v3178, %v3252
        %v3274 = vadd.f32 %v3183, %v3252
        %v3275 = vadd.f32 %v3186, %v3252
        %v3276 = vadd.f32 %v3191, %v3252
        %v3277 = vadd.f32 %v3194, %v3252
        %v3278 = vadd.f32 %v3199, %v3252
        %v3279 = vadd.f32 %v3202, %v3252
        %v3280 = vadd.f32 %v3207, %v3252
        %v3281 = vadd.f32 %v3210, %v3252
        %v3282 = vadd.f32 %v3215, %v3252
        %v3283 = vadd.f32 %v3218, %v3252
        %v3284 = vadd.f32 %v3223, %v3252
        %v3285 = vadd.f32 %v3226, %v3252
        %v3286 = vadd.f32 %v3231, %v3252
        %v3287 = vadd.f32 %v3234, %v3252
        %v3288 = vadd.f32 %v3239, %v3252
        %v3289 = vadd.f32 %v3242, %v3252
        %vm3290 = vcmp.gt.f32.partialorder %v3254, 0.0
        %vm3291 = vcmp.gt.f32.partialorder %v3255, 0.0
        %vm3292 = vcmp.gt.f32.partialorder %v3256, 0.0
        %vm3293 = vcmp.gt.f32.partialorder %v3257, 0.0
        %vm3294 = vcmp.gt.f32.partialorder %v3258, 0.0
        %vm3295 = vcmp.gt.f32.partialorder %v3259, 0.0
        %vm3296 = vcmp.gt.f32.partialorder %v3260, 0.0
        %vm3297 = vcmp.gt.f32.partialorder %v3261, 0.0
        %vm3298 = vcmp.gt.f32.partialorder %v3262, 0.0
        %vm3299 = vcmp.gt.f32.partialorder %v3263, 0.0
        %vm3300 = vcmp.gt.f32.partialorder %v3264, 0.0
        %vm3301 = vcmp.gt.f32.partialorder %v3265, 0.0
        %vm3302 = vcmp.gt.f32.partialorder %v3266, 0.0
        %vm3303 = vcmp.gt.f32.partialorder %v3267, 0.0
        %vm3304 = vcmp.gt.f32.partialorder %v3268, 0.0
        %vm3305 = vcmp.gt.f32.partialorder %v3269, 0.0
        %vm3306 = vcmp.gt.f32.partialorder %v3270, 0.0
        %vm3307 = vcmp.gt.f32.partialorder %v3271, 0.0
        %vm3308 = vcmp.gt.f32.partialorder %v3272, 0.0
        %vm3309 = vcmp.gt.f32.partialorder %v3273, 0.0
        %vm3310 = vcmp.gt.f32.partialorder %v3274, 0.0
        %vm3311 = vcmp.gt.f32.partialorder %v3275, 0.0
        %vm3312 = vcmp.gt.f32.partialorder %v3276, 0.0
        %vm3313 = vcmp.gt.f32.partialorder %v3277, 0.0
        %vm3314 = vcmp.gt.f32.partialorder %v3278, 0.0
        %vm3315 = vcmp.gt.f32.partialorder %v3279, 0.0
        %vm3316 = vcmp.gt.f32.partialorder %v3280, 0.0
        %vm3317 = vcmp.gt.f32.partialorder %v3281, 0.0
        %vm3318 = vcmp.gt.f32.partialorder %v3282, 0.0
        %vm3319 = vcmp.gt.f32.partialorder %v3283, 0.0
        %vm3320 = vcmp.gt.f32.partialorder %v3284, 0.0
        %vm3321 = vcmp.gt.f32.partialorder %v3285, 0.0
        %vm3322 = vcmp.gt.f32.partialorder %v3286, 0.0
        %vm3323 = vcmp.gt.f32.partialorder %v3287, 0.0
        %vm3324 = vcmp.gt.f32.partialorder %v3288, 0.0
        %vm3325 = vcmp.gt.f32.partialorder %v3289, 0.0
        %v3326 = vmul.f32 %v3254, 0.01
        %v3327 = vmul.f32 %v3255, 0.01
        %v3328 = vmul.f32 %v3256, 0.01
        %v3329 = vmul.f32 %v3257, 0.01
        %v3330 = vmul.f32 %v3258, 0.01
        %v3331 = vmul.f32 %v3259, 0.01
        %v3332 = vmul.f32 %v3260, 0.01
        %v3333 = vmul.f32 %v3261, 0.01
        %v3334 = vmul.f32 %v3262, 0.01
        %v3335 = vmul.f32 %v3263, 0.01
        %v3336 = vmul.f32 %v3264, 0.01
        %v3337 = vmul.f32 %v3265, 0.01
        %v3338 = vmul.f32 %v3266, 0.01
        %v3339 = vmul.f32 %v3267, 0.01
        %v3340 = vmul.f32 %v3268, 0.01
        %v3341 = vmul.f32 %v3269, 0.01
        %v3342 = vmul.f32 %v3270, 0.01
        %v3343 = vmul.f32 %v3271, 0.01
        %v3344 = vmul.f32 %v3272, 0.01
        %v3345 = vmul.f32 %v3273, 0.01
        %v3346 = vmul.f32 %v3274, 0.01
        %v3347 = vmul.f32 %v3275, 0.01
        %v3348 = vmul.f32 %v3276, 0.01
        %v3349 = vmul.f32 %v3277, 0.01
        %v3350 = vmul.f32 %v3278, 0.01
        %v3351 = vmul.f32 %v3279, 0.01
        %v3352 = vmul.f32 %v3280, 0.01
        %v3353 = vmul.f32 %v3281, 0.01
        %v3354 = vmul.f32 %v3282, 0.01
        %v3355 = vmul.f32 %v3283, 0.01
        %v3356 = vmul.f32 %v3284, 0.01
        %v3357 = vmul.f32 %v3285, 0.01
        %v3358 = vmul.f32 %v3286, 0.01
        %v3359 = vmul.f32 %v3287, 0.01
        %v3360 = vmul.f32 %v3288, 0.01
        %v3361 = vmul.f32 %v3289, 0.01
        %v3362 = vsel %vm3290, %v3254, %v3326
        %v3363 = vsel %vm3291, %v3255, %v3327
        %v3364 = vsel %vm3292, %v3256, %v3328
        %v3365 = vsel %vm3293, %v3257, %v3329
        %v3366 = vsel %vm3294, %v3258, %v3330
        %v3367 = vsel %vm3295, %v3259, %v3331
        %v3368 = vsel %vm3296, %v3260, %v3332
        %v3369 = vsel %vm3297, %v3261, %v3333
        %v3370 = vsel %vm3298, %v3262, %v3334
        %v3371 = vsel %vm3299, %v3263, %v3335
        %v3372 = vsel %vm3300, %v3264, %v3336
        %v3373 = vsel %vm3301, %v3265, %v3337
        %v3374 = vsel %vm3302, %v3266, %v3338
        %v3375 = vsel %vm3303, %v3267, %v3339
        %v3376 = vsel %vm3304, %v3268, %v3340
        %v3377 = vsel %vm3305, %v3269, %v3341
        %v3378 = vsel %vm3306, %v3270, %v3342
        %v3379 = vsel %vm3307, %v3271, %v3343
        %v3380 = vsel %vm3308, %v3272, %v3344
        %v3381 = vsel %vm3309, %v3273, %v3345
        %v3382 = vsel %vm3310, %v3274, %v3346
        %v3383 = vsel %vm3311, %v3275, %v3347
        %v3384 = vsel %vm3312, %v3276, %v3348
        %v3385 = vsel %vm3313, %v3277, %v3349
        %v3386 = vsel %vm3314, %v3278, %v3350
        %v3387 = vsel %vm3315, %v3279, %v3351
        %v3388 = vsel %vm3316, %v3280, %v3352
        %v3389 = vsel %vm3317, %v3281, %v3353
        %v3390 = vsel %vm3318, %v3282, %v3354
        %v3391 = vsel %vm3319, %v3283, %v3355
        %v3392 = vsel %vm3320, %v3284, %v3356
        %v3393 = vsel %vm3321, %v3285, %v3357
        %v3394 = vsel %vm3322, %v3286, %v3358
        %v3395 = vsel %vm3323, %v3287, %v3359
        %v3396 = vsel %vm3324, %v3288, %v3360
        %v3397 = vsel %vm3325, %v3289, %v3361
        %v3398 = vsel %vm1289, 1, 0
        %v3399 = vsel %vm1290, 1, 0
        %v3400 = vsel %vm1291, 1, 0
        %v3401 = vsel %vm1292, 1, 0
        %v3402 = vsel %vm1293, 1, 0
        %v3403 = vsel %vm1294, 1, 0
        %v3404 = vsel %vm1295, 1, 0
        %v3405 = vsel %vm1296, 1, 0
        %v3406 = vsel %vm1297, 1, 0
        %v3407 = vsel %vm1298, 1, 0
        %v3408 = vsel %vm1299, 1, 0
        %v3409 = vsel %vm1300, 1, 0
        %v3410 = vsel %vm1301, 1, 0
        %v3411 = vsel %vm1302, 1, 0
        %v3412 = vsel %vm1303, 1, 0
        %v3413 = vsel %vm1304, 1, 0
        %v3414 = vsel %vm1305, 1, 0
        %v3415 = vsel %vm1306, 1, 0
        %v3416 = vsel %vm1307, 1, 0
        %v3417 = vsel %vm1308, 1, 0
        %v3418 = vsel %vm1309, 1, 0
        %v3419 = vsel %vm1310, 1, 0
        %v3420 = vsel %vm1311, 1, 0
        %v3421 = vsel %vm1312, 1, 0
        %v3422 = vsel %vm1313, 1, 0
        %v3423 = vsel %vm1314, 1, 0
        %v3424 = vsel %vm1315, 1, 0
        %v3425 = vsel %vm1316, 1, 0
        %v3426 = vsel %vm1317, 1, 0
        %v3427 = vsel %vm1318, 1, 0
        %v3428 = vsel %vm1319, 1, 0
        %v3429 = vsel %vm1320, 1, 0
        %v3430 = vsel %vm1321, 1, 0
        %v3431 = vsel %vm1322, 1, 0
        %v3432 = vsel %vm1323, 1, 0
        %v3433 = vsel %vm1324, 1, 0
        %vm3434 = vcmp.eq.s32.totalorder %v3398, 1
        %vm3435 = vcmp.eq.s32.totalorder %v3399, 1
        %vm3436 = vcmp.eq.s32.totalorder %v3400, 1
        %vm3437 = vcmp.eq.s32.totalorder %v3401, 1
        %vm3438 = vcmp.eq.s32.totalorder %v3402, 1
        %vm3439 = vcmp.eq.s32.totalorder %v3403, 1
        %vm3440 = vcmp.eq.s32.totalorder %v3404, 1
        %vm3441 = vcmp.eq.s32.totalorder %v3405, 1
        %vm3442 = vcmp.eq.s32.totalorder %v3406, 1
        %vm3443 = vcmp.eq.s32.totalorder %v3407, 1
        %vm3444 = vcmp.eq.s32.totalorder %v3408, 1
        %vm3445 = vcmp.eq.s32.totalorder %v3409, 1
        %vm3446 = vcmp.eq.s32.totalorder %v3410, 1
        %vm3447 = vcmp.eq.s32.totalorder %v3411, 1
        %vm3448 = vcmp.eq.s32.totalorder %v3412, 1
        %vm3449 = vcmp.eq.s32.totalorder %v3413, 1
        %vm3450 = vcmp.eq.s32.totalorder %v3414, 1
        %vm3451 = vcmp.eq.s32.totalorder %v3415, 1
        %vm3452 = vcmp.eq.s32.totalorder %v3416, 1
        %vm3453 = vcmp.eq.s32.totalorder %v3417, 1
        %vm3454 = vcmp.eq.s32.totalorder %v3418, 1
        %vm3455 = vcmp.eq.s32.totalorder %v3419, 1
        %vm3456 = vcmp.eq.s32.totalorder %v3420, 1
        %vm3457 = vcmp.eq.s32.totalorder %v3421, 1
        %vm3458 = vcmp.eq.s32.totalorder %v3422, 1
        %vm3459 = vcmp.eq.s32.totalorder %v3423, 1
        %vm3460 = vcmp.eq.s32.totalorder %v3424, 1
        %vm3461 = vcmp.eq.s32.totalorder %v3425, 1
        %vm3462 = vcmp.eq.s32.totalorder %v3426, 1
        %vm3463 = vcmp.eq.s32.totalorder %v3427, 1
        %vm3464 = vcmp.eq.s32.totalorder %v3428, 1
        %vm3465 = vcmp.eq.s32.totalorder %v3429, 1
        %vm3466 = vcmp.eq.s32.totalorder %v3430, 1
        %vm3467 = vcmp.eq.s32.totalorder %v3431, 1
        %vm3468 = vcmp.eq.s32.totalorder %v3432, 1
        %vm3469 = vcmp.eq.s32.totalorder %v3433, 1
        %v3470 = vsel %vm3434, %v3362, 0.0
        %v3471 = vsel %vm3435, %v3363, 0.0
        %v3472 = vsel %vm3436, %v3364, 0.0
        %v3473 = vsel %vm3437, %v3365, 0.0
        %v3474 = vsel %vm3438, %v3366, 0.0
        %v3475 = vsel %vm3439, %v3367, 0.0
        %v3476 = vsel %vm3440, %v3368, 0.0
        %v3477 = vsel %vm3441, %v3369, 0.0
        %v3478 = vsel %vm3442, %v3370, 0.0
        %v3479 = vsel %vm3443, %v3371, 0.0
        %v3480 = vsel %vm3444, %v3372, 0.0
        %v3481 = vsel %vm3445, %v3373, 0.0
        %v3482 = vsel %vm3446, %v3374, 0.0
        %v3483 = vsel %vm3447, %v3375, 0.0
        %v3484 = vsel %vm3448, %v3376, 0.0
        %v3485 = vsel %vm3449, %v3377, 0.0
        %v3486 = vsel %vm3450, %v3378, 0.0
        %v3487 = vsel %vm3451, %v3379, 0.0
        %v3488 = vsel %vm3452, %v3380, 0.0
        %v3489 = vsel %vm3453, %v3381, 0.0
        %v3490 = vsel %vm3454, %v3382, 0.0
        %v3491 = vsel %vm3455, %v3383, 0.0
        %v3492 = vsel %vm3456, %v3384, 0.0
        %v3493 = vsel %vm3457, %v3385, 0.0
        %v3494 = vsel %vm3458, %v3386, 0.0
        %v3495 = vsel %vm3459, %v3387, 0.0
        %v3496 = vsel %vm3460, %v3388, 0.0
        %v3497 = vsel %vm3461, %v3389, 0.0
        %v3498 = vsel %vm3462, %v3390, 0.0
        %v3499 = vsel %vm3463, %v3391, 0.0
        %v3500 = vsel %vm3464, %v3392, 0.0
        %v3501 = vsel %vm3465, %v3393, 0.0
        %v3502 = vsel %vm3466, %v3394, 0.0
        %v3503 = vsel %vm3467, %v3395, 0.0
        %v3504 = vsel %vm3468, %v3396, 0.0
        %v3505 = vsel %vm3469, %v3397, 0.0
        %3506 = vst.msk [vmem:[#allocation3] sm:$0xff] %vm2927, 0.0
        %3507 = vst.msk [vmem:[#allocation3 + $0x8] sm:$0xff] %vm2927, 0.0
        %vm3508 = vcmask 256000
        %3509 = vst.msk [vmem:[#allocation3 + $0x10] sm:$0x7] %vm3508, 0.0
        %3510 = vst.msk [vmem:[#allocation3 + $0x13] sm:$0xff] %vm2927, %v3470
        %3511 = vst.msk [vmem:[#allocation3 + $0x1b] sm:$0xff] %vm2927, %v3471
        %3512 = vst.msk [vmem:[#allocation3 + $0x23] sm:$0xff] %vm2927, %v3472
        %3513 = vst.msk [vmem:[#allocation3 + $0x2b] sm:$0xff] %vm2927, %v3473
        %3514 = vst.msk [vmem:[#allocation3 + $0x33] sm:$0xff] %vm2927, %v3474
        %3515 = vst.msk [vmem:[#allocation3 + $0x3b] sm:$0xff] %vm2927, %v3475
        %3516 = vst.msk [vmem:[#allocation3 + $0x43] sm:$0xff] %vm2927, %v3476
        %3517 = vst.msk [vmem:[#allocation3 + $0x4b] sm:$0xff] %vm2927, %v3477
        %3518 = vst.msk [vmem:[#allocation3 + $0x53] sm:$0xff] %vm2927, %v3478
        %3519 = vst.msk [vmem:[#allocation3 + $0x5b] sm:$0xff] %vm2927, %v3479
        %3520 = vst.msk [vmem:[#allocation3 + $0x63] sm:$0xff] %vm2927, %v3480
        %3521 = vst.msk [vmem:[#allocation3 + $0x6b] sm:$0xff] %vm2927, %v3481
        %3522 = vst.msk [vmem:[#allocation3 + $0x73] sm:$0xff] %vm2927, %v3482
        %3523 = vst.msk [vmem:[#allocation3 + $0x7b] sm:$0xff] %vm2927, %v3483
        %3524 = vst.msk [vmem:[#allocation3 + $0x83] sm:$0xff] %vm2927, %v3484
        %3525 = vst.msk [vmem:[#allocation3 + $0x8b] sm:$0xff] %vm2927, %v3485
        %3526 = vst.msk [vmem:[#allocation3 + $0x93] sm:$0xff] %vm2927, %v3486
        %3527 = vst.msk [vmem:[#allocation3 + $0x9b] sm:$0xff] %vm2927, %v3487
        %3528 = vst.msk [vmem:[#allocation3 + $0xa3] sm:$0xff] %vm2927, %v3488
        %3529 = vst.msk [vmem:[#allocation3 + $0xab] sm:$0xff] %vm2927, %v3489
        %3530 = vst.msk [vmem:[#allocation3 + $0xb3] sm:$0xff] %vm2927, %v3490
        %3531 = vst.msk [vmem:[#allocation3 + $0xbb] sm:$0xff] %vm2927, %v3491
        %3532 = vst.msk [vmem:[#allocation3 + $0xc3] sm:$0xff] %vm2927, %v3492
        %3533 = vst.msk [vmem:[#allocation3 + $0xcb] sm:$0xff] %vm2927, %v3493
        %3534 = vst.msk [vmem:[#allocation3 + $0xd3] sm:$0xff] %vm2927, %v3494
        %3535 = vst.msk [vmem:[#allocation3 + $0xdb] sm:$0xff] %vm2927, %v3495
        %3536 = vst.msk [vmem:[#allocation3 + $0xe3] sm:$0xff] %vm2927, %v3496
        %3537 = vst.msk [vmem:[#allocation3 + $0xeb] sm:$0xff] %vm2927, %v3497
        %3538 = vst.msk [vmem:[#allocation3 + $0xf3] sm:$0xff] %vm2927, %v3498
        %3539 = vst.msk [vmem:[#allocation3 + $0xfb] sm:$0xff] %vm2927, %v3499
        %3540 = vst.msk [vmem:[#allocation3 + $0x103] sm:$0xff] %vm2927, %v3500
        %3541 = vst.msk [vmem:[#allocation3 + $0x10b] sm:$0xff] %vm2927, %v3501
        %3542 = vst.msk [vmem:[#allocation3 + $0x113] sm:$0xff] %vm2927, %v3502
        %3543 = vst.msk [vmem:[#allocation3 + $0x11b] sm:$0xff] %vm2927, %v3503
        %3544 = vst.msk [vmem:[#allocation3 + $0x123] sm:$0xff] %vm2927, %v3504
        %vm3545 = vcmask 259072
        %3546 = vst.msk [vmem:[#allocation3 + $0x12b] sm:$0x3f] %vm3545, %v3505
        %3547 = vst.msk [vmem:[#allocation3 + $0x131] sm:$0xff] %vm2927, 0.0
        %3548 = vst.msk [vmem:[#allocation3 + $0x139] sm:$0xff] %vm2927, 0.0
        %3549 = vst.msk [vmem:[#allocation3 + $0x141] sm:$0x7] %vm3508, 0.0
        %v3550 = vld [vmem:[#allocation3] sm:$0xff]
        %v3551 = vld [vmem:[#allocation3 + $0x8] sm:$0xff]
        %v3552 = vld [vmem:[#allocation3 + $0x10] sm:$0xff]
        %v3553 = vld [vmem:[#allocation3 + $0x18] sm:$0xff]
        %v3554 = vld [vmem:[#allocation3 + $0x20] sm:$0xff]
        %v3555 = vld [vmem:[#allocation3 + $0x28] sm:$0xff]
        %v3556 = vld [vmem:[#allocation3 + $0x30] sm:$0xff]
        %v3557 = vld [vmem:[#allocation3 + $0x38] sm:$0xff]
        %v3558 = vld [vmem:[#allocation3 + $0x40] sm:$0xff]
        %v3559 = vld [vmem:[#allocation3 + $0x48] sm:$0xff]
        %v3560 = vld [vmem:[#allocation3 + $0x50] sm:$0xff]
        %v3561 = vld [vmem:[#allocation3 + $0x58] sm:$0xff]
        %v3562 = vld [vmem:[#allocation3 + $0x60] sm:$0xff]
        %v3563 = vld [vmem:[#allocation3 + $0x68] sm:$0xff]
        %v3564 = vld [vmem:[#allocation3 + $0x70] sm:$0xff]
        %v3565 = vld [vmem:[#allocation3 + $0x78] sm:$0xff]
        %v3566 = vld [vmem:[#allocation3 + $0x80] sm:$0xff]
        %v3567 = vld [vmem:[#allocation3 + $0x88] sm:$0xff]
        %v3568 = vld [vmem:[#allocation3 + $0x90] sm:$0xff]
        %v3569 = vld [vmem:[#allocation3 + $0x98] sm:$0xff]
        %v3570 = vld [vmem:[#allocation3 + $0xa0] sm:$0xff]
        %v3571 = vld [vmem:[#allocation3 + $0xa8] sm:$0xff]
        %v3572 = vld [vmem:[#allocation3 + $0xb0] sm:$0xff]
        %v3573 = vld [vmem:[#allocation3 + $0xb8] sm:$0xff]
        %v3574 = vld [vmem:[#allocation3 + $0xc0] sm:$0xff]
        %v3575 = vld [vmem:[#allocation3 + $0xc8] sm:$0xff]
        %v3576 = vld [vmem:[#allocation3 + $0xd0] sm:$0xff]
        %v3577 = vld [vmem:[#allocation3 + $0xd8] sm:$0xff]
        %v3578 = vld [vmem:[#allocation3 + $0xe0] sm:$0xff]
        %v3579 = vld [vmem:[#allocation3 + $0xe8] sm:$0xff]
        %v3580 = vld [vmem:[#allocation3 + $0xf0] sm:$0xff]
        %v3581 = vld [vmem:[#allocation3 + $0xf8] sm:$0xff]
        %v3582 = vld [vmem:[#allocation3 + $0x100] sm:$0xff]
        %v3583 = vld [vmem:[#allocation3 + $0x108] sm:$0xff]
        %v3584 = vld [vmem:[#allocation3 + $0x110] sm:$0xff]
        %v3585 = vld [vmem:[#allocation3 + $0x118] sm:$0x3f]
        %v3586 = vpack.c.bf16 %v3551, %v3550
        %v3587 = vpack.c.bf16 %v3553, %v3552
        %v3588 = vpack.c.bf16 %v3555, %v3554
        %v3589 = vpack.c.bf16 %v3557, %v3556
        %v3590 = vpack.c.bf16 %v3559, %v3558
        %v3591 = vpack.c.bf16 %v3561, %v3560
        %v3592 = vpack.c.bf16 %v3563, %v3562
        %v3593 = vpack.c.bf16 %v3565, %v3564
        %v3594 = vpack.c.bf16 %v3567, %v3566
        %v3595 = vpack.c.bf16 %v3569, %v3568
        %v3596 = vpack.c.bf16 %v3571, %v3570
        %v3597 = vpack.c.bf16 %v3573, %v3572
        %v3598 = vpack.c.bf16 %v3575, %v3574
        %v3599 = vpack.c.bf16 %v3577, %v3576
        %v3600 = vpack.c.bf16 %v3579, %v3578
        %v3601 = vpack.c.bf16 %v3581, %v3580
        %v3602 = vpack.c.bf16 %v3583, %v3582
        %v3603 = vpack.c.bf16 %v3585, %v3584
        %v3604 = vld [vmem:[#allocation3 + $0x1] sm:$0xff]
        %v3605 = vld [vmem:[#allocation3 + $0x9] sm:$0xff]
        %v3606 = vld [vmem:[#allocation3 + $0x11] sm:$0xff]
        %v3607 = vld [vmem:[#allocation3 + $0x19] sm:$0xff]
        %v3608 = vld [vmem:[#allocation3 + $0x21] sm:$0xff]
        %v3609 = vld [vmem:[#allocation3 + $0x29] sm:$0xff]
        %v3610 = vld [vmem:[#allocation3 + $0x31] sm:$0xff]
        %v3611 = vld [vmem:[#allocation3 + $0x39] sm:$0xff]
        %v3612 = vld [vmem:[#allocation3 + $0x41] sm:$0xff]
        %v3613 = vld [vmem:[#allocation3 + $0x49] sm:$0xff]
        %v3614 = vld [vmem:[#allocation3 + $0x51] sm:$0xff]
        %v3615 = vld [vmem:[#allocation3 + $0x59] sm:$0xff]
        %v3616 = vld [vmem:[#allocation3 + $0x61] sm:$0xff]
        %v3617 = vld [vmem:[#allocation3 + $0x69] sm:$0xff]
        %v3618 = vld [vmem:[#allocation3 + $0x71] sm:$0xff]
        %v3619 = vld [vmem:[#allocation3 + $0x79] sm:$0xff]
        %v3620 = vld [vmem:[#allocation3 + $0x81] sm:$0xff]
        %v3621 = vld [vmem:[#allocation3 + $0x89] sm:$0xff]
        %v3622 = vld [vmem:[#allocation3 + $0x91] sm:$0xff]
        %v3623 = vld [vmem:[#allocation3 + $0x99] sm:$0xff]
        %v3624 = vld [vmem:[#allocation3 + $0xa1] sm:$0xff]
        %v3625 = vld [vmem:[#allocation3 + $0xa9] sm:$0xff]
        %v3626 = vld [vmem:[#allocation3 + $0xb1] sm:$0xff]
        %v3627 = vld [vmem:[#allocation3 + $0xb9] sm:$0xff]
        %v3628 = vld [vmem:[#allocation3 + $0xc1] sm:$0xff]
        %v3629 = vld [vmem:[#allocation3 + $0xc9] sm:$0xff]
        %v3630 = vld [vmem:[#allocation3 + $0xd1] sm:$0xff]
        %v3631 = vld [vmem:[#allocation3 + $0xd9] sm:$0xff]
        %v3632 = vld [vmem:[#allocation3 + $0xe1] sm:$0xff]
        %v3633 = vld [vmem:[#allocation3 + $0xe9] sm:$0xff]
        %v3634 = vld [vmem:[#allocation3 + $0xf1] sm:$0xff]
        %v3635 = vld [vmem:[#allocation3 + $0xf9] sm:$0xff]
        %v3636 = vld [vmem:[#allocation3 + $0x101] sm:$0xff]
        %v3637 = vld [vmem:[#allocation3 + $0x109] sm:$0xff]
        %v3638 = vld [vmem:[#allocation3 + $0x111] sm:$0xff]
        %v3639 = vld [vmem:[#allocation3 + $0x119] sm:$0x3f]
        %v3640 = vpack.c.bf16 %v3605, %v3604
        %v3641 = vpack.c.bf16 %v3607, %v3606
        %v3642 = vpack.c.bf16 %v3609, %v3608
        %v3643 = vpack.c.bf16 %v3611, %v3610
        %v3644 = vpack.c.bf16 %v3613, %v3612
        %v3645 = vpack.c.bf16 %v3615, %v3614
        %v3646 = vpack.c.bf16 %v3617, %v3616
        %v3647 = vpack.c.bf16 %v3619, %v3618
        %v3648 = vpack.c.bf16 %v3621, %v3620
        %v3649 = vpack.c.bf16 %v3623, %v3622
        %v3650 = vpack.c.bf16 %v3625, %v3624
        %v3651 = vpack.c.bf16 %v3627, %v3626
        %v3652 = vpack.c.bf16 %v3629, %v3628
        %v3653 = vpack.c.bf16 %v3631, %v3630
        %v3654 = vpack.c.bf16 %v3633, %v3632
        %v3655 = vpack.c.bf16 %v3635, %v3634
        %v3656 = vpack.c.bf16 %v3637, %v3636
        %v3657 = vpack.c.bf16 %v3639, %v3638
        %v3658 = vld [vmem:[#allocation3 + $0x2] sm:$0xff]
        %v3659 = vld [vmem:[#allocation3 + $0xa] sm:$0xff]
        %v3660 = vld [vmem:[#allocation3 + $0x12] sm:$0xff]
        %v3661 = vld [vmem:[#allocation3 + $0x1a] sm:$0xff]
        %v3662 = vld [vmem:[#allocation3 + $0x22] sm:$0xff]
        %v3663 = vld [vmem:[#allocation3 + $0x2a] sm:$0xff]
        %v3664 = vld [vmem:[#allocation3 + $0x32] sm:$0xff]
        %v3665 = vld [vmem:[#allocation3 + $0x3a] sm:$0xff]
        %v3666 = vld [vmem:[#allocation3 + $0x42] sm:$0xff]
        %v3667 = vld [vmem:[#allocation3 + $0x4a] sm:$0xff]
        %v3668 = vld [vmem:[#allocation3 + $0x52] sm:$0xff]
        %v3669 = vld [vmem:[#allocation3 + $0x5a] sm:$0xff]
        %v3670 = vld [vmem:[#allocation3 + $0x62] sm:$0xff]
        %v3671 = vld [vmem:[#allocation3 + $0x6a] sm:$0xff]
        %v3672 = vld [vmem:[#allocation3 + $0x72] sm:$0xff]
        %v3673 = vld [vmem:[#allocation3 + $0x7a] sm:$0xff]
        %v3674 = vld [vmem:[#allocation3 + $0x82] sm:$0xff]
        %v3675 = vld [vmem:[#allocation3 + $0x8a] sm:$0xff]
        %v3676 = vld [vmem:[#allocation3 + $0x92] sm:$0xff]
        %v3677 = vld [vmem:[#allocation3 + $0x9a] sm:$0xff]
        %v3678 = vld [vmem:[#allocation3 + $0xa2] sm:$0xff]
        %v3679 = vld [vmem:[#allocation3 + $0xaa] sm:$0xff]
        %v3680 = vld [vmem:[#allocation3 + $0xb2] sm:$0xff]
        %v3681 = vld [vmem:[#allocation3 + $0xba] sm:$0xff]
        %v3682 = vld [vmem:[#allocation3 + $0xc2] sm:$0xff]
        %v3683 = vld [vmem:[#allocation3 + $0xca] sm:$0xff]
        %v3684 = vld [vmem:[#allocation3 + $0xd2] sm:$0xff]
        %v3685 = vld [vmem:[#allocation3 + $0xda] sm:$0xff]
        %v3686 = vld [vmem:[#allocation3 + $0xe2] sm:$0xff]
        %v3687 = vld [vmem:[#allocation3 + $0xea] sm:$0xff]
        %v3688 = vld [vmem:[#allocation3 + $0xf2] sm:$0xff]
        %v3689 = vld [vmem:[#allocation3 + $0xfa] sm:$0xff]
        %v3690 = vld [vmem:[#allocation3 + $0x102] sm:$0xff]
        %v3691 = vld [vmem:[#allocation3 + $0x10a] sm:$0xff]
        %v3692 = vld [vmem:[#allocation3 + $0x112] sm:$0xff]
        %v3693 = vld [vmem:[#allocation3 + $0x11a] sm:$0x3f]
        %v3694 = vpack.c.bf16 %v3659, %v3658
        %v3695 = vpack.c.bf16 %v3661, %v3660
        %v3696 = vpack.c.bf16 %v3663, %v3662
        %v3697 = vpack.c.bf16 %v3665, %v3664
        %v3698 = vpack.c.bf16 %v3667, %v3666
        %v3699 = vpack.c.bf16 %v3669, %v3668
        %v3700 = vpack.c.bf16 %v3671, %v3670
        %v3701 = vpack.c.bf16 %v3673, %v3672
        %v3702 = vpack.c.bf16 %v3675, %v3674
        %v3703 = vpack.c.bf16 %v3677, %v3676
        %v3704 = vpack.c.bf16 %v3679, %v3678
        %v3705 = vpack.c.bf16 %v3681, %v3680
        %v3706 = vpack.c.bf16 %v3683, %v3682
        %v3707 = vpack.c.bf16 %v3685, %v3684
        %v3708 = vpack.c.bf16 %v3687, %v3686
        %v3709 = vpack.c.bf16 %v3689, %v3688
        %v3710 = vpack.c.bf16 %v3691, %v3690
        %v3711 = vpack.c.bf16 %v3693, %v3692
        %v3712 = vld [vmem:[#allocation3 + $0x11a] sm:$0xff]
        %v3713 = vld [vmem:[#allocation3 + $0x122] sm:$0xff]
        %v3714 = vld [vmem:[#allocation3 + $0x12a] sm:$0x3f]
        %v3715 = vpack.c.bf16 %v3712, %v3692
        %v3716 = vpack.c.bf16 %v3714, %v3713
        %v3717 = vld [vmem:[#allocation3 + $0x13] sm:$0xff]
        %v3718 = vld [vmem:[#allocation3 + $0x1b] sm:$0xff]
        %v3719 = vld [vmem:[#allocation3 + $0x23] sm:$0xff]
        %v3720 = vld [vmem:[#allocation3 + $0x2b] sm:$0xff]
        %v3721 = vld [vmem:[#allocation3 + $0x33] sm:$0xff]
        %v3722 = vld [vmem:[#allocation3 + $0x3b] sm:$0xff]
        %v3723 = vld [vmem:[#allocation3 + $0x43] sm:$0xff]
        %v3724 = vld [vmem:[#allocation3 + $0x4b] sm:$0xff]
        %v3725 = vld [vmem:[#allocation3 + $0x53] sm:$0xff]
        %v3726 = vld [vmem:[#allocation3 + $0x5b] sm:$0xff]
        %v3727 = vld [vmem:[#allocation3 + $0x63] sm:$0xff]
        %v3728 = vld [vmem:[#allocation3 + $0x6b] sm:$0xff]
        %v3729 = vld [vmem:[#allocation3 + $0x73] sm:$0xff]
        %v3730 = vld [vmem:[#allocation3 + $0x7b] sm:$0xff]
        %v3731 = vld [vmem:[#allocation3 + $0x83] sm:$0xff]
        %v3732 = vld [vmem:[#allocation3 + $0x8b] sm:$0xff]
        %v3733 = vld [vmem:[#allocation3 + $0x93] sm:$0xff]
        %v3734 = vld [vmem:[#allocation3 + $0x9b] sm:$0xff]
        %v3735 = vld [vmem:[#allocation3 + $0xa3] sm:$0xff]
        %v3736 = vld [vmem:[#allocation3 + $0xab] sm:$0xff]
        %v3737 = vld [vmem:[#allocation3 + $0xb3] sm:$0xff]
        %v3738 = vld [vmem:[#allocation3 + $0xbb] sm:$0xff]
        %v3739 = vld [vmem:[#allocation3 + $0xc3] sm:$0xff]
        %v3740 = vld [vmem:[#allocation3 + $0xcb] sm:$0xff]
        %v3741 = vld [vmem:[#allocation3 + $0xd3] sm:$0xff]
        %v3742 = vld [vmem:[#allocation3 + $0xdb] sm:$0xff]
        %v3743 = vld [vmem:[#allocation3 + $0xe3] sm:$0xff]
        %v3744 = vld [vmem:[#allocation3 + $0xeb] sm:$0xff]
        %v3745 = vld [vmem:[#allocation3 + $0xf3] sm:$0xff]
        %v3746 = vld [vmem:[#allocation3 + $0xfb] sm:$0xff]
        %v3747 = vld [vmem:[#allocation3 + $0x103] sm:$0xff]
        %v3748 = vld [vmem:[#allocation3 + $0x10b] sm:$0xff]
        %v3749 = vld [vmem:[#allocation3 + $0x113] sm:$0xff]
        %v3750 = vld [vmem:[#allocation3 + $0x11b] sm:$0xff]
        %v3751 = vld [vmem:[#allocation3 + $0x123] sm:$0xff]
        %v3752 = vld [vmem:[#allocation3 + $0x12b] sm:$0x3f]
        %v3753 = vpack.c.bf16 %v3718, %v3717
        %v3754 = vpack.c.bf16 %v3720, %v3719
        %v3755 = vpack.c.bf16 %v3722, %v3721
        %v3756 = vpack.c.bf16 %v3724, %v3723
        %v3757 = vpack.c.bf16 %v3726, %v3725
        %v3758 = vpack.c.bf16 %v3728, %v3727
        %v3759 = vpack.c.bf16 %v3730, %v3729
        %v3760 = vpack.c.bf16 %v3732, %v3731
        %v3761 = vpack.c.bf16 %v3734, %v3733
        %v3762 = vpack.c.bf16 %v3736, %v3735
        %v3763 = vpack.c.bf16 %v3738, %v3737
        %v3764 = vpack.c.bf16 %v3740, %v3739
        %v3765 = vpack.c.bf16 %v3742, %v3741
        %v3766 = vpack.c.bf16 %v3744, %v3743
        %v3767 = vpack.c.bf16 %v3746, %v3745
        %v3768 = vpack.c.bf16 %v3748, %v3747
        %v3769 = vpack.c.bf16 %v3750, %v3749
        %v3770 = vpack.c.bf16 %v3752, %v3751
        %v3771 = vld [vmem:[#allocation3 + $0x14] sm:$0xff]
        %v3772 = vld [vmem:[#allocation3 + $0x1c] sm:$0xff]
        %v3773 = vld [vmem:[#allocation3 + $0x24] sm:$0xff]
        %v3774 = vld [vmem:[#allocation3 + $0x2c] sm:$0xff]
        %v3775 = vld [vmem:[#allocation3 + $0x34] sm:$0xff]
        %v3776 = vld [vmem:[#allocation3 + $0x3c] sm:$0xff]
        %v3777 = vld [vmem:[#allocation3 + $0x44] sm:$0xff]
        %v3778 = vld [vmem:[#allocation3 + $0x4c] sm:$0xff]
        %v3779 = vld [vmem:[#allocation3 + $0x54] sm:$0xff]
        %v3780 = vld [vmem:[#allocation3 + $0x5c] sm:$0xff]
        %v3781 = vld [vmem:[#allocation3 + $0x64] sm:$0xff]
        %v3782 = vld [vmem:[#allocation3 + $0x6c] sm:$0xff]
        %v3783 = vld [vmem:[#allocation3 + $0x74] sm:$0xff]
        %v3784 = vld [vmem:[#allocation3 + $0x7c] sm:$0xff]
        %v3785 = vld [vmem:[#allocation3 + $0x84] sm:$0xff]
        %v3786 = vld [vmem:[#allocation3 + $0x8c] sm:$0xff]
        %v3787 = vld [vmem:[#allocation3 + $0x94] sm:$0xff]
        %v3788 = vld [vmem:[#allocation3 + $0x9c] sm:$0xff]
        %v3789 = vld [vmem:[#allocation3 + $0xa4] sm:$0xff]
        %v3790 = vld [vmem:[#allocation3 + $0xac] sm:$0xff]
        %v3791 = vld [vmem:[#allocation3 + $0xb4] sm:$0xff]
        %v3792 = vld [vmem:[#allocation3 + $0xbc] sm:$0xff]
        %v3793 = vld [vmem:[#allocation3 + $0xc4] sm:$0xff]
        %v3794 = vld [vmem:[#allocation3 + $0xcc] sm:$0xff]
        %v3795 = vld [vmem:[#allocation3 + $0xd4] sm:$0xff]
        %v3796 = vld [vmem:[#allocation3 + $0xdc] sm:$0xff]
        %v3797 = vld [vmem:[#allocation3 + $0xe4] sm:$0xff]
        %v3798 = vld [vmem:[#allocation3 + $0xec] sm:$0xff]
        %v3799 = vld [vmem:[#allocation3 + $0xf4] sm:$0xff]
        %v3800 = vld [vmem:[#allocation3 + $0xfc] sm:$0xff]
        %v3801 = vld [vmem:[#allocation3 + $0x104] sm:$0xff]
        %v3802 = vld [vmem:[#allocation3 + $0x10c] sm:$0xff]
        %v3803 = vld [vmem:[#allocation3 + $0x114] sm:$0xff]
        %v3804 = vld [vmem:[#allocation3 + $0x11c] sm:$0xff]
        %v3805 = vld [vmem:[#allocation3 + $0x124] sm:$0xff]
        %v3806 = vld [vmem:[#allocation3 + $0x12c] sm:$0x3f]
        %v3807 = vpack.c.bf16 %v3772, %v3771
        %v3808 = vpack.c.bf16 %v3774, %v3773
        %v3809 = vpack.c.bf16 %v3776, %v3775
        %v3810 = vpack.c.bf16 %v3778, %v3777
        %v3811 = vpack.c.bf16 %v3780, %v3779
        %v3812 = vpack.c.bf16 %v3782, %v3781
        %v3813 = vpack.c.bf16 %v3784, %v3783
        %v3814 = vpack.c.bf16 %v3786, %v3785
        %v3815 = vpack.c.bf16 %v3788, %v3787
        %v3816 = vpack.c.bf16 %v3790, %v3789
        %v3817 = vpack.c.bf16 %v3792, %v3791
        %v3818 = vpack.c.bf16 %v3794, %v3793
        %v3819 = vpack.c.bf16 %v3796, %v3795
        %v3820 = vpack.c.bf16 %v3798, %v3797
        %v3821 = vpack.c.bf16 %v3800, %v3799
        %v3822 = vpack.c.bf16 %v3802, %v3801
        %v3823 = vpack.c.bf16 %v3804, %v3803
        %v3824 = vpack.c.bf16 %v3806, %v3805
        %v3825 = vld [vmem:[#allocation3 + $0x12c] sm:$0xff]
        %v3826 = vld [vmem:[#allocation3 + $0x134] sm:$0xff]
        %v3827 = vld [vmem:[#allocation3 + $0x13c] sm:$0x3f]
        %v3828 = vpack.c.bf16 %v3825, %v3805
        %v3829 = vpack.c.bf16 %v3827, %v3826
        %v3830 = vld [vmem:[#allocation3 + $0x25] sm:$0xff]
        %v3831 = vld [vmem:[#allocation3 + $0x2d] sm:$0xff]
        %v3832 = vld [vmem:[#allocation3 + $0x35] sm:$0xff]
        %v3833 = vld [vmem:[#allocation3 + $0x3d] sm:$0xff]
        %v3834 = vld [vmem:[#allocation3 + $0x45] sm:$0xff]
        %v3835 = vld [vmem:[#allocation3 + $0x4d] sm:$0xff]
        %v3836 = vld [vmem:[#allocation3 + $0x55] sm:$0xff]
        %v3837 = vld [vmem:[#allocation3 + $0x5d] sm:$0xff]
        %v3838 = vld [vmem:[#allocation3 + $0x65] sm:$0xff]
        %v3839 = vld [vmem:[#allocation3 + $0x6d] sm:$0xff]
        %v3840 = vld [vmem:[#allocation3 + $0x75] sm:$0xff]
        %v3841 = vld [vmem:[#allocation3 + $0x7d] sm:$0xff]
        %v3842 = vld [vmem:[#allocation3 + $0x85] sm:$0xff]
        %v3843 = vld [vmem:[#allocation3 + $0x8d] sm:$0xff]
        %v3844 = vld [vmem:[#allocation3 + $0x95] sm:$0xff]
        %v3845 = vld [vmem:[#allocation3 + $0x9d] sm:$0xff]
        %v3846 = vld [vmem:[#allocation3 + $0xa5] sm:$0xff]
        %v3847 = vld [vmem:[#allocation3 + $0xad] sm:$0xff]
        %v3848 = vld [vmem:[#allocation3 + $0xb5] sm:$0xff]
        %v3849 = vld [vmem:[#allocation3 + $0xbd] sm:$0xff]
        %v3850 = vld [vmem:[#allocation3 + $0xc5] sm:$0xff]
        %v3851 = vld [vmem:[#allocation3 + $0xcd] sm:$0xff]
        %v3852 = vld [vmem:[#allocation3 + $0xd5] sm:$0xff]
        %v3853 = vld [vmem:[#allocation3 + $0xdd] sm:$0xff]
        %v3854 = vld [vmem:[#allocation3 + $0xe5] sm:$0xff]
        %v3855 = vld [vmem:[#allocation3 + $0xed] sm:$0xff]
        %v3856 = vld [vmem:[#allocation3 + $0xf5] sm:$0xff]
        %v3857 = vld [vmem:[#allocation3 + $0xfd] sm:$0xff]
        %v3858 = vld [vmem:[#allocation3 + $0x105] sm:$0xff]
        %v3859 = vld [vmem:[#allocation3 + $0x10d] sm:$0xff]
        %v3860 = vld [vmem:[#allocation3 + $0x115] sm:$0xff]
        %v3861 = vld [vmem:[#allocation3 + $0x11d] sm:$0xff]
        %v3862 = vld [vmem:[#allocation3 + $0x125] sm:$0xff]
        %v3863 = vld [vmem:[#allocation3 + $0x12d] sm:$0xff]
        %v3864 = vld [vmem:[#allocation3 + $0x135] sm:$0xff]
        %v3865 = vld [vmem:[#allocation3 + $0x13d] sm:$0x3f]
        %v3866 = vpack.c.bf16 %v3831, %v3830
        %v3867 = vpack.c.bf16 %v3833, %v3832
        %v3868 = vpack.c.bf16 %v3835, %v3834
        %v3869 = vpack.c.bf16 %v3837, %v3836
        %v3870 = vpack.c.bf16 %v3839, %v3838
        %v3871 = vpack.c.bf16 %v3841, %v3840
        %v3872 = vpack.c.bf16 %v3843, %v3842
        %v3873 = vpack.c.bf16 %v3845, %v3844
        %v3874 = vpack.c.bf16 %v3847, %v3846
        %v3875 = vpack.c.bf16 %v3849, %v3848
        %v3876 = vpack.c.bf16 %v3851, %v3850
        %v3877 = vpack.c.bf16 %v3853, %v3852
        %v3878 = vpack.c.bf16 %v3855, %v3854
        %v3879 = vpack.c.bf16 %v3857, %v3856
        %v3880 = vpack.c.bf16 %v3859, %v3858
        %v3881 = vpack.c.bf16 %v3861, %v3860
        %v3882 = vpack.c.bf16 %v3863, %v3862
        %v3883 = vpack.c.bf16 %v3865, %v3864
        %v3884 = vld [vmem:[#allocation3 + $0x26] sm:$0xff]
        %v3885 = vld [vmem:[#allocation3 + $0x2e] sm:$0xff]
        %v3886 = vld [vmem:[#allocation3 + $0x36] sm:$0xff]
        %v3887 = vld [vmem:[#allocation3 + $0x3e] sm:$0xff]
        %v3888 = vld [vmem:[#allocation3 + $0x46] sm:$0xff]
        %v3889 = vld [vmem:[#allocation3 + $0x4e] sm:$0xff]
        %v3890 = vld [vmem:[#allocation3 + $0x56] sm:$0xff]
        %v3891 = vld [vmem:[#allocation3 + $0x5e] sm:$0xff]
        %v3892 = vld [vmem:[#allocation3 + $0x66] sm:$0xff]
        %v3893 = vld [vmem:[#allocation3 + $0x6e] sm:$0xff]
        %v3894 = vld [vmem:[#allocation3 + $0x76] sm:$0xff]
        %v3895 = vld [vmem:[#allocation3 + $0x7e] sm:$0xff]
        %v3896 = vld [vmem:[#allocation3 + $0x86] sm:$0xff]
        %v3897 = vld [vmem:[#allocation3 + $0x8e] sm:$0xff]
        %v3898 = vld [vmem:[#allocation3 + $0x96] sm:$0xff]
        %v3899 = vld [vmem:[#allocation3 + $0x9e] sm:$0xff]
        %v3900 = vld [vmem:[#allocation3 + $0xa6] sm:$0xff]
        %v3901 = vld [vmem:[#allocation3 + $0xae] sm:$0xff]
        %v3902 = vld [vmem:[#allocation3 + $0xb6] sm:$0xff]
        %v3903 = vld [vmem:[#allocation3 + $0xbe] sm:$0xff]
        %v3904 = vld [vmem:[#allocation3 + $0xc6] sm:$0xff]
        %v3905 = vld [vmem:[#allocation3 + $0xce] sm:$0xff]
        %v3906 = vld [vmem:[#allocation3 + $0xd6] sm:$0xff]
        %v3907 = vld [vmem:[#allocation3 + $0xde] sm:$0xff]
        %v3908 = vld [vmem:[#allocation3 + $0xe6] sm:$0xff]
        %v3909 = vld [vmem:[#allocation3 + $0xee] sm:$0xff]
        %v3910 = vld [vmem:[#allocation3 + $0xf6] sm:$0xff]
        %v3911 = vld [vmem:[#allocation3 + $0xfe] sm:$0xff]
        %v3912 = vld [vmem:[#allocation3 + $0x106] sm:$0xff]
        %v3913 = vld [vmem:[#allocation3 + $0x10e] sm:$0xff]
        %v3914 = vld [vmem:[#allocation3 + $0x116] sm:$0xff]
        %v3915 = vld [vmem:[#allocation3 + $0x11e] sm:$0xff]
        %v3916 = vld [vmem:[#allocation3 + $0x126] sm:$0xff]
        %v3917 = vld [vmem:[#allocation3 + $0x12e] sm:$0xff]
        %v3918 = vld [vmem:[#allocation3 + $0x136] sm:$0xff]
        %v3919 = vld [vmem:[#allocation3 + $0x13e] sm:$0x3f]
        %v3920 = vpack.c.bf16 %v3885, %v3884
        %v3921 = vpack.c.bf16 %v3887, %v3886
        %v3922 = vpack.c.bf16 %v3889, %v3888
        %v3923 = vpack.c.bf16 %v3891, %v3890
        %v3924 = vpack.c.bf16 %v3893, %v3892
        %v3925 = vpack.c.bf16 %v3895, %v3894
        %v3926 = vpack.c.bf16 %v3897, %v3896
        %v3927 = vpack.c.bf16 %v3899, %v3898
        %v3928 = vpack.c.bf16 %v3901, %v3900
        %v3929 = vpack.c.bf16 %v3903, %v3902
        %v3930 = vpack.c.bf16 %v3905, %v3904
        %v3931 = vpack.c.bf16 %v3907, %v3906
        %v3932 = vpack.c.bf16 %v3909, %v3908
        %v3933 = vpack.c.bf16 %v3911, %v3910
        %v3934 = vpack.c.bf16 %v3913, %v3912
        %v3935 = vpack.c.bf16 %v3915, %v3914
        %v3936 = vpack.c.bf16 %v3917, %v3916
        %v3937 = vpack.c.bf16 %v3919, %v3918
        %3956 = vrot.lane.b32.xlu0 %v3640, 32
        %v3957 = vpop.permute.xlu0 %3956
        %3958 = vrot.lane.b32.xlu0 %v3641, 32
        %v3959 = vpop.permute.xlu0 %3958
        %3960 = vrot.lane.b32.xlu0 %v3642, 32
        %v3961 = vpop.permute.xlu0 %3960
        %3962 = vrot.lane.b32.xlu0 %v3643, 32
        %v3963 = vpop.permute.xlu0 %3962
        %3964 = vrot.lane.b32.xlu0 %v3644, 32
        %v3965 = vpop.permute.xlu0 %3964
        %3966 = vrot.lane.b32.xlu0 %v3645, 32
        %v3967 = vpop.permute.xlu0 %3966
        %3968 = vrot.lane.b32.xlu0 %v3646, 32
        %v3969 = vpop.permute.xlu0 %3968
        %3970 = vrot.lane.b32.xlu0 %v3647, 32
        %v3971 = vpop.permute.xlu0 %3970
        %3972 = vrot.lane.b32.xlu0 %v3648, 32
        %v3973 = vpop.permute.xlu0 %3972
        %3974 = vrot.lane.b32.xlu0 %v3649, 32
        %v3975 = vpop.permute.xlu0 %3974
        %3976 = vrot.lane.b32.xlu0 %v3650, 32
        %v3977 = vpop.permute.xlu0 %3976
        %3978 = vrot.lane.b32.xlu0 %v3651, 32
        %v3979 = vpop.permute.xlu0 %3978
        %3980 = vrot.lane.b32.xlu0 %v3652, 32
        %v3981 = vpop.permute.xlu0 %3980
        %3982 = vrot.lane.b32.xlu0 %v3653, 32
        %v3983 = vpop.permute.xlu0 %3982
        %3984 = vrot.lane.b32.xlu0 %v3654, 32
        %v3985 = vpop.permute.xlu0 %3984
        %3986 = vrot.lane.b32.xlu0 %v3655, 32
        %v3987 = vpop.permute.xlu0 %3986
        %3988 = vrot.lane.b32.xlu0 %v3656, 32
        %v3989 = vpop.permute.xlu0 %3988
        %3990 = vrot.lane.b32.xlu0 %v3657, 32
        %v3991 = vpop.permute.xlu0 %3990
        %4010 = vrot.lane.b32.xlu0 %v3694, 64
        %v4011 = vpop.permute.xlu0 %4010
        %4012 = vrot.lane.b32.xlu0 %v3695, 64
        %v4013 = vpop.permute.xlu0 %4012
        %4014 = vrot.lane.b32.xlu0 %v3696, 64
        %v4015 = vpop.permute.xlu0 %4014
        %4016 = vrot.lane.b32.xlu0 %v3697, 64
        %v4017 = vpop.permute.xlu0 %4016
        %4018 = vrot.lane.b32.xlu0 %v3698, 64
        %v4019 = vpop.permute.xlu0 %4018
        %4020 = vrot.lane.b32.xlu0 %v3699, 64
        %v4021 = vpop.permute.xlu0 %4020
        %4022 = vrot.lane.b32.xlu0 %v3700, 64
        %v4023 = vpop.permute.xlu0 %4022
        %4024 = vrot.lane.b32.xlu0 %v3701, 64
        %v4025 = vpop.permute.xlu0 %4024
        %4026 = vrot.lane.b32.xlu0 %v3702, 64
        %v4027 = vpop.permute.xlu0 %4026
        %4028 = vrot.lane.b32.xlu0 %v3703, 64
        %v4029 = vpop.permute.xlu0 %4028
        %4030 = vrot.lane.b32.xlu0 %v3704, 64
        %v4031 = vpop.permute.xlu0 %4030
        %4032 = vrot.lane.b32.xlu0 %v3705, 64
        %v4033 = vpop.permute.xlu0 %4032
        %4034 = vrot.lane.b32.xlu0 %v3706, 64
        %v4035 = vpop.permute.xlu0 %4034
        %4036 = vrot.lane.b32.xlu0 %v3707, 64
        %v4037 = vpop.permute.xlu0 %4036
        %4038 = vrot.lane.b32.xlu0 %v3708, 64
        %v4039 = vpop.permute.xlu0 %4038
        %4040 = vrot.lane.b32.xlu0 %v3709, 64
        %v4041 = vpop.permute.xlu0 %4040
        %4042 = vrot.lane.b32.xlu0 %v3710, 64
        %v4043 = vpop.permute.xlu0 %4042
        %4044 = vrot.lane.b32.xlu0 %v3711, 64
        %v4045 = vpop.permute.xlu0 %4044
        %4048 = vrot.lane.b32.xlu0 %v3695, 96
        %v4049 = vpop.permute.xlu0 %4048
        %4050 = vrot.lane.b32.xlu0 %v3696, 96
        %v4051 = vpop.permute.xlu0 %4050
        %4052 = vrot.lane.b32.xlu0 %v3697, 96
        %v4053 = vpop.permute.xlu0 %4052
        %4054 = vrot.lane.b32.xlu0 %v3698, 96
        %v4055 = vpop.permute.xlu0 %4054
        %4056 = vrot.lane.b32.xlu0 %v3699, 96
        %v4057 = vpop.permute.xlu0 %4056
        %4058 = vrot.lane.b32.xlu0 %v3700, 96
        %v4059 = vpop.permute.xlu0 %4058
        %4060 = vrot.lane.b32.xlu0 %v3701, 96
        %v4061 = vpop.permute.xlu0 %4060
        %4062 = vrot.lane.b32.xlu0 %v3702, 96
        %v4063 = vpop.permute.xlu0 %4062
        %4064 = vrot.lane.b32.xlu0 %v3703, 96
        %v4065 = vpop.permute.xlu0 %4064
        %4066 = vrot.lane.b32.xlu0 %v3704, 96
        %v4067 = vpop.permute.xlu0 %4066
        %4068 = vrot.lane.b32.xlu0 %v3705, 96
        %v4069 = vpop.permute.xlu0 %4068
        %4070 = vrot.lane.b32.xlu0 %v3706, 96
        %v4071 = vpop.permute.xlu0 %4070
        %4072 = vrot.lane.b32.xlu0 %v3707, 96
        %v4073 = vpop.permute.xlu0 %4072
        %4074 = vrot.lane.b32.xlu0 %v3708, 96
        %v4075 = vpop.permute.xlu0 %4074
        %4076 = vrot.lane.b32.xlu0 %v3709, 96
        %v4077 = vpop.permute.xlu0 %4076
        %4078 = vrot.lane.b32.xlu0 %v3710, 96
        %v4079 = vpop.permute.xlu0 %4078
        %4080 = vrot.lane.b32.xlu0 %v3715, 96
        %v4081 = vpop.permute.xlu0 %4080
        %4082 = vrot.lane.b32.xlu0 %v3716, 96
        %v4083 = vpop.permute.xlu0 %4082
        %4102 = vrot.lane.b32.xlu0 %v3807, 32
        %v4103 = vpop.permute.xlu0 %4102
        %4104 = vrot.lane.b32.xlu0 %v3808, 32
        %v4105 = vpop.permute.xlu0 %4104
        %4106 = vrot.lane.b32.xlu0 %v3809, 32
        %v4107 = vpop.permute.xlu0 %4106
        %4108 = vrot.lane.b32.xlu0 %v3810, 32
        %v4109 = vpop.permute.xlu0 %4108
        %4110 = vrot.lane.b32.xlu0 %v3811, 32
        %v4111 = vpop.permute.xlu0 %4110
        %4112 = vrot.lane.b32.xlu0 %v3812, 32
        %v4113 = vpop.permute.xlu0 %4112
        %4114 = vrot.lane.b32.xlu0 %v3813, 32
        %v4115 = vpop.permute.xlu0 %4114
        %4116 = vrot.lane.b32.xlu0 %v3814, 32
        %v4117 = vpop.permute.xlu0 %4116
        %4118 = vrot.lane.b32.xlu0 %v3815, 32
        %v4119 = vpop.permute.xlu0 %4118
        %4120 = vrot.lane.b32.xlu0 %v3816, 32
        %v4121 = vpop.permute.xlu0 %4120
        %4122 = vrot.lane.b32.xlu0 %v3817, 32
        %v4123 = vpop.permute.xlu0 %4122
        %4124 = vrot.lane.b32.xlu0 %v3818, 32
        %v4125 = vpop.permute.xlu0 %4124
        %4126 = vrot.lane.b32.xlu0 %v3819, 32
        %v4127 = vpop.permute.xlu0 %4126
        %4128 = vrot.lane.b32.xlu0 %v3820, 32
        %v4129 = vpop.permute.xlu0 %4128
        %4130 = vrot.lane.b32.xlu0 %v3821, 32
        %v4131 = vpop.permute.xlu0 %4130
        %4132 = vrot.lane.b32.xlu0 %v3822, 32
        %v4133 = vpop.permute.xlu0 %4132
        %4134 = vrot.lane.b32.xlu0 %v3823, 32
        %v4135 = vpop.permute.xlu0 %4134
        %4136 = vrot.lane.b32.xlu0 %v3824, 32
        %v4137 = vpop.permute.xlu0 %4136
        %4140 = vrot.lane.b32.xlu0 %v3808, 64
        %v4141 = vpop.permute.xlu0 %4140
        %4142 = vrot.lane.b32.xlu0 %v3809, 64
        %v4143 = vpop.permute.xlu0 %4142
        %4144 = vrot.lane.b32.xlu0 %v3810, 64
        %v4145 = vpop.permute.xlu0 %4144
        %4146 = vrot.lane.b32.xlu0 %v3811, 64
        %v4147 = vpop.permute.xlu0 %4146
        %4148 = vrot.lane.b32.xlu0 %v3812, 64
        %v4149 = vpop.permute.xlu0 %4148
        %4150 = vrot.lane.b32.xlu0 %v3813, 64
        %v4151 = vpop.permute.xlu0 %4150
        %4152 = vrot.lane.b32.xlu0 %v3814, 64
        %v4153 = vpop.permute.xlu0 %4152
        %4154 = vrot.lane.b32.xlu0 %v3815, 64
        %v4155 = vpop.permute.xlu0 %4154
        %4156 = vrot.lane.b32.xlu0 %v3816, 64
        %v4157 = vpop.permute.xlu0 %4156
        %4158 = vrot.lane.b32.xlu0 %v3817, 64
        %v4159 = vpop.permute.xlu0 %4158
        %4160 = vrot.lane.b32.xlu0 %v3818, 64
        %v4161 = vpop.permute.xlu0 %4160
        %4162 = vrot.lane.b32.xlu0 %v3819, 64
        %v4163 = vpop.permute.xlu0 %4162
        %4164 = vrot.lane.b32.xlu0 %v3820, 64
        %v4165 = vpop.permute.xlu0 %4164
        %4166 = vrot.lane.b32.xlu0 %v3821, 64
        %v4167 = vpop.permute.xlu0 %4166
        %4168 = vrot.lane.b32.xlu0 %v3822, 64
        %v4169 = vpop.permute.xlu0 %4168
        %4170 = vrot.lane.b32.xlu0 %v3823, 64
        %v4171 = vpop.permute.xlu0 %4170
        %4172 = vrot.lane.b32.xlu0 %v3828, 64
        %v4173 = vpop.permute.xlu0 %4172
        %4174 = vrot.lane.b32.xlu0 %v3829, 64
        %v4175 = vpop.permute.xlu0 %4174
        %4194 = vrot.lane.b32.xlu0 %v3866, 96
        %v4195 = vpop.permute.xlu0 %4194
        %4196 = vrot.lane.b32.xlu0 %v3867, 96
        %v4197 = vpop.permute.xlu0 %4196
        %4198 = vrot.lane.b32.xlu0 %v3868, 96
        %v4199 = vpop.permute.xlu0 %4198
        %4200 = vrot.lane.b32.xlu0 %v3869, 96
        %v4201 = vpop.permute.xlu0 %4200
        %4202 = vrot.lane.b32.xlu0 %v3870, 96
        %v4203 = vpop.permute.xlu0 %4202
        %4204 = vrot.lane.b32.xlu0 %v3871, 96
        %v4205 = vpop.permute.xlu0 %4204
        %4206 = vrot.lane.b32.xlu0 %v3872, 96
        %v4207 = vpop.permute.xlu0 %4206
        %4208 = vrot.lane.b32.xlu0 %v3873, 96
        %v4209 = vpop.permute.xlu0 %4208
        %4210 = vrot.lane.b32.xlu0 %v3874, 96
        %v4211 = vpop.permute.xlu0 %4210
        %4212 = vrot.lane.b32.xlu0 %v3875, 96
        %v4213 = vpop.permute.xlu0 %4212
        %4214 = vrot.lane.b32.xlu0 %v3876, 96
        %v4215 = vpop.permute.xlu0 %4214
        %4216 = vrot.lane.b32.xlu0 %v3877, 96
        %v4217 = vpop.permute.xlu0 %4216
        %4218 = vrot.lane.b32.xlu0 %v3878, 96
        %v4219 = vpop.permute.xlu0 %4218
        %4220 = vrot.lane.b32.xlu0 %v3879, 96
        %v4221 = vpop.permute.xlu0 %4220
        %4222 = vrot.lane.b32.xlu0 %v3880, 96
        %v4223 = vpop.permute.xlu0 %4222
        %4224 = vrot.lane.b32.xlu0 %v3881, 96
        %v4225 = vpop.permute.xlu0 %4224
        %4226 = vrot.lane.b32.xlu0 %v3882, 96
        %v4227 = vpop.permute.xlu0 %4226
        %4228 = vrot.lane.b32.xlu0 %v3883, 96
        %v4229 = vpop.permute.xlu0 %4228
        %v4232 = vsel %vm2927, %v3586, %v3957
        %v4235 = vsel %vm2927, %v3587, %v3959
        %v4238 = vsel %vm2927, %v3588, %v3961
        %v4241 = vsel %vm2927, %v3589, %v3963
        %v4244 = vsel %vm2927, %v3590, %v3965
        %v4247 = vsel %vm2927, %v3591, %v3967
        %v4250 = vsel %vm2927, %v3592, %v3969
        %v4253 = vsel %vm2927, %v3593, %v3971
        %v4256 = vsel %vm2927, %v3594, %v3973
        %v4259 = vsel %vm2927, %v3595, %v3975
        %v4262 = vsel %vm2927, %v3596, %v3977
        %v4265 = vsel %vm2927, %v3597, %v3979
        %v4268 = vsel %vm2927, %v3598, %v3981
        %v4271 = vsel %vm2927, %v3599, %v3983
        %v4274 = vsel %vm2927, %v3600, %v3985
        %v4277 = vsel %vm2927, %v3601, %v3987
        %v4280 = vsel %vm2927, %v3602, %v3989
        %v4283 = vsel %vm2927, %v3603, %v3991
        %vm4284 = vcmask 523264
        %v4286 = vsel %vm4284, %v4232, %v4011
        %v4288 = vsel %vm4284, %v4235, %v4013
        %v4290 = vsel %vm4284, %v4238, %v4015
        %v4292 = vsel %vm4284, %v4241, %v4017
        %v4294 = vsel %vm4284, %v4244, %v4019
        %v4296 = vsel %vm4284, %v4247, %v4021
        %v4298 = vsel %vm4284, %v4250, %v4023
        %v4300 = vsel %vm4284, %v4253, %v4025
        %v4302 = vsel %vm4284, %v4256, %v4027
        %v4304 = vsel %vm4284, %v4259, %v4029
        %v4306 = vsel %vm4284, %v4262, %v4031
        %v4308 = vsel %vm4284, %v4265, %v4033
        %v4310 = vsel %vm4284, %v4268, %v4035
        %v4312 = vsel %vm4284, %v4271, %v4037
        %v4314 = vsel %vm4284, %v4274, %v4039
        %v4316 = vsel %vm4284, %v4277, %v4041
        %v4318 = vsel %vm4284, %v4280, %v4043
        %v4320 = vsel %vm4284, %v4283, %v4045
        %vm4321 = vcmask 785408
        %v4323 = vsel %vm4321, %v4286, %v4049
        %v4326 = vsel %vm4321, %v4288, %v4051
        %v4329 = vsel %vm4321, %v4290, %v4053
        %v4332 = vsel %vm4321, %v4292, %v4055
        %v4335 = vsel %vm4321, %v4294, %v4057
        %v4338 = vsel %vm4321, %v4296, %v4059
        %v4341 = vsel %vm4321, %v4298, %v4061
        %v4344 = vsel %vm4321, %v4300, %v4063
        %v4347 = vsel %vm4321, %v4302, %v4065
        %v4350 = vsel %vm4321, %v4304, %v4067
        %v4353 = vsel %vm4321, %v4306, %v4069
        %v4356 = vsel %vm4321, %v4308, %v4071
        %v4359 = vsel %vm4321, %v4310, %v4073
        %v4362 = vsel %vm4321, %v4312, %v4075
        %v4365 = vsel %vm4321, %v4314, %v4077
        %v4368 = vsel %vm4321, %v4316, %v4079
        %v4371 = vsel %vm4321, %v4318, %v4081
        %v4374 = vsel %vm4321, %v4320, %v4083
        %v4378 = vsel %vm2927, %v3753, %v4103
        %v4381 = vsel %vm2927, %v3754, %v4105
        %v4384 = vsel %vm2927, %v3755, %v4107
        %v4387 = vsel %vm2927, %v3756, %v4109
        %v4390 = vsel %vm2927, %v3757, %v4111
        %v4393 = vsel %vm2927, %v3758, %v4113
        %v4396 = vsel %vm2927, %v3759, %v4115
        %v4399 = vsel %vm2927, %v3760, %v4117
        %v4402 = vsel %vm2927, %v3761, %v4119
        %v4405 = vsel %vm2927, %v3762, %v4121
        %v4408 = vsel %vm2927, %v3763, %v4123
        %v4411 = vsel %vm2927, %v3764, %v4125
        %v4414 = vsel %vm2927, %v3765, %v4127
        %v4417 = vsel %vm2927, %v3766, %v4129
        %v4420 = vsel %vm2927, %v3767, %v4131
        %v4423 = vsel %vm2927, %v3768, %v4133
        %v4426 = vsel %vm2927, %v3769, %v4135
        %v4429 = vsel %vm2927, %v3770, %v4137
        %v4431 = vsel %vm4284, %v4378, %v4141
        %v4433 = vsel %vm4284, %v4381, %v4143
        %v4435 = vsel %vm4284, %v4384, %v4145
        %v4437 = vsel %vm4284, %v4387, %v4147
        %v4439 = vsel %vm4284, %v4390, %v4149
        %v4441 = vsel %vm4284, %v4393, %v4151
        %v4443 = vsel %vm4284, %v4396, %v4153
        %v4445 = vsel %vm4284, %v4399, %v4155
        %v4447 = vsel %vm4284, %v4402, %v4157
        %v4449 = vsel %vm4284, %v4405, %v4159
        %v4451 = vsel %vm4284, %v4408, %v4161
        %v4453 = vsel %vm4284, %v4411, %v4163
        %v4455 = vsel %vm4284, %v4414, %v4165
        %v4457 = vsel %vm4284, %v4417, %v4167
        %v4459 = vsel %vm4284, %v4420, %v4169
        %v4461 = vsel %vm4284, %v4423, %v4171
        %v4463 = vsel %vm4284, %v4426, %v4173
        %v4465 = vsel %vm4284, %v4429, %v4175
        %v4467 = vsel %vm4321, %v4431, %v4195
        %v4470 = vsel %vm4321, %v4433, %v4197
        %v4473 = vsel %vm4321, %v4435, %v4199
        %v4476 = vsel %vm4321, %v4437, %v4201
        %v4479 = vsel %vm4321, %v4439, %v4203
        %v4482 = vsel %vm4321, %v4441, %v4205
        %v4485 = vsel %vm4321, %v4443, %v4207
        %v4488 = vsel %vm4321, %v4445, %v4209
        %v4491 = vsel %vm4321, %v4447, %v4211
        %v4494 = vsel %vm4321, %v4449, %v4213
        %v4497 = vsel %vm4321, %v4451, %v4215
        %v4500 = vsel %vm4321, %v4453, %v4217
        %v4503 = vsel %vm4321, %v4455, %v4219
        %v4506 = vsel %vm4321, %v4457, %v4221
        %v4509 = vsel %vm4321, %v4459, %v4223
        %v4512 = vsel %vm4321, %v4461, %v4225
        %v4515 = vsel %vm4321, %v4463, %v4227
        %v4518 = vsel %vm4321, %v4465, %v4229
        %v4520 = vld [vmem:[%s6] sm:$0xf]
        %v4521 = vld [vmem:[%s6 + $0x4] sm:$0xf]
        %v4522 = vld [vmem:[%s6 + $0x8] sm:$0xf]
        %v4523 = vld [vmem:[%s6 + $0xc] sm:$0xf]
        %v4524 = vld [vmem:[%s6 + $0x10] sm:$0xf]
        %v4525 = vld [vmem:[%s6 + $0x14] sm:$0xf]
        %v4526 = vld [vmem:[%s6 + $0x18] sm:$0xf]
        %v4527 = vld [vmem:[%s6 + $0x1c] sm:$0xf]
        %v4528 = vld [vmem:[%s6 + $0x20] sm:$0xf]
        %v4529 = vld [vmem:[%s6 + $0x24] sm:$0xf]
        %v4530 = vld [vmem:[%s6 + $0x28] sm:$0xf]
        %v4531 = vld [vmem:[%s6 + $0x2c] sm:$0xf]
        %v4532 = vld [vmem:[%s6 + $0x30] sm:$0xf]
        %v4533 = vld [vmem:[%s6 + $0x34] sm:$0xf]
        %v4534 = vld [vmem:[%s6 + $0x38] sm:$0xf]
        %v4535 = vld [vmem:[%s6 + $0x3c] sm:$0xf]
        %v4536 = vld [vmem:[%s6 + $0x40] sm:$0xf]
        %v4537 = vld [vmem:[%s6 + $0x44] sm:$0xf]
        %v4538 = vld [vmem:[%s6 + $0x48] sm:$0xf]
        %v4539 = vld [vmem:[%s6 + $0x4c] sm:$0xf]
        %v4540 = vld [vmem:[%s6 + $0x50] sm:$0xf]
        %v4541 = vld [vmem:[%s6 + $0x54] sm:$0xf]
        %v4542 = vld [vmem:[%s6 + $0x58] sm:$0xf]
        %v4543 = vld [vmem:[%s6 + $0x5c] sm:$0xf]
        %v4544 = vld [vmem:[%s6 + $0x60] sm:$0xf]
        %v4545 = vld [vmem:[%s6 + $0x64] sm:$0xf]
        %v4546 = vld [vmem:[%s6 + $0x68] sm:$0xf]
        %v4547 = vld [vmem:[%s6 + $0x6c] sm:$0xf]
        %v4548 = vld [vmem:[%s6 + $0x70] sm:$0xf]
        %v4549 = vld [vmem:[%s6 + $0x74] sm:$0xf]
        %v4550 = vld [vmem:[%s6 + $0x78] sm:$0xf]
        %v4551 = vld [vmem:[%s6 + $0x7c] sm:$0xf]
        %v4552 = vld [vmem:[%s6 + $0x80] sm:$0xf]
        %v4553 = vld [vmem:[%s6 + $0x84] sm:$0xf]
        %v4554 = vld [vmem:[%s6 + $0x88] sm:$0xf]
        %v4555 = vld [vmem:[%s6 + $0x8c] sm:$0xf]
        %v4556 = vld [vmem:[%s7] sm:$0x1]
        %v4558 = vlaneseq
        %v4559 = vshrl.u32 %v4558, 7
        %v4560 = vsub.s32 0, %v4559
        %v4561 = vrot.slane %v4556, %v4560
        %v4599 = vunpack.c.l.b16 %v4520
        %v4600 = vunpack.c.l.b16 %v4521
        %v4601 = vunpack.c.l.b16 %v4522
        %v4602 = vunpack.c.l.b16 %v4523
        %v4603 = vunpack.c.l.b16 %v4524
        %v4604 = vunpack.c.l.b16 %v4525
        %v4605 = vunpack.c.l.b16 %v4526
        %v4606 = vunpack.c.l.b16 %v4527
        %v4607 = vunpack.c.l.b16 %v4528
        %v4608 = vunpack.c.l.b16 %v4529
        %v4609 = vunpack.c.l.b16 %v4530
        %v4610 = vunpack.c.l.b16 %v4531
        %v4611 = vunpack.c.l.b16 %v4532
        %v4612 = vunpack.c.l.b16 %v4533
        %v4613 = vunpack.c.l.b16 %v4534
        %v4614 = vunpack.c.l.b16 %v4535
        %v4615 = vunpack.c.l.b16 %v4536
        %v4616 = vunpack.c.l.b16 %v4537
        %v4617 = vunpack.c.l.b16 %v4538
        %v4618 = vunpack.c.l.b16 %v4539
        %v4619 = vunpack.c.l.b16 %v4540
        %v4620 = vunpack.c.l.b16 %v4541
        %v4621 = vunpack.c.l.b16 %v4542
        %v4622 = vunpack.c.l.b16 %v4543
        %v4623 = vunpack.c.l.b16 %v4544
        %v4624 = vunpack.c.l.b16 %v4545
        %v4625 = vunpack.c.l.b16 %v4546
        %v4626 = vunpack.c.l.b16 %v4547
        %v4627 = vunpack.c.l.b16 %v4548
        %v4628 = vunpack.c.l.b16 %v4549
        %v4629 = vunpack.c.l.b16 %v4550
        %v4630 = vunpack.c.l.b16 %v4551
        %v4631 = vunpack.c.l.b16 %v4552
        %v4632 = vunpack.c.l.b16 %v4553
        %v4633 = vunpack.c.l.b16 %v4554
        %v4634 = vunpack.c.l.b16 %v4555
        %v4635 = vpack.c.b16 %v4600, %v4599
        %v4636 = vpack.c.b16 %v4602, %v4601
        %v4637 = vpack.c.b16 %v4604, %v4603
        %v4638 = vpack.c.b16 %v4606, %v4605
        %v4639 = vpack.c.b16 %v4608, %v4607
        %v4640 = vpack.c.b16 %v4610, %v4609
        %v4641 = vpack.c.b16 %v4612, %v4611
        %v4642 = vpack.c.b16 %v4614, %v4613
        %v4643 = vpack.c.b16 %v4616, %v4615
        %v4644 = vpack.c.b16 %v4618, %v4617
        %v4645 = vpack.c.b16 %v4620, %v4619
        %v4646 = vpack.c.b16 %v4622, %v4621
        %v4647 = vpack.c.b16 %v4624, %v4623
        %v4648 = vpack.c.b16 %v4626, %v4625
        %v4649 = vpack.c.b16 %v4628, %v4627
        %v4650 = vpack.c.b16 %v4630, %v4629
        %v4651 = vpack.c.b16 %v4632, %v4631
        %v4652 = vpack.c.b16 %v4634, %v4633
        %v4672 = vsel %vm2927, %v3920, 0
        %v4675 = vsel %vm2927, %v3921, 0
        %v4678 = vsel %vm2927, %v3922, 0
        %v4681 = vsel %vm2927, %v3923, 0
        %v4684 = vsel %vm2927, %v3924, 0
        %v4687 = vsel %vm2927, %v3925, 0
        %v4690 = vsel %vm2927, %v3926, 0
        %v4693 = vsel %vm2927, %v3927, 0
        %v4696 = vsel %vm2927, %v3928, 0
        %v4699 = vsel %vm2927, %v3929, 0
        %v4702 = vsel %vm2927, %v3930, 0
        %v4705 = vsel %vm2927, %v3931, 0
        %v4708 = vsel %vm2927, %v3932, 0
        %v4711 = vsel %vm2927, %v3933, 0
        %v4714 = vsel %vm2927, %v3934, 0
        %v4717 = vsel %vm2927, %v3935, 0
        %v4720 = vsel %vm2927, %v3936, 0
        %v4723 = vsel %vm2927, %v3937, 0
        %4725 = vmatprep.subr.bf16.mxu0 0
        %4726 = vmatpush1.bf16.msra.mxu0 %v4635
        %4727 = vmatprep.subr.bf16.mxu0 0
        %4728 = vmatpush1.bf16.msra.mxu0 %v4636
        %4729 = vmatprep.subr.bf16.mxu0 0
        %4730 = vmatpush1.bf16.msra.mxu0 %v4637
        %4731 = vmatprep.subr.bf16.mxu0 0
        %4732 = vmatpush1.bf16.msra.mxu0 %v4638
        %4733 = vmatprep.subr.bf16.mxu0 0
        %4734 = vmatpush1.bf16.msra.mxu0 %v4639
        %4735 = vmatprep.subr.bf16.mxu0 0
        %4736 = vmatpush1.bf16.msra.mxu0 %v4640
        %4737 = vmatprep.subr.bf16.mxu0 0
        %4738 = vmatpush1.bf16.msra.mxu0 %v4641
        %4739 = vmatprep.subr.bf16.mxu0 0
        %4740 = vmatpush1.bf16.msra.mxu0 %v4642
        %4741 = vmatprep.subr.bf16.mxu0 0
        %4742 = vmatpush1.bf16.msra.mxu0 %v4643
        %4743 = vmatprep.subr.bf16.mxu0 0
        %4744 = vmatpush1.bf16.msra.mxu0 %v4644
        %4745 = vmatprep.subr.bf16.mxu0 0
        %4746 = vmatpush1.bf16.msra.mxu0 %v4645
        %4747 = vmatprep.subr.bf16.mxu0 0
        %4748 = vmatpush1.bf16.msra.mxu0 %v4646
        %4749 = vmatprep.subr.bf16.mxu0 0
        %4750 = vmatpush1.bf16.msra.mxu0 %v4647
        %4751 = vmatprep.subr.bf16.mxu0 0
        %4752 = vmatpush1.bf16.msra.mxu0 %v4648
        %4753 = vmatprep.subr.bf16.mxu0 0
        %4754 = vmatpush1.bf16.msra.mxu0 %v4649
        %4755 = vmatprep.subr.bf16.mxu0 0
        %4756 = vmatpush1.bf16.msra.mxu0 %v4650
        %4757 = vmatprep.mubr.bf16.mxu0 %v4467
        %4758 = vmatmul.mubr.bf16.gmra.mrb[0].mxu0 %v4323
        %v4759 = vpop.f32.mrb[0].mxu0
        %v4760 = vadd.f32 %v4561, %v4759
        %v4761 = vpop.f32.mrb[0].mxu0
        %v4762 = vpop.f32.mrb[0].mxu0
        %v4763 = vadd.f32 %v4561, %v4762
        %v4764 = vpop.f32.mrb[0].mxu0
        %4765 = vmatprep.mubr.bf16.mxu0 %v4470
        %4766 = vmatmul.mubr.bf16.gmra.mrb[0].mxu0 %v4326
        %v4767 = vpop.f32.mrb[0].mxu0
        %v4768 = vadd.f32 %v4561, %v4767
        %v4769 = vpop.f32.mrb[0].mxu0
        %v4770 = vpop.f32.mrb[0].mxu0
        %v4771 = vadd.f32 %v4561, %v4770
        %v4772 = vpop.f32.mrb[0].mxu0
        %4773 = vmatprep.mubr.bf16.mxu0 %v4473
        %4774 = vmatmul.mubr.bf16.gmra.mrb[0].mxu0 %v4329
        %v4775 = vpop.f32.mrb[0].mxu0
        %v4776 = vadd.f32 %v4561, %v4775
        %v4777 = vpop.f32.mrb[0].mxu0
        %v4778 = vpop.f32.mrb[0].mxu0
        %v4779 = vadd.f32 %v4561, %v4778
        %v4780 = vpop.f32.mrb[0].mxu0
        %4781 = vmatprep.mubr.bf16.mxu0 %v4476
        %4782 = vmatmul.mubr.bf16.gmra.mrb[0].mxu0 %v4332
        %v4783 = vpop.f32.mrb[0].mxu0
        %v4784 = vadd.f32 %v4561, %v4783
        %v4785 = vpop.f32.mrb[0].mxu0
        %v4786 = vpop.f32.mrb[0].mxu0
        %v4787 = vadd.f32 %v4561, %v4786
        %v4788 = vpop.f32.mrb[0].mxu0
        %4789 = vmatprep.mubr.bf16.mxu0 %v4479
        %4790 = vmatmul.mubr.bf16.gmra.mrb[0].mxu0 %v4335
        %v4791 = vpop.f32.mrb[0].mxu0
        %v4792 = vadd.f32 %v4561, %v4791
        %v4793 = vpop.f32.mrb[0].mxu0
        %v4794 = vpop.f32.mrb[0].mxu0
        %v4795 = vadd.f32 %v4561, %v4794
        %v4796 = vpop.f32.mrb[0].mxu0
        %4797 = vmatprep.mubr.bf16.mxu0 %v4482
        %4798 = vmatmul.mubr.bf16.gmra.mrb[0].mxu0 %v4338
        %v4799 = vpop.f32.mrb[0].mxu0
        %v4800 = vadd.f32 %v4561, %v4799
        %v4801 = vpop.f32.mrb[0].mxu0
        %v4802 = vpop.f32.mrb[0].mxu0
        %v4803 = vadd.f32 %v4561, %v4802
        %v4804 = vpop.f32.mrb[0].mxu0
        %4805 = vmatprep.mubr.bf16.mxu0 %v4485
        %4806 = vmatmul.mubr.bf16.gmra.mrb[0].mxu0 %v4341
        %v4807 = vpop.f32.mrb[0].mxu0
        %v4808 = vadd.f32 %v4561, %v4807
        %v4809 = vpop.f32.mrb[0].mxu0
        %v4810 = vpop.f32.mrb[0].mxu0
        %v4811 = vadd.f32 %v4561, %v4810
        %v4812 = vpop.f32.mrb[0].mxu0
        %4813 = vmatprep.mubr.bf16.mxu0 %v4488
        %4814 = vmatmul.mubr.bf16.gmra.mrb[0].mxu0 %v4344
        %v4815 = vpop.f32.mrb[0].mxu0
        %v4816 = vadd.f32 %v4561, %v4815
        %v4817 = vpop.f32.mrb[0].mxu0
        %v4818 = vpop.f32.mrb[0].mxu0
        %v4819 = vadd.f32 %v4561, %v4818
        %v4820 = vpop.f32.mrb[0].mxu0
        %4821 = vmatprep.mubr.bf16.mxu0 %v4491
        %4822 = vmatmul.mubr.bf16.gmra.mrb[0].mxu0 %v4347
        %v4823 = vpop.f32.mrb[0].mxu0
        %v4824 = vadd.f32 %v4561, %v4823
        %v4825 = vpop.f32.mrb[0].mxu0
        %v4826 = vpop.f32.mrb[0].mxu0
        %v4827 = vadd.f32 %v4561, %v4826
        %v4828 = vpop.f32.mrb[0].mxu0
        %4829 = vmatprep.mubr.bf16.mxu0 %v4494
        %4830 = vmatmul.mubr.bf16.gmra.mrb[0].mxu0 %v4350
        %v4831 = vpop.f32.mrb[0].mxu0
        %v4832 = vadd.f32 %v4561, %v4831
        %v4833 = vpop.f32.mrb[0].mxu0
        %v4834 = vpop.f32.mrb[0].mxu0
        %v4835 = vadd.f32 %v4561, %v4834
        %v4836 = vpop.f32.mrb[0].mxu0
        %4837 = vmatprep.mubr.bf16.mxu0 %v4497
        %4838 = vmatmul.mubr.bf16.gmra.mrb[0].mxu0 %v4353
        %v4839 = vpop.f32.mrb[0].mxu0
        %v4840 = vadd.f32 %v4561, %v4839
        %v4841 = vpop.f32.mrb[0].mxu0
        %v4842 = vpop.f32.mrb[0].mxu0
        %v4843 = vadd.f32 %v4561, %v4842
        %v4844 = vpop.f32.mrb[0].mxu0
        %4845 = vmatprep.mubr.bf16.mxu0 %v4500
        %4846 = vmatmul.mubr.bf16.gmra.mrb[0].mxu0 %v4356
        %v4847 = vpop.f32.mrb[0].mxu0
        %v4848 = vadd.f32 %v4561, %v4847
        %v4849 = vpop.f32.mrb[0].mxu0
        %v4850 = vpop.f32.mrb[0].mxu0
        %v4851 = vadd.f32 %v4561, %v4850
        %v4852 = vpop.f32.mrb[0].mxu0
        %4853 = vmatprep.mubr.bf16.mxu0 %v4503
        %4854 = vmatmul.mubr.bf16.gmra.mrb[0].mxu0 %v4359
        %v4855 = vpop.f32.mrb[0].mxu0
        %v4856 = vadd.f32 %v4561, %v4855
        %v4857 = vpop.f32.mrb[0].mxu0
        %v4858 = vpop.f32.mrb[0].mxu0
        %v4859 = vadd.f32 %v4561, %v4858
        %v4860 = vpop.f32.mrb[0].mxu0
        %4861 = vmatprep.mubr.bf16.mxu0 %v4506
        %4862 = vmatmul.mubr.bf16.gmra.mrb[0].mxu0 %v4362
        %v4863 = vpop.f32.mrb[0].mxu0
        %v4864 = vadd.f32 %v4561, %v4863
        %v4865 = vpop.f32.mrb[0].mxu0
        %v4866 = vpop.f32.mrb[0].mxu0
        %v4867 = vadd.f32 %v4561, %v4866
        %v4868 = vpop.f32.mrb[0].mxu0
        %4869 = vmatprep.mubr.bf16.mxu0 %v4509
        %4870 = vmatmul.mubr.bf16.gmra.mrb[0].mxu0 %v4365
        %v4871 = vpop.f32.mrb[0].mxu0
        %v4872 = vadd.f32 %v4561, %v4871
        %v4873 = vpop.f32.mrb[0].mxu0
        %v4874 = vpop.f32.mrb[0].mxu0
        %v4875 = vadd.f32 %v4561, %v4874
        %v4876 = vpop.f32.mrb[0].mxu0
        %4877 = vmatprep.mubr.bf16.mxu0 %v4512
        %4878 = vmatmul.mubr.bf16.gmra.mrb[0].mxu0 %v4368
        %v4879 = vpop.f32.mrb[0].mxu0
        %v4880 = vadd.f32 %v4561, %v4879
        %v4881 = vpop.f32.mrb[0].mxu0
        %v4882 = vpop.f32.mrb[0].mxu0
        %v4883 = vadd.f32 %v4561, %v4882
        %v4884 = vpop.f32.mrb[0].mxu0
        %4885 = vmatprep.mubr.bf16.mxu0 %v4515
        %4886 = vmatmul.mubr.bf16.gmra.mrb[0].mxu0 %v4371
        %v4887 = vpop.f32.mrb[0].mxu0
        %v4888 = vadd.f32 %v4561, %v4887
        %v4889 = vpop.f32.mrb[0].mxu0
        %v4890 = vpop.f32.mrb[0].mxu0
        %v4891 = vadd.f32 %v4561, %v4890
        %v4892 = vpop.f32.mrb[0].mxu0
        %4893 = vmatprep.mubr.bf16.mxu0 %v4518
        %4894 = vmatmul.mubr.bf16.gmra.mrb[0].mxu0 %v4374
        %v4895 = vpop.f32.mrb[0].mxu0
        %v4896 = vadd.f32 %v4561, %v4895
        %v4897 = vpop.f32.mrb[0].mxu0
        %v4898 = vpop.f32.mrb[0].mxu0
        %v4899 = vadd.f32 %v4561, %v4898
        %v4900 = vpop.f32.mrb[0].mxu0
        %4901 = vdwg.mxu0
        %4902 = vmatprep.subr.bf16.mxu0 0
        %4903 = vmatpush1.bf16.msra.mxu0 %v4651
        %4904 = vmatprep.subr.bf16.mxu0 0
        %4905 = vmatpush1.bf16.msra.mxu0 %v4652
        %4906 = vmatprep.subr.bf16.mxu0 0
        %4907 = vmatpush1.bf16.msra.mxu0 0
        %4908 = vmatprep.subr.bf16.mxu0 0
        %4909 = vmatpush1.bf16.msra.mxu0 0
        %4910 = vmatprep.subr.bf16.mxu0 0
        %4911 = vmatpush1.bf16.msra.mxu0 0
        %4912 = vmatprep.subr.bf16.mxu0 0
        %4913 = vmatpush1.bf16.msra.mxu0 0
        %4914 = vmatprep.subr.bf16.mxu0 0
        %4915 = vmatpush1.bf16.msra.mxu0 0
        %4916 = vmatprep.subr.bf16.mxu0 0
        %4917 = vmatpush1.bf16.msra.mxu0 0
        %4918 = vmatprep.subr.bf16.mxu0 0
        %4919 = vmatpush1.bf16.msra.mxu0 0
        %4920 = vmatprep.subr.bf16.mxu0 0
        %4921 = vmatpush1.bf16.msra.mxu0 0
        %4922 = vmatprep.subr.bf16.mxu0 0
        %4923 = vmatpush1.bf16.msra.mxu0 0
        %4924 = vmatprep.subr.bf16.mxu0 0
        %4925 = vmatpush1.bf16.msra.mxu0 0
        %4926 = vmatprep.subr.bf16.mxu0 0
        %4927 = vmatpush1.bf16.msra.mxu0 0
        %4928 = vmatprep.subr.bf16.mxu0 0
        %4929 = vmatpush1.bf16.msra.mxu0 0
        %4930 = vmatprep.subr.bf16.mxu0 0
        %4931 = vmatpush1.bf16.msra.mxu0 0
        %4932 = vmatprep.subr.bf16.mxu0 0
        %4933 = vmatpush1.bf16.msra.mxu0 0
        %4934 = vmatprep.mubr.bf16.mxu0 0
        %4935 = vmatmul.mubr.bf16.gmra.mrb[0].mxu0 %v4672
        %v4936 = vpop.f32.mrb[0].mxu0
        %v4937 = vadd.f32 %v4760, %v4936
        %v4938 = vpop.f32.mrb[0].mxu0
        %v4939 = vpop.f32.mrb[0].mxu0
        %v4940 = vadd.f32 %v4763, %v4939
        %v4941 = vpop.f32.mrb[0].mxu0
        %4942 = vmatprep.mubr.bf16.mxu0 0
        %4943 = vmatmul.mubr.bf16.gmra.mrb[0].mxu0 %v4675
        %v4944 = vpop.f32.mrb[0].mxu0
        %v4945 = vadd.f32 %v4768, %v4944
        %v4946 = vpop.f32.mrb[0].mxu0
        %v4947 = vpop.f32.mrb[0].mxu0
        %v4948 = vadd.f32 %v4771, %v4947
        %v4949 = vpop.f32.mrb[0].mxu0
        %4950 = vmatprep.mubr.bf16.mxu0 0
        %4951 = vmatmul.mubr.bf16.gmra.mrb[0].mxu0 %v4678
        %v4952 = vpop.f32.mrb[0].mxu0
        %v4953 = vadd.f32 %v4776, %v4952
        %v4954 = vpop.f32.mrb[0].mxu0
        %v4955 = vpop.f32.mrb[0].mxu0
        %v4956 = vadd.f32 %v4779, %v4955
        %v4957 = vpop.f32.mrb[0].mxu0
        %4958 = vmatprep.mubr.bf16.mxu0 0
        %4959 = vmatmul.mubr.bf16.gmra.mrb[0].mxu0 %v4681
        %v4960 = vpop.f32.mrb[0].mxu0
        %v4961 = vadd.f32 %v4784, %v4960
        %v4962 = vpop.f32.mrb[0].mxu0
        %v4963 = vpop.f32.mrb[0].mxu0
        %v4964 = vadd.f32 %v4787, %v4963
        %v4965 = vpop.f32.mrb[0].mxu0
        %4966 = vmatprep.mubr.bf16.mxu0 0
        %4967 = vmatmul.mubr.bf16.gmra.mrb[0].mxu0 %v4684
        %v4968 = vpop.f32.mrb[0].mxu0
        %v4969 = vadd.f32 %v4792, %v4968
        %v4970 = vpop.f32.mrb[0].mxu0
        %v4971 = vpop.f32.mrb[0].mxu0
        %v4972 = vadd.f32 %v4795, %v4971
        %v4973 = vpop.f32.mrb[0].mxu0
        %4974 = vmatprep.mubr.bf16.mxu0 0
        %4975 = vmatmul.mubr.bf16.gmra.mrb[0].mxu0 %v4687
        %v4976 = vpop.f32.mrb[0].mxu0
        %v4977 = vadd.f32 %v4800, %v4976
        %v4978 = vpop.f32.mrb[0].mxu0
        %v4979 = vpop.f32.mrb[0].mxu0
        %v4980 = vadd.f32 %v4803, %v4979
        %v4981 = vpop.f32.mrb[0].mxu0
        %4982 = vmatprep.mubr.bf16.mxu0 0
        %4983 = vmatmul.mubr.bf16.gmra.mrb[0].mxu0 %v4690
        %v4984 = vpop.f32.mrb[0].mxu0
        %v4985 = vadd.f32 %v4808, %v4984
        %v4986 = vpop.f32.mrb[0].mxu0
        %v4987 = vpop.f32.mrb[0].mxu0
        %v4988 = vadd.f32 %v4811, %v4987
        %v4989 = vpop.f32.mrb[0].mxu0
        %4990 = vmatprep.mubr.bf16.mxu0 0
        %4991 = vmatmul.mubr.bf16.gmra.mrb[0].mxu0 %v4693
        %v4992 = vpop.f32.mrb[0].mxu0
        %v4993 = vadd.f32 %v4816, %v4992
        %v4994 = vpop.f32.mrb[0].mxu0
        %v4995 = vpop.f32.mrb[0].mxu0
        %v4996 = vadd.f32 %v4819, %v4995
        %v4997 = vpop.f32.mrb[0].mxu0
        %4998 = vmatprep.mubr.bf16.mxu0 0
        %4999 = vmatmul.mubr.bf16.gmra.mrb[0].mxu0 %v4696
        %v5000 = vpop.f32.mrb[0].mxu0
        %v5001 = vadd.f32 %v4824, %v5000
        %v5002 = vpop.f32.mrb[0].mxu0
        %v5003 = vpop.f32.mrb[0].mxu0
        %v5004 = vadd.f32 %v4827, %v5003
        %v5005 = vpop.f32.mrb[0].mxu0
        %5006 = vmatprep.mubr.bf16.mxu0 0
        %5007 = vmatmul.mubr.bf16.gmra.mrb[0].mxu0 %v4699
        %v5008 = vpop.f32.mrb[0].mxu0
        %v5009 = vadd.f32 %v4832, %v5008
        %v5010 = vpop.f32.mrb[0].mxu0
        %v5011 = vpop.f32.mrb[0].mxu0
        %v5012 = vadd.f32 %v4835, %v5011
        %v5013 = vpop.f32.mrb[0].mxu0
        %5014 = vmatprep.mubr.bf16.mxu0 0
        %5015 = vmatmul.mubr.bf16.gmra.mrb[0].mxu0 %v4702
        %v5016 = vpop.f32.mrb[0].mxu0
        %v5017 = vadd.f32 %v4840, %v5016
        %v5018 = vpop.f32.mrb[0].mxu0
        %v5019 = vpop.f32.mrb[0].mxu0
        %v5020 = vadd.f32 %v4843, %v5019
        %v5021 = vpop.f32.mrb[0].mxu0
        %5022 = vmatprep.mubr.bf16.mxu0 0
        %5023 = vmatmul.mubr.bf16.gmra.mrb[0].mxu0 %v4705
        %v5024 = vpop.f32.mrb[0].mxu0
        %v5025 = vadd.f32 %v4848, %v5024
        %v5026 = vpop.f32.mrb[0].mxu0
        %v5027 = vpop.f32.mrb[0].mxu0
        %v5028 = vadd.f32 %v4851, %v5027
        %v5029 = vpop.f32.mrb[0].mxu0
        %5030 = vmatprep.mubr.bf16.mxu0 0
        %5031 = vmatmul.mubr.bf16.gmra.mrb[0].mxu0 %v4708
        %v5032 = vpop.f32.mrb[0].mxu0
        %v5033 = vadd.f32 %v4856, %v5032
        %v5034 = vpop.f32.mrb[0].mxu0
        %v5035 = vpop.f32.mrb[0].mxu0
        %v5036 = vadd.f32 %v4859, %v5035
        %v5037 = vpop.f32.mrb[0].mxu0
        %5038 = vmatprep.mubr.bf16.mxu0 0
        %5039 = vmatmul.mubr.bf16.gmra.mrb[0].mxu0 %v4711
        %v5040 = vpop.f32.mrb[0].mxu0
        %v5041 = vadd.f32 %v4864, %v5040
        %v5042 = vpop.f32.mrb[0].mxu0
        %v5043 = vpop.f32.mrb[0].mxu0
        %v5044 = vadd.f32 %v4867, %v5043
        %v5045 = vpop.f32.mrb[0].mxu0
        %5046 = vmatprep.mubr.bf16.mxu0 0
        %5047 = vmatmul.mubr.bf16.gmra.mrb[0].mxu0 %v4714
        %v5048 = vpop.f32.mrb[0].mxu0
        %v5049 = vadd.f32 %v4872, %v5048
        %v5050 = vpop.f32.mrb[0].mxu0
        %v5051 = vpop.f32.mrb[0].mxu0
        %v5052 = vadd.f32 %v4875, %v5051
        %v5053 = vpop.f32.mrb[0].mxu0
        %5054 = vmatprep.mubr.bf16.mxu0 0
        %5055 = vmatmul.mubr.bf16.gmra.mrb[0].mxu0 %v4717
        %v5056 = vpop.f32.mrb[0].mxu0
        %v5057 = vadd.f32 %v4880, %v5056
        %v5058 = vpop.f32.mrb[0].mxu0
        %v5059 = vpop.f32.mrb[0].mxu0
        %v5060 = vadd.f32 %v4883, %v5059
        %v5061 = vpop.f32.mrb[0].mxu0
        %5062 = vmatprep.mubr.bf16.mxu0 0
        %5063 = vmatmul.mubr.bf16.gmra.mrb[0].mxu0 %v4720
        %v5064 = vpop.f32.mrb[0].mxu0
        %v5065 = vadd.f32 %v4888, %v5064
        %v5066 = vpop.f32.mrb[0].mxu0
        %v5067 = vpop.f32.mrb[0].mxu0
        %v5068 = vadd.f32 %v4891, %v5067
        %v5069 = vpop.f32.mrb[0].mxu0
        %5070 = vmatprep.mubr.bf16.mxu0 0
        %5071 = vmatmul.mubr.bf16.gmra.mrb[0].mxu0 %v4723
        %v5072 = vpop.f32.mrb[0].mxu0
        %v5073 = vadd.f32 %v4896, %v5072
        %v5074 = vpop.f32.mrb[0].mxu0
        %v5075 = vpop.f32.mrb[0].mxu0
        %v5076 = vadd.f32 %v4899, %v5075
        %v5077 = vpop.f32.mrb[0].mxu0
        %5078 = vdwg.mxu0
        %v5079 = vld [vmem:[%s303 + $0x13] sm:$0xff]
        %v5080 = vld [vmem:[%s303 + $0x1b] sm:$0xff]
        %v5081 = vld [vmem:[%s303 + $0x23] sm:$0xff]
        %v5082 = vld [vmem:[%s303 + $0x2b] sm:$0xff]
        %v5083 = vld [vmem:[%s303 + $0x33] sm:$0xff]
        %v5084 = vld [vmem:[%s303 + $0x3b] sm:$0xff]
        %v5085 = vld [vmem:[%s303 + $0x43] sm:$0xff]
        %v5086 = vld [vmem:[%s303 + $0x4b] sm:$0xff]
        %v5087 = vld [vmem:[%s303 + $0x53] sm:$0xff]
        %v5088 = vld [vmem:[%s303 + $0x5b] sm:$0xff]
        %v5089 = vld [vmem:[%s303 + $0x63] sm:$0xff]
        %v5090 = vld [vmem:[%s303 + $0x6b] sm:$0xff]
        %v5091 = vld [vmem:[%s303 + $0x73] sm:$0xff]
        %v5092 = vld [vmem:[%s303 + $0x7b] sm:$0xff]
        %v5093 = vld [vmem:[%s303 + $0x83] sm:$0xff]
        %v5094 = vld [vmem:[%s303 + $0x8b] sm:$0xff]
        %v5095 = vld [vmem:[%s303 + $0x93] sm:$0xff]
        %v5096 = vld [vmem:[%s303 + $0x9b] sm:$0xff]
        %v5097 = vld [vmem:[%s303 + $0xa3] sm:$0xff]
        %v5098 = vld [vmem:[%s303 + $0xab] sm:$0xff]
        %v5099 = vld [vmem:[%s303 + $0xb3] sm:$0xff]
        %v5100 = vld [vmem:[%s303 + $0xbb] sm:$0xff]
        %v5101 = vld [vmem:[%s303 + $0xc3] sm:$0xff]
        %v5102 = vld [vmem:[%s303 + $0xcb] sm:$0xff]
        %v5103 = vld [vmem:[%s303 + $0xd3] sm:$0xff]
        %v5104 = vld [vmem:[%s303 + $0xdb] sm:$0xff]
        %v5105 = vld [vmem:[%s303 + $0xe3] sm:$0xff]
        %v5106 = vld [vmem:[%s303 + $0xeb] sm:$0xff]
        %v5107 = vld [vmem:[%s303 + $0xf3] sm:$0xff]
        %v5108 = vld [vmem:[%s303 + $0xfb] sm:$0xff]
        %v5109 = vld [vmem:[%s303 + $0x103] sm:$0xff]
        %v5110 = vld [vmem:[%s303 + $0x10b] sm:$0xff]
        %v5111 = vld [vmem:[%s303 + $0x113] sm:$0xff]
        %v5112 = vld [vmem:[%s303 + $0x11b] sm:$0xff]
        %v5113 = vld [vmem:[%s303 + $0x123] sm:$0xff]
        %v5114 = vld [vmem:[%s303 + $0x12b] sm:$0x3f]
        %v5115 = vsub.f32 %v4937, %v5079
        %v5116 = vsub.f32 %v4940, %v5080
        %v5117 = vsub.f32 %v4945, %v5081
        %v5118 = vsub.f32 %v4948, %v5082
        %v5119 = vsub.f32 %v4953, %v5083
        %v5120 = vsub.f32 %v4956, %v5084
        %v5121 = vsub.f32 %v4961, %v5085
        %v5122 = vsub.f32 %v4964, %v5086
        %v5123 = vsub.f32 %v4969, %v5087
        %v5124 = vsub.f32 %v4972, %v5088
        %v5125 = vsub.f32 %v4977, %v5089
        %v5126 = vsub.f32 %v4980, %v5090
        %v5127 = vsub.f32 %v4985, %v5091
        %v5128 = vsub.f32 %v4988, %v5092
        %v5129 = vsub.f32 %v4993, %v5093
        %v5130 = vsub.f32 %v4996, %v5094
        %v5131 = vsub.f32 %v5001, %v5095
        %v5132 = vsub.f32 %v5004, %v5096
        %v5133 = vsub.f32 %v5009, %v5097
        %v5134 = vsub.f32 %v5012, %v5098
        %v5135 = vsub.f32 %v5017, %v5099
        %v5136 = vsub.f32 %v5020, %v5100
        %v5137 = vsub.f32 %v5025, %v5101
        %v5138 = vsub.f32 %v5028, %v5102
        %v5139 = vsub.f32 %v5033, %v5103
        %v5140 = vsub.f32 %v5036, %v5104
        %v5141 = vsub.f32 %v5041, %v5105
        %v5142 = vsub.f32 %v5044, %v5106
        %v5143 = vsub.f32 %v5049, %v5107
        %v5144 = vsub.f32 %v5052, %v5108
        %v5145 = vsub.f32 %v5057, %v5109
        %v5146 = vsub.f32 %v5060, %v5110
        %v5147 = vsub.f32 %v5065, %v5111
        %v5148 = vsub.f32 %v5068, %v5112
        %v5149 = vsub.f32 %v5073, %v5113
        %v5150 = vsub.f32 %v5076, %v5114
        %v5151 = vsel %vm3434, %v5115, 0.0
        %v5152 = vsel %vm3435, %v5116, 0.0
        %v5153 = vsel %vm3436, %v5117, 0.0
        %v5154 = vsel %vm3437, %v5118, 0.0
        %v5155 = vsel %vm3438, %v5119, 0.0
        %v5156 = vsel %vm3439, %v5120, 0.0
        %v5157 = vsel %vm3440, %v5121, 0.0
        %v5158 = vsel %vm3441, %v5122, 0.0
        %v5159 = vsel %vm3442, %v5123, 0.0
        %v5160 = vsel %vm3443, %v5124, 0.0
        %v5161 = vsel %vm3444, %v5125, 0.0
        %v5162 = vsel %vm3445, %v5126, 0.0
        %v5163 = vsel %vm3446, %v5127, 0.0
        %v5164 = vsel %vm3447, %v5128, 0.0
        %v5165 = vsel %vm3448, %v5129, 0.0
        %v5166 = vsel %vm3449, %v5130, 0.0
        %v5167 = vsel %vm3450, %v5131, 0.0
        %v5168 = vsel %vm3451, %v5132, 0.0
        %v5169 = vsel %vm3452, %v5133, 0.0
        %v5170 = vsel %vm3453, %v5134, 0.0
        %v5171 = vsel %vm3454, %v5135, 0.0
        %v5172 = vsel %vm3455, %v5136, 0.0
        %v5173 = vsel %vm3456, %v5137, 0.0
        %v5174 = vsel %vm3457, %v5138, 0.0
        %v5175 = vsel %vm3458, %v5139, 0.0
        %v5176 = vsel %vm3459, %v5140, 0.0
        %v5177 = vsel %vm3460, %v5141, 0.0
        %v5178 = vsel %vm3461, %v5142, 0.0
        %v5179 = vsel %vm3462, %v5143, 0.0
        %v5180 = vsel %vm3463, %v5144, 0.0
        %v5181 = vsel %vm3464, %v5145, 0.0
        %v5182 = vsel %vm3465, %v5146, 0.0
        %v5183 = vsel %vm3466, %v5147, 0.0
        %v5184 = vsel %vm3467, %v5148, 0.0
        %v5185 = vsel %vm3468, %v5149, 0.0
        %v5186 = vsel %vm3469, %v5150, 0.0
        %v5187 = vmul.f32 %v5151, %v5151
        %v5188 = vmul.f32 %v5152, %v5152
        %v5189 = vmul.f32 %v5153, %v5153
        %v5190 = vmul.f32 %v5154, %v5154
        %v5191 = vmul.f32 %v5155, %v5155
        %v5192 = vmul.f32 %v5156, %v5156
        %v5193 = vmul.f32 %v5157, %v5157
        %v5194 = vmul.f32 %v5158, %v5158
        %v5195 = vmul.f32 %v5159, %v5159
        %v5196 = vmul.f32 %v5160, %v5160
        %v5197 = vmul.f32 %v5161, %v5161
        %v5198 = vmul.f32 %v5162, %v5162
        %v5199 = vmul.f32 %v5163, %v5163
        %v5200 = vmul.f32 %v5164, %v5164
        %v5201 = vmul.f32 %v5165, %v5165
        %v5202 = vmul.f32 %v5166, %v5166
        %v5203 = vmul.f32 %v5167, %v5167
        %v5204 = vmul.f32 %v5168, %v5168
        %v5205 = vmul.f32 %v5169, %v5169
        %v5206 = vmul.f32 %v5170, %v5170
        %v5207 = vmul.f32 %v5171, %v5171
        %v5208 = vmul.f32 %v5172, %v5172
        %v5209 = vmul.f32 %v5173, %v5173
        %v5210 = vmul.f32 %v5174, %v5174
        %v5211 = vmul.f32 %v5175, %v5175
        %v5212 = vmul.f32 %v5176, %v5176
        %v5213 = vmul.f32 %v5177, %v5177
        %v5214 = vmul.f32 %v5178, %v5178
        %v5215 = vmul.f32 %v5179, %v5179
        %v5216 = vmul.f32 %v5180, %v5180
        %v5217 = vmul.f32 %v5181, %v5181
        %v5218 = vmul.f32 %v5182, %v5182
        %v5219 = vmul.f32 %v5183, %v5183
        %v5220 = vmul.f32 %v5184, %v5184
        %v5221 = vmul.f32 %v5185, %v5185
        %v5222 = vmul.f32 %v5186, %v5186
        %v5223 = vsel %vm525, %v5187, 0.0
        %v5224 = vsel %vm525, %v5188, 0.0
        %v5225 = vadd.f32 %v5223, %v5224
        %v5226 = vsel %vm525, %v5189, 0.0
        %v5227 = vadd.f32 %v5225, %v5226
        %v5228 = vsel %vm525, %v5190, 0.0
        %v5229 = vadd.f32 %v5227, %v5228
        %v5230 = vsel %vm525, %v5191, 0.0
        %v5231 = vadd.f32 %v5229, %v5230
        %v5232 = vsel %vm525, %v5192, 0.0
        %v5233 = vadd.f32 %v5231, %v5232
        %v5234 = vsel %vm525, %v5193, 0.0
        %v5235 = vadd.f32 %v5233, %v5234
        %v5236 = vsel %vm525, %v5194, 0.0
        %v5237 = vadd.f32 %v5235, %v5236
        %v5238 = vsel %vm525, %v5195, 0.0
        %v5239 = vadd.f32 %v5237, %v5238
        %v5240 = vsel %vm525, %v5196, 0.0
        %v5241 = vadd.f32 %v5239, %v5240
        %v5242 = vsel %vm525, %v5197, 0.0
        %v5243 = vadd.f32 %v5241, %v5242
        %v5244 = vsel %vm525, %v5198, 0.0
        %v5245 = vadd.f32 %v5243, %v5244
        %v5246 = vsel %vm525, %v5199, 0.0
        %v5247 = vadd.f32 %v5245, %v5246
        %v5248 = vsel %vm525, %v5200, 0.0
        %v5249 = vadd.f32 %v5247, %v5248
        %v5250 = vsel %vm525, %v5201, 0.0
        %v5251 = vadd.f32 %v5249, %v5250
        %v5252 = vsel %vm525, %v5202, 0.0
        %v5253 = vadd.f32 %v5251, %v5252
        %v5254 = vsel %vm525, %v5203, 0.0
        %v5255 = vadd.f32 %v5253, %v5254
        %v5256 = vsel %vm525, %v5204, 0.0
        %v5257 = vadd.f32 %v5255, %v5256
        %v5258 = vsel %vm525, %v5205, 0.0
        %v5259 = vadd.f32 %v5257, %v5258
        %v5260 = vsel %vm525, %v5206, 0.0
        %v5261 = vadd.f32 %v5259, %v5260
        %v5262 = vsel %vm525, %v5207, 0.0
        %v5263 = vadd.f32 %v5261, %v5262
        %v5264 = vsel %vm525, %v5208, 0.0
        %v5265 = vadd.f32 %v5263, %v5264
        %v5266 = vsel %vm525, %v5209, 0.0
        %v5267 = vadd.f32 %v5265, %v5266
        %v5268 = vsel %vm525, %v5210, 0.0
        %v5269 = vadd.f32 %v5267, %v5268
        %v5270 = vsel %vm525, %v5211, 0.0
        %v5271 = vadd.f32 %v5269, %v5270
        %v5272 = vsel %vm525, %v5212, 0.0
        %v5273 = vadd.f32 %v5271, %v5272
        %v5274 = vsel %vm525, %v5213, 0.0
        %v5275 = vadd.f32 %v5273, %v5274
        %v5276 = vsel %vm525, %v5214, 0.0
        %v5277 = vadd.f32 %v5275, %v5276
        %v5278 = vsel %vm525, %v5215, 0.0
        %v5279 = vadd.f32 %v5277, %v5278
        %v5280 = vsel %vm525, %v5216, 0.0
        %v5281 = vadd.f32 %v5279, %v5280
        %v5282 = vsel %vm525, %v5217, 0.0
        %v5283 = vadd.f32 %v5281, %v5282
        %v5284 = vsel %vm525, %v5218, 0.0
        %v5285 = vadd.f32 %v5283, %v5284
        %v5286 = vsel %vm525, %v5219, 0.0
        %v5287 = vadd.f32 %v5285, %v5286
        %v5288 = vsel %vm525, %v5220, 0.0
        %v5289 = vadd.f32 %v5287, %v5288
        %v5290 = vsel %vm525, %v5221, 0.0
        %v5291 = vadd.f32 %v5289, %v5290
        %vm5292 = vcmask 29696
        %v5293 = vsel %vm5292, %v5222, 0.0
        %v5294 = vadd.f32 %v5291, %v5293
        %5295 = vadd.xlane.f32.xlu0 %v5294
        %v5296 = vpop.xlane.xlu0 %5295
        %v5297 = vrot.slane %v5296, 4
        %v5298 = vadd.f32 %v5296, %v5297
        %v5299 = vrot.slane %v5298, 2
        %v5300 = vadd.f32 %v5298, %v5299
        %v5301 = vrot.slane %v5300, 1
        %v5302 = vadd.f32 %v5300, %v5301
        %s5303 = vtos %v5302
        %v5304 = vstv %s5303
        %5305 = vst [vmem:[%s293] sm:$0xff] %v5304
        %s5306 = sand.u32 %s193, 1
        %s5307 = scalar_lea.sflag [#allocation7], %s5306
        %s5308 = sand.u32 %s193, 1
        %s5309 = smul.addr %s5308, 8
        %s5310 = scalar_lea.vmem [#allocation6], %s5309
        // Predicated region
        $region49: #{tpu_custom_call.1} parent=47 // pred_check
          %p5311 = pneg %p203
        $region50: #{tpu_custom_call.1} parent=47 // pred_check_branch
          %5313 = sbr.rel (%p5311) target = $region52
        $region51: #{tpu_custom_call.1} parent=47 // pred_region
          %s5315 = ssub.s32 128, 128
          %5316 = vsyncadd %s5307, %s5315
          %s5317 = smul.addr %s28, 128
          %s5318 = scalar_lea.hbm %s8, %s5317
          %s5320 = sshll.u32 %s5310, 4
          %s5321 = int_to_ptr.vmem [resolvable:$true] %s5320
          %5323 = dma.vmem_to_hbm [thread:$0]  %s5321, 128, %s5318, %s5307
        $region52: #{tpu_custom_call.1} parent=47 // pred_fallthru
          _
      $region48: #{tpu_custom_call.1} parent=5 // pred_fallthru
        _
      %p5324 = scmp.le.s32.totalorder 2, %s23
      // Predicated region
      $region53: #{tpu_custom_call.1} parent=5 // pred_check
        %p5325 = pneg %p5324
      $region54: #{tpu_custom_call.1} parent=5 // pred_check_branch
        %5327 = sbr.rel (%p5325) target = $region56
      $region55: #{tpu_custom_call.1} parent=5 // pred_region
        %s5328 = ssub.s32 %s23, 2
        // Predicated region
        $region57: #{tpu_custom_call.1} parent=55 // pred_check
          %p5329 = pneg %p209
        $region58: #{tpu_custom_call.1} parent=55 // pred_check_branch
          %5331 = sbr.rel (%p5329) target = $region60
        $region59: #{tpu_custom_call.1} parent=55 // pred_region
          %s5332 = sand.u32 %s194, 1
          %s5333 = scalar_lea.sflag [#allocation7], %s5332
          %s5334 = sand.u32 %s194, 1
          %s5335 = smul.addr %s5334, 8
          %s5336 = scalar_lea.vmem [#allocation6], %s5335
          %5337 = dma.done %s5333, 128
        $region60: #{tpu_custom_call.1} parent=55 // pred_fallthru
          _
      $region56: #{tpu_custom_call.1} parent=5 // pred_fallthru
        _
    $region6: #{tpu_custom_call.1} parent=1 // loop_footer
      %s27 = sadd.s32 1, %s23
    $region7: #{tpu_custom_call.1} parent=1 // loop_footer_branch
      %22 = sbr.rel target = $region3
    $region8: #{tpu_custom_call.1} parent=1 // loop_exit
      _
    %5338 = vsyncpa [#allocation7], 1
    %s5339 = scalar_lea.sflag [#allocation7], 1
    %5340 = vsyncpa %s5339, 1

</llo_original>
